<compile_context>
chip_gen: v7x
topology: tpu7x:2x2x1
jax: 0.10.0
libtpu: 0.0.40
codegen_flags: <defaults>
</compile_context>

<pallas_src>
import jax
import jax.numpy as jnp
from jax.experimental import pallas as pl
from jax.experimental.pallas import tpu as pltpu

_EPS = 1e-5  # eps of InstanceNorm1d / LayerNorm defaults


# ----------------------------------------------------------------------------
# In-kernel helpers (all traced inside the fused kernel).
# ----------------------------------------------------------------------------
def _instnorm_relu(y):
    """InstanceNorm1d (affine=False, biased var) over axis 0 (L), then ReLU."""
    m = jnp.mean(y, axis=0, keepdims=True)
    v = jnp.mean(jnp.square(y - m), axis=0, keepdims=True)
    return jnp.maximum((y - m) * jax.lax.rsqrt(v + _EPS), 0.0)


def _layernorm_relu(z, g, be):
    """LayerNorm (biased var) over the lane axis + affine, then ReLU."""
    m = jnp.mean(z, axis=-1, keepdims=True)
    v = jnp.mean(jnp.square(z - m), axis=-1, keepdims=True)
    return jnp.maximum((z - m) * jax.lax.rsqrt(v + _EPS) * g + be, 0.0)


def _shifted(h):
    """Return (h[l-1], h[l+1]) with zero boundary rows (Conv1d pad=1 halo)."""
    c = h.shape[1]
    zero = jnp.zeros((1, c), h.dtype)
    prev = jnp.concatenate([zero, h[:-1, :]], axis=0)   # row l holds h[l-1]
    nxt = jnp.concatenate([h[1:, :], zero], axis=0)     # row l holds h[l+1]
    return prev, nxt


def _maxpool2(y, scr):
    """MaxPool1d(kernel=2) along axis 0 via strided sublane reads of a scratch."""
    half = y.shape[0] // 2
    scr[...] = y
    return jnp.maximum(scr[pl.ds(0, half, 2), :], scr[pl.ds(1, half, 2), :])


# ----------------------------------------------------------------------------
# Fully fused forward kernel: one grid step == one batch sample.
# ----------------------------------------------------------------------------
def _fused_forward_kernel(
        x_ref,
        c1w0, c1w1, c1w2, c1b,
        c2w0, c2w1, c2w2, c2b,
        c3w0, c3w1, c3w2, c3b,
        c4w0, c4w1, c4w2, c4b,
        f1w, f1b, f1g, f1be,
        f2w, f2b, f2g, f2be,
        f3w, f3b, f3g, f3be,
        f4w, f4b, f4g, f4be,
        f5w, f5b,
        o_ref,
        p1s, p2s, p3s, p4s, row_s):
    # ---- conv1 (Cin=1): rank-1 taps -> VPU broadcast MACs, all f32 ----------
    x = x_ref[...]                                            # (L, 1) f32
    xp, xn = _shifted(x)
    y = xp * c1w0[...] + x * c1w1[...] + xn * c1w2[...] + c1b[...]   # (L, 16)
    h = _maxpool2(_instnorm_relu(y), p1s)

    # ---- conv2..conv4: shifted bf16 matmuls on the MXU, f32 accumulation ----
    def conv_mxu(h, w0, w1, w2, b, scr):
        hp, hn = _shifted(h)
        y = (jnp.dot(hp.astype(jnp.bfloat16), w0[...],
                     preferred_element_type=jnp.float32)
             + jnp.dot(h.astype(jnp.bfloat16), w1[...],
                       preferred_element_type=jnp.float32)
             + jnp.dot(hn.astype(jnp.bfloat16), w2[...],
                       preferred_element_type=jnp.float32)
             + b[...])
        return _maxpool2(_instnorm_relu(y), scr)

    h = conv_mxu(h, c2w0, c2w1, c2w2, c2b, p2s)
    h = conv_mxu(h, c3w0, c3w1, c3w2, c3b, p3s)
    h = conv_mxu(h, c4w0, c4w1, c4w2, c4b, p4s)               # (L/16, 128)

    # ---- flatten: assemble a lane-major (1, L/16 * 128) row.  fc1's weight
    #      columns were permuted on the host to match, so no transpose here. --
    n_rows, n_ch = h.shape
    for l in range(n_rows):                                   # static unroll
        row_s[0:1, l * n_ch:(l + 1) * n_ch] = h[l:l + 1, :]
    h = row_s[...]                                            # (1, flatten) f32

    # ---- MLP head (fc + LayerNorm + ReLU x4, then fc5). ----------------------
    # TODO(synk): Dropout(0.5) layers are identity here (inference semantics).
    def fc(h, w_ref, b_ref):
        return (jnp.dot(h.astype(jnp.bfloat16), w_ref[...],
                        preferred_element_type=jnp.float32) + b_ref[...])

    h = _layernorm_relu(fc(h, f1w, f1b), f1g[...], f1be[...])
    h = _layernorm_relu(fc(h, f2w, f2b), f2g[...], f2be[...])
    h = _layernorm_relu(fc(h, f3w, f3b), f3g[...], f3be[...])
    h = _layernorm_relu(fc(h, f4w, f4b), f4g[...], f4be[...])
    o_ref[...] = fc(h, f5w, f5b).astype(o_ref.dtype)


# ----------------------------------------------------------------------------
# One-time host-side weight preparation (hoisted out of the hot path).
# ----------------------------------------------------------------------------
def prepare_params(conv_params, hidden_params, out_params):
    """Returns the flat tuple of 2-D arrays the fused kernel expects:
       conv taps as (Cin, Cout) per tap (bf16 for MXU layers), fc weights as
       (in, out) bf16 (fc1 column-permuted for the lane-major flatten), all
       biases / LayerNorm params as f32 (1, d) rows."""
    args = []

    # conv1 (Cin == 1): f32 tap rows for the VPU path.
    w, b = conv_params[0]
    c_out = w.shape[0]
    for k in range(3):
        args.append(w[:, 0, k].reshape(1, c_out).astype(jnp.float32))
    args.append(b.reshape(1, c_out).astype(jnp.float32))

    # conv2..conv4: bf16 taps (Cin, Cout) for the MXU path.
    for w, b in conv_params[1:]:
        for k in range(3):
            args.append(w[:, :, k].T.astype(jnp.bfloat16))
        args.append(b.reshape(1, -1).astype(jnp.float32))

    # fc1: permute columns from torch's channel-major flatten (j = c*Lf + l) to
    # the kernel's lane-major flatten (j' = l*C4 + c), then store as (in, out).
    w1, b1, g1, be1 = hidden_params[0]
    d_out, flat = w1.shape
    c4 = conv_params[-1][0].shape[0]                 # 128
    lf = flat // c4                                  # input_dim // 16
    w1p = w1.reshape(d_out, c4, lf).transpose(0, 2, 1).reshape(d_out, flat)
    args += [w1p.T.astype(jnp.bfloat16),
             b1.reshape(1, -1).astype(jnp.float32),
             g1.reshape(1, -1).astype(jnp.float32),
             be1.reshape(1, -1).astype(jnp.float32)]

    # fc2..fc4 (+LayerNorm params) and fc5.
    for w, b, g, be in hidden_params[1:]:
        args += [w.T.astype(jnp.bfloat16),
                 b.reshape(1, -1).astype(jnp.float32),
                 g.reshape(1, -1).astype(jnp.float32),
                 be.reshape(1, -1).astype(jnp.float32)]
    w5, b5 = out_params
    args += [w5.T.astype(jnp.bfloat16),
             b5.reshape(1, 1).astype(jnp.float32)]
    return tuple(args)


# ----------------------------------------------------------------------------
# Fused forward pass: a single pallas_call for the whole network.
# ----------------------------------------------------------------------------
def paper_scoring_cnn_forward(x, prepared):
    B, L = x.shape
    if L % 16 != 0:
        raise ValueError("input_dim must be divisible by 16 (four MaxPool1d(2) stages)")

    c1 = prepared[0].shape[1]       # 16
    c2 = prepared[4].shape[1]       # 32
    c3 = prepared[8].shape[1]       # 64
    c4 = prepared[12].shape[1]      # 128
    flat = (L // 16) * c4           # torch flatten_dim

    x3 = x.astype(jnp.float32)[:, :, None]            # (B, L, 1): L on sublanes

    in_specs = [pl.BlockSpec((None, L, 1), lambda b: (b, 0, 0))]
    in_specs += [pl.BlockSpec(a.shape, lambda b: (0, 0)) for a in prepared]

    out = pl.pallas_call(
        _fused_forward_kernel,
        out_shape=jax.ShapeDtypeStruct((B, 1, 1), jnp.float32),
        grid=(B,),
        in_specs=in_specs,
        out_specs=pl.BlockSpec((None, 1, 1), lambda b: (b, 0, 0)),
        scratch_shapes=[
            pltpu.VMEM((L, c1), jnp.float32),          # conv1 pre-pool
            pltpu.VMEM((L // 2, c2), jnp.float32),     # conv2 pre-pool
            pltpu.VMEM((L // 4, c3), jnp.float32),     # conv3 pre-pool
            pltpu.VMEM((L // 8, c4), jnp.float32),     # conv4 pre-pool
            pltpu.VMEM((1, flat), jnp.float32),        # lane-major flatten row
        ],
        compiler_params=pltpu.CompilerParams(
            dimension_semantics=("parallel",)),
    )(x3, *prepared)
    return out.reshape(B, 1)


# ----------------------------------------------------------------------------
# Pure-JAX reference (independent path: lax.conv + torch-order flatten with the
# ORIGINAL fc1 weight — this independently validates the kernel's permutation).
# Mirrors the kernel's bf16 operand rounding with f32 accumulation so the two
# paths agree tightly.
# ----------------------------------------------------------------------------
def reference_forward(x, conv_params, hidden_params, out_params):
    h = x[:, None, :].astype(jnp.float32)              # (B, 1, L)  NCL
    for idx, (w, b) in enumerate(conv_params):
        if idx == 0:
            lhs, rhs = h, w.astype(jnp.float32)
            prec = jax.lax.Precision.HIGHEST            # f32 path (kernel uses VPU f32)
        else:
            lhs, rhs = h.astype(jnp.bfloat16), w.astype(jnp.bfloat16)
            prec = None
        h = jax.lax.conv_general_dilated(
            lhs, rhs, window_strides=(1,), padding=[(1, 1)],
            dimension_numbers=("NCH", "OIH", "NCH"),
            preferred_element_type=jnp.float32, precision=prec)
        h = h + b[None, :, None]
        m = jnp.mean(h, axis=2, keepdims=True)
        v = jnp.mean(jnp.square(h - m), axis=2, keepdims=True)
        h = jnp.maximum((h - m) * jax.lax.rsqrt(v + _EPS), 0.0)
        B, C, L = h.shape
        h = jnp.max(h.reshape(B, C, L // 2, 2), axis=3)
    B = h.shape[0]
    h = h.reshape(B, -1)                                # torch channel-major flatten
    for (w, b, g, be) in hidden_params:
        h = jnp.dot(h.astype(jnp.bfloat16), w.T.astype(jnp.bfloat16),
                    preferred_element_type=jnp.float32) + b
        m = jnp.mean(h, axis=-1, keepdims=True)
        v = jnp.mean(jnp.square(h - m), axis=-1, keepdims=True)
        h = jnp.maximum((h - m) * jax.lax.rsqrt(v + _EPS) * g + be, 0.0)
    w5, b5 = out_params
    return jnp.dot(h.astype(jnp.bfloat16), w5.T.astype(jnp.bfloat16),
                   preferred_element_type=jnp.float32) + b5


# ----------------------------------------------------------------------------
# Deterministic parameter init (shapes from the module's __init__).
# ----------------------------------------------------------------------------
def init_params(key, input_dim):
    conv_dims = [(1, 16), (16, 32), (32, 64), (64, 128)]
    conv_params = []
    for c_in, c_out in conv_dims:
        key, kw, kb = jax.random.split(key, 3)
        scale = 1.0 / (c_in * 3) ** 0.5
        w = jax.random.uniform(kw, (c_out, c_in, 3), jnp.float32, -scale, scale)
        b = jax.random.uniform(kb, (c_out,), jnp.float32, -scale, scale)
        conv_params.append((w, b))

    flatten_dim = 128 * (input_dim // 16)
    fc_dims = [(flatten_dim, 512), (512, 256), (256, 128), (128, 64)]
    hidden_params = []
    for d_in, d_out in fc_dims:
        key, kw, kb = jax.random.split(key, 3)
        scale = 1.0 / d_in ** 0.5
        w = jax.random.uniform(kw, (d_out, d_in), jnp.float32, -scale, scale)
        b = jax.random.uniform(kb, (d_out,), jnp.float32, -scale, scale)
        g = jnp.ones((d_out,), jnp.float32)    # LayerNorm weight (default init)
        be = jnp.zeros((d_out,), jnp.float32)  # LayerNorm bias (default init)
        hidden_params.append((w, b, g, be))

    key, kw, kb = jax.random.split(key, 3)
    scale = 1.0 / 64 ** 0.5
    w5 = jax.random.uniform(kw, (1, 64), jnp.float32, -scale, scale)
    b5 = jax.random.uniform(kb, (1,), jnp.float32, -scale, scale)
    return conv_params, hidden_params, (w5, b5)


if __name__ == "__main__":
    input_dim = 64   # must be divisible by 16 (four MaxPool1d(2) stages)
    batch = 2

    root = jax.random.PRNGKey(0)
    k_x, k_p = jax.random.split(root)
    x = jax.random.normal(k_x, (batch, input_dim), jnp.float32)
    conv_params, hidden_params, out_params = init_params(k_p, input_dim)

    prepared = prepare_params(conv_params, hidden_params, out_params)   # one-time
    fwd = jax.jit(paper_scoring_cnn_forward)

    out = jax.block_until_ready(fwd(x, prepared))
    assert out.shape == (batch, 1), out.shape
    assert bool(jnp.all(jnp.isfinite(out)))

    ref = jax.block_until_ready(
        reference_forward(x, conv_params, hidden_params, out_params))
    # Both paths round MXU operands to bf16 identically and accumulate in f32, so
    # they should agree to ~1e-5; 1e-3 leaves margin only for summation-order and
    # transcendental-implementation differences (20x tighter than before).
    if not jnp.allclose(out, ref, rtol=1e-3, atol=1e-3):
        raise AssertionError(f"mismatch:\n pallas={out}\n ref={ref}")

    print("KERNEL_OK")
</pallas_src>

<mosaic_0001>
module attributes {stable_mosaic.version = 11 : i64} {
  func.func @_fused_forward_kernel(%arg0: i32, %arg1: memref<1x64x1xf32, #tpu.memory_space<vmem>>, %arg2: memref<1x16xf32, #tpu.memory_space<vmem>>, %arg3: memref<1x16xf32, #tpu.memory_space<vmem>>, %arg4: memref<1x16xf32, #tpu.memory_space<vmem>>, %arg5: memref<1x16xf32, #tpu.memory_space<vmem>>, %arg6: memref<16x32xbf16, #tpu.memory_space<vmem>>, %arg7: memref<16x32xbf16, #tpu.memory_space<vmem>>, %arg8: memref<16x32xbf16, #tpu.memory_space<vmem>>, %arg9: memref<1x32xf32, #tpu.memory_space<vmem>>, %arg10: memref<32x64xbf16, #tpu.memory_space<vmem>>, %arg11: memref<32x64xbf16, #tpu.memory_space<vmem>>, %arg12: memref<32x64xbf16, #tpu.memory_space<vmem>>, %arg13: memref<1x64xf32, #tpu.memory_space<vmem>>, %arg14: memref<64x128xbf16, #tpu.memory_space<vmem>>, %arg15: memref<64x128xbf16, #tpu.memory_space<vmem>>, %arg16: memref<64x128xbf16, #tpu.memory_space<vmem>>, %arg17: memref<1x128xf32, #tpu.memory_space<vmem>>, %arg18: memref<512x512xbf16, #tpu.memory_space<vmem>>, %arg19: memref<1x512xf32, #tpu.memory_space<vmem>>, %arg20: memref<1x512xf32, #tpu.memory_space<vmem>>, %arg21: memref<1x512xf32, #tpu.memory_space<vmem>>, %arg22: memref<512x256xbf16, #tpu.memory_space<vmem>>, %arg23: memref<1x256xf32, #tpu.memory_space<vmem>>, %arg24: memref<1x256xf32, #tpu.memory_space<vmem>>, %arg25: memref<1x256xf32, #tpu.memory_space<vmem>>, %arg26: memref<256x128xbf16, #tpu.memory_space<vmem>>, %arg27: memref<1x128xf32, #tpu.memory_space<vmem>>, %arg28: memref<1x128xf32, #tpu.memory_space<vmem>>, %arg29: memref<1x128xf32, #tpu.memory_space<vmem>>, %arg30: memref<128x64xbf16, #tpu.memory_space<vmem>>, %arg31: memref<1x64xf32, #tpu.memory_space<vmem>>, %arg32: memref<1x64xf32, #tpu.memory_space<vmem>>, %arg33: memref<1x64xf32, #tpu.memory_space<vmem>>, %arg34: memref<64x1xbf16, #tpu.memory_space<vmem>>, %arg35: memref<1x1xf32, #tpu.memory_space<vmem>>, %arg36: memref<1x1x1xf32, #tpu.memory_space<vmem>>, %arg37: memref<64x16xf32, #tpu.memory_space<vmem>>, %arg38: memref<32x32xf32, #tpu.memory_space<vmem>>, %arg39: memref<16x64xf32, #tpu.memory_space<vmem>>, %arg40: memref<8x128xf32, #tpu.memory_space<vmem>>, %arg41: memref<1x512xf32, #tpu.memory_space<vmem>>) attributes {dimension_semantics = [#tpu.dimension_semantics<parallel>], iteration_bounds = array<i64: 2>, scalar_prefetch = 0 : i64, scratch_operands = 5 : i64, tpu.core_type = #tpu.core_type<tc>, window_params = [{transform_indices = @transform_0, window_bounds = array<i64: 1, 64, 1>}, {pipeline_mode = #tpu.pipeline_mode<synchronous>, transform_indices = @transform_1, window_bounds = array<i64: 1, 16>}, {pipeline_mode = #tpu.pipeline_mode<synchronous>, transform_indices = @transform_2, window_bounds = array<i64: 1, 16>}, {pipeline_mode = #tpu.pipeline_mode<synchronous>, transform_indices = @transform_3, window_bounds = array<i64: 1, 16>}, {pipeline_mode = #tpu.pipeline_mode<synchronous>, transform_indices = @transform_4, window_bounds = array<i64: 1, 16>}, {pipeline_mode = #tpu.pipeline_mode<synchronous>, transform_indices = @transform_5, window_bounds = array<i64: 16, 32>}, {pipeline_mode = #tpu.pipeline_mode<synchronous>, transform_indices = @transform_6, window_bounds = array<i64: 16, 32>}, {pipeline_mode = #tpu.pipeline_mode<synchronous>, transform_indices = @transform_7, window_bounds = array<i64: 16, 32>}, {pipeline_mode = #tpu.pipeline_mode<synchronous>, transform_indices = @transform_8, window_bounds = array<i64: 1, 32>}, {pipeline_mode = #tpu.pipeline_mode<synchronous>, transform_indices = @transform_9, window_bounds = array<i64: 32, 64>}, {pipeline_mode = #tpu.pipeline_mode<synchronous>, transform_indices = @transform_10, window_bounds = array<i64: 32, 64>}, {pipeline_mode = #tpu.pipeline_mode<synchronous>, transform_indices = @transform_11, window_bounds = array<i64: 32, 64>}, {pipeline_mode = #tpu.pipeline_mode<synchronous>, transform_indices = @transform_12, window_bounds = array<i64: 1, 64>}, {pipeline_mode = #tpu.pipeline_mode<synchronous>, transform_indices = @transform_13, window_bounds = array<i64: 64, 128>}, {pipeline_mode = #tpu.pipeline_mode<synchronous>, transform_indices = @transform_14, window_bounds = array<i64: 64, 128>}, {pipeline_mode = #tpu.pipeline_mode<synchronous>, transform_indices = @transform_15, window_bounds = array<i64: 64, 128>}, {pipeline_mode = #tpu.pipeline_mode<synchronous>, transform_indices = @transform_16, window_bounds = array<i64: 1, 128>}, {pipeline_mode = #tpu.pipeline_mode<synchronous>, transform_indices = @transform_17, window_bounds = array<i64: 512, 512>}, {pipeline_mode = #tpu.pipeline_mode<synchronous>, transform_indices = @transform_18, window_bounds = array<i64: 1, 512>}, {pipeline_mode = #tpu.pipeline_mode<synchronous>, transform_indices = @transform_19, window_bounds = array<i64: 1, 512>}, {pipeline_mode = #tpu.pipeline_mode<synchronous>, transform_indices = @transform_20, window_bounds = array<i64: 1, 512>}, {pipeline_mode = #tpu.pipeline_mode<synchronous>, transform_indices = @transform_21, window_bounds = array<i64: 512, 256>}, {pipeline_mode = #tpu.pipeline_mode<synchronous>, transform_indices = @transform_22, window_bounds = array<i64: 1, 256>}, {pipeline_mode = #tpu.pipeline_mode<synchronous>, transform_indices = @transform_23, window_bounds = array<i64: 1, 256>}, {pipeline_mode = #tpu.pipeline_mode<synchronous>, transform_indices = @transform_24, window_bounds = array<i64: 1, 256>}, {pipeline_mode = #tpu.pipeline_mode<synchronous>, transform_indices = @transform_25, window_bounds = array<i64: 256, 128>}, {pipeline_mode = #tpu.pipeline_mode<synchronous>, transform_indices = @transform_26, window_bounds = array<i64: 1, 128>}, {pipeline_mode = #tpu.pipeline_mode<synchronous>, transform_indices = @transform_27, window_bounds = array<i64: 1, 128>}, {pipeline_mode = #tpu.pipeline_mode<synchronous>, transform_indices = @transform_28, window_bounds = array<i64: 1, 128>}, {pipeline_mode = #tpu.pipeline_mode<synchronous>, transform_indices = @transform_29, window_bounds = array<i64: 128, 64>}, {pipeline_mode = #tpu.pipeline_mode<synchronous>, transform_indices = @transform_30, window_bounds = array<i64: 1, 64>}, {pipeline_mode = #tpu.pipeline_mode<synchronous>, transform_indices = @transform_31, window_bounds = array<i64: 1, 64>}, {pipeline_mode = #tpu.pipeline_mode<synchronous>, transform_indices = @transform_32, window_bounds = array<i64: 1, 64>}, {pipeline_mode = #tpu.pipeline_mode<synchronous>, transform_indices = @transform_33, window_bounds = array<i64: 64, 1>}, {pipeline_mode = #tpu.pipeline_mode<synchronous>, transform_indices = @transform_34, window_bounds = array<i64: 1, 1>}, {transform_indices = @transform_35, window_bounds = array<i64: 1, 1, 1>}]} {
    %c0 = arith.constant 0 : index
    %c0_0 = arith.constant 0 : index
    %c0_1 = arith.constant 0 : index
    %0 = vector.load %arg1[%c0, %c0_0, %c0_1] : memref<1x64x1xf32, #tpu.memory_space<vmem>>, vector<1x64x1xf32>
    %1 = vector.shape_cast %0 : vector<1x64x1xf32> to vector<64x1xf32>
    %cst = arith.constant 0.000000e+00 : f32
    %2 = vector.broadcast %cst : f32 to vector<1x1xf32>
    %3 = vector.extract_strided_slice %1 {offsets = [0, 0], sizes = [63, 1], strides = [1, 1]} : vector<64x1xf32> to vector<63x1xf32>
    %4 = tpu.concatenate %2, %3 in 0 : vector<1x1xf32>, vector<63x1xf32> -> vector<64x1xf32>
    %5 = vector.extract_strided_slice %1 {offsets = [1, 0], sizes = [63, 1], strides = [1, 1]} : vector<64x1xf32> to vector<63x1xf32>
    %6 = tpu.concatenate %5, %2 in 0 : vector<63x1xf32>, vector<1x1xf32> -> vector<64x1xf32>
    %c0_2 = arith.constant 0 : index
    %c0_3 = arith.constant 0 : index
    %7 = vector.load %arg2[%c0_2, %c0_3] : memref<1x16xf32, #tpu.memory_space<vmem>>, vector<1x16xf32>
    %8 = vector.broadcast %4 : vector<64x1xf32> to vector<64x16xf32>
    %9 = vector.broadcast %7 : vector<1x16xf32> to vector<64x16xf32>
    %10 = arith.mulf %8, %9 : vector<64x16xf32>
    %c0_4 = arith.constant 0 : index
    %c0_5 = arith.constant 0 : index
    %11 = vector.load %arg3[%c0_4, %c0_5] : memref<1x16xf32, #tpu.memory_space<vmem>>, vector<1x16xf32>
    %12 = vector.broadcast %1 : vector<64x1xf32> to vector<64x16xf32>
    %13 = vector.broadcast %11 : vector<1x16xf32> to vector<64x16xf32>
    %14 = arith.mulf %12, %13 : vector<64x16xf32>
    %15 = arith.addf %10, %14 : vector<64x16xf32>
    %c0_6 = arith.constant 0 : index
    %c0_7 = arith.constant 0 : index
    %16 = vector.load %arg4[%c0_6, %c0_7] : memref<1x16xf32, #tpu.memory_space<vmem>>, vector<1x16xf32>
    %17 = vector.broadcast %6 : vector<64x1xf32> to vector<64x16xf32>
    %18 = vector.broadcast %16 : vector<1x16xf32> to vector<64x16xf32>
    %19 = arith.mulf %17, %18 : vector<64x16xf32>
    %20 = arith.addf %15, %19 : vector<64x16xf32>
    %c0_8 = arith.constant 0 : index
    %c0_9 = arith.constant 0 : index
    %21 = vector.load %arg5[%c0_8, %c0_9] : memref<1x16xf32, #tpu.memory_space<vmem>>, vector<1x16xf32>
    %22 = vector.broadcast %21 : vector<1x16xf32> to vector<64x16xf32>
    %23 = arith.addf %20, %22 : vector<64x16xf32>
    %cst_10 = arith.constant dense<0.000000e+00> : vector<16xf32>
    %24 = vector.multi_reduction <add>, %23, %cst_10 [0] : vector<64x16xf32> to vector<16xf32>
    %25 = vector.shape_cast %24 : vector<16xf32> to vector<1x16xf32>
    %cst_11 = arith.constant 6.400000e+01 : f32
    %26 = vector.broadcast %cst_11 : f32 to vector<1x16xf32>
    %27 = arith.divf %25, %26 : vector<1x16xf32>
    %28 = vector.broadcast %27 : vector<1x16xf32> to vector<64x16xf32>
    %29 = arith.subf %23, %28 : vector<64x16xf32>
    %30 = arith.mulf %29, %29 : vector<64x16xf32>
    %cst_12 = arith.constant dense<0.000000e+00> : vector<16xf32>
    %31 = vector.multi_reduction <add>, %30, %cst_12 [0] : vector<64x16xf32> to vector<16xf32>
    %32 = vector.shape_cast %31 : vector<16xf32> to vector<1x16xf32>
    %cst_13 = arith.constant 6.400000e+01 : f32
    %33 = vector.broadcast %cst_13 : f32 to vector<1x16xf32>
    %34 = arith.divf %32, %33 : vector<1x16xf32>
    %35 = vector.broadcast %27 : vector<1x16xf32> to vector<64x16xf32>
    %36 = arith.subf %23, %35 : vector<64x16xf32>
    %cst_14 = arith.constant 9.99999974E-6 : f32
    %37 = vector.broadcast %cst_14 : f32 to vector<1x16xf32>
    %38 = arith.addf %34, %37 : vector<1x16xf32>
    %39 = math.rsqrt %38 : vector<1x16xf32>
    %40 = vector.broadcast %39 : vector<1x16xf32> to vector<64x16xf32>
    %41 = arith.mulf %36, %40 : vector<64x16xf32>
    %cst_15 = arith.constant 0.000000e+00 : f32
    %42 = vector.broadcast %cst_15 : f32 to vector<64x16xf32>
    %43 = arith.maximumf %41, %42 : vector<64x16xf32>
    %c0_16 = arith.constant 0 : index
    %c0_17 = arith.constant 0 : index
    %44 = vector.load %arg37[%c0_16, %c0_17] : memref<64x16xf32, #tpu.memory_space<vmem>>, vector<64x16xf32>
    tpu.vector_store %arg37[%c0_16, %c0_17], %43 {strides = array<i32>} : memref<64x16xf32, #tpu.memory_space<vmem>>, vector<64x16xf32>,
    %c0_18 = arith.constant 0 : index
    %c0_19 = arith.constant 0 : index
    %45 = tpu.strided_load %arg37[%c0_18, %c0_19] {strides = array<i32: 2, 1>} : memref<64x16xf32, #tpu.memory_space<vmem>>, vector<32x16xf32>
    %c1 = arith.constant 1 : index
    %c0_20 = arith.constant 0 : index
    %46 = tpu.strided_load %arg37[%c1, %c0_20] {strides = array<i32: 2, 1>} : memref<64x16xf32, #tpu.memory_space<vmem>>, vector<32x16xf32>
    %47 = arith.maximumf %45, %46 : vector<32x16xf32>
    %cst_21 = arith.constant 0.000000e+00 : f32
    %48 = vector.broadcast %cst_21 : f32 to vector<1x16xf32>
    %49 = vector.extract_strided_slice %47 {offsets = [0, 0], sizes = [31, 16], strides = [1, 1]} : vector<32x16xf32> to vector<31x16xf32>
    %50 = tpu.concatenate %48, %49 in 0 : vector<1x16xf32>, vector<31x16xf32> -> vector<32x16xf32>
    %51 = vector.extract_strided_slice %47 {offsets = [1, 0], sizes = [31, 16], strides = [1, 1]} : vector<32x16xf32> to vector<31x16xf32>
    %52 = tpu.concatenate %51, %48 in 0 : vector<31x16xf32>, vector<1x16xf32> -> vector<32x16xf32>
    %53 = arith.truncf %50 : vector<32x16xf32> to vector<32x16xbf16>
    %c0_22 = arith.constant 0 : index
    %c0_23 = arith.constant 0 : index
    %54 = vector.load %arg6[%c0_22, %c0_23] : memref<16x32xbf16, #tpu.memory_space<vmem>>, vector<16x32xbf16>
    %cst_24 = arith.constant dense<0.000000e+00> : vector<32x32xf32>
    %55 = tpu.matmul %53, %54, %cst_24 {dimension_numbers = #tpu.dot_dimension_numbers<[1], [0], [0], [1], [0, 0, 1, 1], [], []>} : vector<32x16xbf16>, vector<16x32xbf16>, vector<32x32xf32> -> vector<32x32xf32>
    %56 = arith.truncf %47 : vector<32x16xf32> to vector<32x16xbf16>
    %c0_25 = arith.constant 0 : index
    %c0_26 = arith.constant 0 : index
    %57 = vector.load %arg7[%c0_25, %c0_26] : memref<16x32xbf16, #tpu.memory_space<vmem>>, vector<16x32xbf16>
    %cst_27 = arith.constant dense<0.000000e+00> : vector<32x32xf32>
    %58 = tpu.matmul %56, %57, %cst_27 {dimension_numbers = #tpu.dot_dimension_numbers<[1], [0], [0], [1], [0, 0, 1, 1], [], []>} : vector<32x16xbf16>, vector<16x32xbf16>, vector<32x32xf32> -> vector<32x32xf32>
    %59 = arith.addf %55, %58 : vector<32x32xf32>
    %60 = arith.truncf %52 : vector<32x16xf32> to vector<32x16xbf16>
    %c0_28 = arith.constant 0 : index
    %c0_29 = arith.constant 0 : index
    %61 = vector.load %arg8[%c0_28, %c0_29] : memref<16x32xbf16, #tpu.memory_space<vmem>>, vector<16x32xbf16>
    %cst_30 = arith.constant dense<0.000000e+00> : vector<32x32xf32>
    %62 = tpu.matmul %60, %61, %cst_30 {dimension_numbers = #tpu.dot_dimension_numbers<[1], [0], [0], [1], [0, 0, 1, 1], [], []>} : vector<32x16xbf16>, vector<16x32xbf16>, vector<32x32xf32> -> vector<32x32xf32>
    %63 = arith.addf %59, %62 : vector<32x32xf32>
    %c0_31 = arith.constant 0 : index
    %c0_32 = arith.constant 0 : index
    %64 = vector.load %arg9[%c0_31, %c0_32] : memref<1x32xf32, #tpu.memory_space<vmem>>, vector<1x32xf32>
    %65 = vector.broadcast %64 : vector<1x32xf32> to vector<32x32xf32>
    %66 = arith.addf %63, %65 : vector<32x32xf32>
    %cst_33 = arith.constant dense<0.000000e+00> : vector<32xf32>
    %67 = vector.multi_reduction <add>, %66, %cst_33 [0] : vector<32x32xf32> to vector<32xf32>
    %68 = vector.shape_cast %67 : vector<32xf32> to vector<1x32xf32>
    %cst_34 = arith.constant 3.200000e+01 : f32
    %69 = vector.broadcast %cst_34 : f32 to vector<1x32xf32>
    %70 = arith.divf %68, %69 : vector<1x32xf32>
    %71 = vector.broadcast %70 : vector<1x32xf32> to vector<32x32xf32>
    %72 = arith.subf %66, %71 : vector<32x32xf32>
    %73 = arith.mulf %72, %72 : vector<32x32xf32>
    %cst_35 = arith.constant dense<0.000000e+00> : vector<32xf32>
    %74 = vector.multi_reduction <add>, %73, %cst_35 [0] : vector<32x32xf32> to vector<32xf32>
    %75 = vector.shape_cast %74 : vector<32xf32> to vector<1x32xf32>
    %cst_36 = arith.constant 3.200000e+01 : f32
    %76 = vector.broadcast %cst_36 : f32 to vector<1x32xf32>
    %77 = arith.divf %75, %76 : vector<1x32xf32>
    %78 = vector.broadcast %70 : vector<1x32xf32> to vector<32x32xf32>
    %79 = arith.subf %66, %78 : vector<32x32xf32>
    %cst_37 = arith.constant 9.99999974E-6 : f32
    %80 = vector.broadcast %cst_37 : f32 to vector<1x32xf32>
    %81 = arith.addf %77, %80 : vector<1x32xf32>
    %82 = math.rsqrt %81 : vector<1x32xf32>
    %83 = vector.broadcast %82 : vector<1x32xf32> to vector<32x32xf32>
    %84 = arith.mulf %79, %83 : vector<32x32xf32>
    %cst_38 = arith.constant 0.000000e+00 : f32
    %85 = vector.broadcast %cst_38 : f32 to vector<32x32xf32>
    %86 = arith.maximumf %84, %85 : vector<32x32xf32>
    %c0_39 = arith.constant 0 : index
    %c0_40 = arith.constant 0 : index
    %87 = vector.load %arg38[%c0_39, %c0_40] : memref<32x32xf32, #tpu.memory_space<vmem>>, vector<32x32xf32>
    tpu.vector_store %arg38[%c0_39, %c0_40], %86 {strides = array<i32>} : memref<32x32xf32, #tpu.memory_space<vmem>>, vector<32x32xf32>,
    %c0_41 = arith.constant 0 : index
    %c0_42 = arith.constant 0 : index
    %88 = tpu.strided_load %arg38[%c0_41, %c0_42] {strides = array<i32: 2, 1>} : memref<32x32xf32, #tpu.memory_space<vmem>>, vector<16x32xf32>
    %c1_43 = arith.constant 1 : index
    %c0_44 = arith.constant 0 : index
    %89 = tpu.strided_load %arg38[%c1_43, %c0_44] {strides = array<i32: 2, 1>} : memref<32x32xf32, #tpu.memory_space<vmem>>, vector<16x32xf32>
    %90 = arith.maximumf %88, %89 : vector<16x32xf32>
    %cst_45 = arith.constant 0.000000e+00 : f32
    %91 = vector.broadcast %cst_45 : f32 to vector<1x32xf32>
    %92 = vector.extract_strided_slice %90 {offsets = [0, 0], sizes = [15, 32], strides = [1, 1]} : vector<16x32xf32> to vector<15x32xf32>
    %93 = tpu.concatenate %91, %92 in 0 : vector<1x32xf32>, vector<15x32xf32> -> vector<16x32xf32>
    %94 = vector.extract_strided_slice %90 {offsets = [1, 0], sizes = [15, 32], strides = [1, 1]} : vector<16x32xf32> to vector<15x32xf32>
    %95 = tpu.concatenate %94, %91 in 0 : vector<15x32xf32>, vector<1x32xf32> -> vector<16x32xf32>
    %96 = arith.truncf %93 : vector<16x32xf32> to vector<16x32xbf16>
    %c0_46 = arith.constant 0 : index
    %c0_47 = arith.constant 0 : index
    %97 = vector.load %arg10[%c0_46, %c0_47] : memref<32x64xbf16, #tpu.memory_space<vmem>>, vector<32x64xbf16>
    %cst_48 = arith.constant dense<0.000000e+00> : vector<16x64xf32>
    %98 = tpu.matmul %96, %97, %cst_48 {dimension_numbers = #tpu.dot_dimension_numbers<[1], [0], [0], [1], [0, 0, 1, 1], [], []>} : vector<16x32xbf16>, vector<32x64xbf16>, vector<16x64xf32> -> vector<16x64xf32>
    %99 = arith.truncf %90 : vector<16x32xf32> to vector<16x32xbf16>
    %c0_49 = arith.constant 0 : index
    %c0_50 = arith.constant 0 : index
    %100 = vector.load %arg11[%c0_49, %c0_50] : memref<32x64xbf16, #tpu.memory_space<vmem>>, vector<32x64xbf16>
    %cst_51 = arith.constant dense<0.000000e+00> : vector<16x64xf32>
    %101 = tpu.matmul %99, %100, %cst_51 {dimension_numbers = #tpu.dot_dimension_numbers<[1], [0], [0], [1], [0, 0, 1, 1], [], []>} : vector<16x32xbf16>, vector<32x64xbf16>, vector<16x64xf32> -> vector<16x64xf32>
    %102 = arith.addf %98, %101 : vector<16x64xf32>
    %103 = arith.truncf %95 : vector<16x32xf32> to vector<16x32xbf16>
    %c0_52 = arith.constant 0 : index
    %c0_53 = arith.constant 0 : index
    %104 = vector.load %arg12[%c0_52, %c0_53] : memref<32x64xbf16, #tpu.memory_space<vmem>>, vector<32x64xbf16>
    %cst_54 = arith.constant dense<0.000000e+00> : vector<16x64xf32>
    %105 = tpu.matmul %103, %104, %cst_54 {dimension_numbers = #tpu.dot_dimension_numbers<[1], [0], [0], [1], [0, 0, 1, 1], [], []>} : vector<16x32xbf16>, vector<32x64xbf16>, vector<16x64xf32> -> vector<16x64xf32>
    %106 = arith.addf %102, %105 : vector<16x64xf32>
    %c0_55 = arith.constant 0 : index
    %c0_56 = arith.constant 0 : index
    %107 = vector.load %arg13[%c0_55, %c0_56] : memref<1x64xf32, #tpu.memory_space<vmem>>, vector<1x64xf32>
    %108 = vector.broadcast %107 : vector<1x64xf32> to vector<16x64xf32>
    %109 = arith.addf %106, %108 : vector<16x64xf32>
    %cst_57 = arith.constant dense<0.000000e+00> : vector<64xf32>
    %110 = vector.multi_reduction <add>, %109, %cst_57 [0] : vector<16x64xf32> to vector<64xf32>
    %111 = vector.shape_cast %110 : vector<64xf32> to vector<1x64xf32>
    %cst_58 = arith.constant 1.600000e+01 : f32
    %112 = vector.broadcast %cst_58 : f32 to vector<1x64xf32>
    %113 = arith.divf %111, %112 : vector<1x64xf32>
    %114 = vector.broadcast %113 : vector<1x64xf32> to vector<16x64xf32>
    %115 = arith.subf %109, %114 : vector<16x64xf32>
    %116 = arith.mulf %115, %115 : vector<16x64xf32>
    %cst_59 = arith.constant dense<0.000000e+00> : vector<64xf32>
    %117 = vector.multi_reduction <add>, %116, %cst_59 [0] : vector<16x64xf32> to vector<64xf32>
    %118 = vector.shape_cast %117 : vector<64xf32> to vector<1x64xf32>
    %cst_60 = arith.constant 1.600000e+01 : f32
    %119 = vector.broadcast %cst_60 : f32 to vector<1x64xf32>
    %120 = arith.divf %118, %119 : vector<1x64xf32>
    %121 = vector.broadcast %113 : vector<1x64xf32> to vector<16x64xf32>
    %122 = arith.subf %109, %121 : vector<16x64xf32>
    %cst_61 = arith.constant 9.99999974E-6 : f32
    %123 = vector.broadcast %cst_61 : f32 to vector<1x64xf32>
    %124 = arith.addf %120, %123 : vector<1x64xf32>
    %125 = math.rsqrt %124 : vector<1x64xf32>
    %126 = vector.broadcast %125 : vector<1x64xf32> to vector<16x64xf32>
    %127 = arith.mulf %122, %126 : vector<16x64xf32>
    %cst_62 = arith.constant 0.000000e+00 : f32
    %128 = vector.broadcast %cst_62 : f32 to vector<16x64xf32>
    %129 = arith.maximumf %127, %128 : vector<16x64xf32>
    %c0_63 = arith.constant 0 : index
    %c0_64 = arith.constant 0 : index
    %130 = vector.load %arg39[%c0_63, %c0_64] : memref<16x64xf32, #tpu.memory_space<vmem>>, vector<16x64xf32>
    tpu.vector_store %arg39[%c0_63, %c0_64], %129 {strides = array<i32>} : memref<16x64xf32, #tpu.memory_space<vmem>>, vector<16x64xf32>,
    %c0_65 = arith.constant 0 : index
    %c0_66 = arith.constant 0 : index
    %131 = tpu.strided_load %arg39[%c0_65, %c0_66] {strides = array<i32: 2, 1>} : memref<16x64xf32, #tpu.memory_space<vmem>>, vector<8x64xf32>
    %c1_67 = arith.constant 1 : index
    %c0_68 = arith.constant 0 : index
    %132 = tpu.strided_load %arg39[%c1_67, %c0_68] {strides = array<i32: 2, 1>} : memref<16x64xf32, #tpu.memory_space<vmem>>, vector<8x64xf32>
    %133 = arith.maximumf %131, %132 : vector<8x64xf32>
    %cst_69 = arith.constant 0.000000e+00 : f32
    %134 = vector.broadcast %cst_69 : f32 to vector<1x64xf32>
    %135 = vector.extract_strided_slice %133 {offsets = [0, 0], sizes = [7, 64], strides = [1, 1]} : vector<8x64xf32> to vector<7x64xf32>
    %136 = tpu.concatenate %134, %135 in 0 : vector<1x64xf32>, vector<7x64xf32> -> vector<8x64xf32>
    %137 = vector.extract_strided_slice %133 {offsets = [1, 0], sizes = [7, 64], strides = [1, 1]} : vector<8x64xf32> to vector<7x64xf32>
    %138 = tpu.concatenate %137, %134 in 0 : vector<7x64xf32>, vector<1x64xf32> -> vector<8x64xf32>
    %139 = arith.truncf %136 : vector<8x64xf32> to vector<8x64xbf16>
    %c0_70 = arith.constant 0 : index
    %c0_71 = arith.constant 0 : index
    %140 = vector.load %arg14[%c0_70, %c0_71] : memref<64x128xbf16, #tpu.memory_space<vmem>>, vector<64x128xbf16>
    %cst_72 = arith.constant dense<0.000000e+00> : vector<8x128xf32>
    %141 = tpu.matmul %139, %140, %cst_72 {dimension_numbers = #tpu.dot_dimension_numbers<[1], [0], [0], [1], [0, 0, 1, 1], [], []>} : vector<8x64xbf16>, vector<64x128xbf16>, vector<8x128xf32> -> vector<8x128xf32>
    %142 = arith.truncf %133 : vector<8x64xf32> to vector<8x64xbf16>
    %c0_73 = arith.constant 0 : index
    %c0_74 = arith.constant 0 : index
    %143 = vector.load %arg15[%c0_73, %c0_74] : memref<64x128xbf16, #tpu.memory_space<vmem>>, vector<64x128xbf16>
    %cst_75 = arith.constant dense<0.000000e+00> : vector<8x128xf32>
    %144 = tpu.matmul %142, %143, %cst_75 {dimension_numbers = #tpu.dot_dimension_numbers<[1], [0], [0], [1], [0, 0, 1, 1], [], []>} : vector<8x64xbf16>, vector<64x128xbf16>, vector<8x128xf32> -> vector<8x128xf32>
    %145 = arith.addf %141, %144 : vector<8x128xf32>
    %146 = arith.truncf %138 : vector<8x64xf32> to vector<8x64xbf16>
    %c0_76 = arith.constant 0 : index
    %c0_77 = arith.constant 0 : index
    %147 = vector.load %arg16[%c0_76, %c0_77] : memref<64x128xbf16, #tpu.memory_space<vmem>>, vector<64x128xbf16>
    %cst_78 = arith.constant dense<0.000000e+00> : vector<8x128xf32>
    %148 = tpu.matmul %146, %147, %cst_78 {dimension_numbers = #tpu.dot_dimension_numbers<[1], [0], [0], [1], [0, 0, 1, 1], [], []>} : vector<8x64xbf16>, vector<64x128xbf16>, vector<8x128xf32> -> vector<8x128xf32>
    %149 = arith.addf %145, %148 : vector<8x128xf32>
    %c0_79 = arith.constant 0 : index
    %c0_80 = arith.constant 0 : index
    %150 = vector.load %arg17[%c0_79, %c0_80] : memref<1x128xf32, #tpu.memory_space<vmem>>, vector<1x128xf32>
    %151 = vector.broadcast %150 : vector<1x128xf32> to vector<8x128xf32>
    %152 = arith.addf %149, %151 : vector<8x128xf32>
    %cst_81 = arith.constant dense<0.000000e+00> : vector<128xf32>
    %153 = vector.multi_reduction <add>, %152, %cst_81 [0] : vector<8x128xf32> to vector<128xf32>
    %154 = vector.shape_cast %153 : vector<128xf32> to vector<1x128xf32>
    %cst_82 = arith.constant 8.000000e+00 : f32
    %155 = vector.broadcast %cst_82 : f32 to vector<1x128xf32>
    %156 = arith.divf %154, %155 : vector<1x128xf32>
    %157 = vector.broadcast %156 : vector<1x128xf32> to vector<8x128xf32>
    %158 = arith.subf %152, %157 : vector<8x128xf32>
    %159 = arith.mulf %158, %158 : vector<8x128xf32>
    %cst_83 = arith.constant dense<0.000000e+00> : vector<128xf32>
    %160 = vector.multi_reduction <add>, %159, %cst_83 [0] : vector<8x128xf32> to vector<128xf32>
    %161 = vector.shape_cast %160 : vector<128xf32> to vector<1x128xf32>
    %cst_84 = arith.constant 8.000000e+00 : f32
    %162 = vector.broadcast %cst_84 : f32 to vector<1x128xf32>
    %163 = arith.divf %161, %162 : vector<1x128xf32>
    %164 = vector.broadcast %156 : vector<1x128xf32> to vector<8x128xf32>
    %165 = arith.subf %152, %164 : vector<8x128xf32>
    %cst_85 = arith.constant 9.99999974E-6 : f32
    %166 = vector.broadcast %cst_85 : f32 to vector<1x128xf32>
    %167 = arith.addf %163, %166 : vector<1x128xf32>
    %168 = math.rsqrt %167 : vector<1x128xf32>
    %169 = vector.broadcast %168 : vector<1x128xf32> to vector<8x128xf32>
    %170 = arith.mulf %165, %169 : vector<8x128xf32>
    %cst_86 = arith.constant 0.000000e+00 : f32
    %171 = vector.broadcast %cst_86 : f32 to vector<8x128xf32>
    %172 = arith.maximumf %170, %171 : vector<8x128xf32>
    %c0_87 = arith.constant 0 : index
    %c0_88 = arith.constant 0 : index
    %173 = vector.load %arg40[%c0_87, %c0_88] : memref<8x128xf32, #tpu.memory_space<vmem>>, vector<8x128xf32>
    tpu.vector_store %arg40[%c0_87, %c0_88], %172 {strides = array<i32>} : memref<8x128xf32, #tpu.memory_space<vmem>>, vector<8x128xf32>,
    %c0_89 = arith.constant 0 : index
    %c0_90 = arith.constant 0 : index
    %174 = tpu.strided_load %arg40[%c0_89, %c0_90] {strides = array<i32: 2, 1>} : memref<8x128xf32, #tpu.memory_space<vmem>>, vector<4x128xf32>
    %c1_91 = arith.constant 1 : index
    %c0_92 = arith.constant 0 : index
    %175 = tpu.strided_load %arg40[%c1_91, %c0_92] {strides = array<i32: 2, 1>} : memref<8x128xf32, #tpu.memory_space<vmem>>, vector<4x128xf32>
    %176 = arith.maximumf %174, %175 : vector<4x128xf32>
    %177 = vector.extract_strided_slice %176 {offsets = [0, 0], sizes = [1, 128], strides = [1, 1]} : vector<4x128xf32> to vector<1x128xf32>
    %c0_93 = arith.constant 0 : index
    %c0_94 = arith.constant 0 : index
    %178 = vector.load %arg41[%c0_93, %c0_94] : memref<1x512xf32, #tpu.memory_space<vmem>>, vector<1x128xf32>
    tpu.vector_store %arg41[%c0_93, %c0_94], %177 {strides = array<i32>} : memref<1x512xf32, #tpu.memory_space<vmem>>, vector<1x128xf32>,
    %179 = vector.extract_strided_slice %176 {offsets = [1, 0], sizes = [1, 128], strides = [1, 1]} : vector<4x128xf32> to vector<1x128xf32>
    %c0_95 = arith.constant 0 : index
    %c128 = arith.constant 128 : index
    %180 = vector.load %arg41[%c0_95, %c128] : memref<1x512xf32, #tpu.memory_space<vmem>>, vector<1x128xf32>
    tpu.vector_store %arg41[%c0_95, %c128], %179 {strides = array<i32>} : memref<1x512xf32, #tpu.memory_space<vmem>>, vector<1x128xf32>,
    %181 = vector.extract_strided_slice %176 {offsets = [2, 0], sizes = [1, 128], strides = [1, 1]} : vector<4x128xf32> to vector<1x128xf32>
    %c0_96 = arith.constant 0 : index
    %c256 = arith.constant 256 : index
    %182 = vector.load %arg41[%c0_96, %c256] : memref<1x512xf32, #tpu.memory_space<vmem>>, vector<1x128xf32>
    tpu.vector_store %arg41[%c0_96, %c256], %181 {strides = array<i32>} : memref<1x512xf32, #tpu.memory_space<vmem>>, vector<1x128xf32>,
    %183 = vector.extract_strided_slice %176 {offsets = [3, 0], sizes = [1, 128], strides = [1, 1]} : vector<4x128xf32> to vector<1x128xf32>
    %c0_97 = arith.constant 0 : index
    %c384 = arith.constant 384 : index
    %184 = vector.load %arg41[%c0_97, %c384] : memref<1x512xf32, #tpu.memory_space<vmem>>, vector<1x128xf32>
    tpu.vector_store %arg41[%c0_97, %c384], %183 {strides = array<i32>} : memref<1x512xf32, #tpu.memory_space<vmem>>, vector<1x128xf32>,
    %c0_98 = arith.constant 0 : index
    %c0_99 = arith.constant 0 : index
    %185 = vector.load %arg41[%c0_98, %c0_99] : memref<1x512xf32, #tpu.memory_space<vmem>>, vector<1x512xf32>
    %186 = arith.truncf %185 : vector<1x512xf32> to vector<1x512xbf16>
    %c0_100 = arith.constant 0 : index
    %c0_101 = arith.constant 0 : index
    %187 = vector.load %arg18[%c0_100, %c0_101] : memref<512x512xbf16, #tpu.memory_space<vmem>>, vector<512x512xbf16>
    %cst_102 = arith.constant dense<0.000000e+00> : vector<1x512xf32>
    %188 = tpu.matmul %186, %187, %cst_102 {dimension_numbers = #tpu.dot_dimension_numbers<[1], [0], [0], [1], [0, 0, 1, 1], [], []>} : vector<1x512xbf16>, vector<512x512xbf16>, vector<1x512xf32> -> vector<1x512xf32>
    %c0_103 = arith.constant 0 : index
    %c0_104 = arith.constant 0 : index
    %189 = vector.load %arg19[%c0_103, %c0_104] : memref<1x512xf32, #tpu.memory_space<vmem>>, vector<1x512xf32>
    %190 = arith.addf %188, %189 : vector<1x512xf32>
    %c0_105 = arith.constant 0 : index
    %c0_106 = arith.constant 0 : index
    %191 = vector.load %arg20[%c0_105, %c0_106] : memref<1x512xf32, #tpu.memory_space<vmem>>, vector<1x512xf32>
    %c0_107 = arith.constant 0 : index
    %c0_108 = arith.constant 0 : index
    %192 = vector.load %arg21[%c0_107, %c0_108] : memref<1x512xf32, #tpu.memory_space<vmem>>, vector<1x512xf32>
    %cst_109 = arith.constant dense<0.000000e+00> : vector<1xf32>
    %193 = vector.multi_reduction <add>, %190, %cst_109 [1] : vector<1x512xf32> to vector<1xf32>
    %194 = vector.shape_cast %193 : vector<1xf32> to vector<1x1xf32>
    %cst_110 = arith.constant 5.120000e+02 : f32
    %195 = vector.broadcast %cst_110 : f32 to vector<1x1xf32>
    %196 = arith.divf %194, %195 : vector<1x1xf32>
    %197 = vector.broadcast %196 : vector<1x1xf32> to vector<1x512xf32>
    %198 = arith.subf %190, %197 : vector<1x512xf32>
    %199 = arith.mulf %198, %198 : vector<1x512xf32>
    %cst_111 = arith.constant dense<0.000000e+00> : vector<1xf32>
    %200 = vector.multi_reduction <add>, %199, %cst_111 [1] : vector<1x512xf32> to vector<1xf32>
    %201 = vector.shape_cast %200 : vector<1xf32> to vector<1x1xf32>
    %cst_112 = arith.constant 5.120000e+02 : f32
    %202 = vector.broadcast %cst_112 : f32 to vector<1x1xf32>
    %203 = arith.divf %201, %202 : vector<1x1xf32>
    %204 = vector.broadcast %196 : vector<1x1xf32> to vector<1x512xf32>
    %205 = arith.subf %190, %204 : vector<1x512xf32>
    %cst_113 = arith.constant 9.99999974E-6 : f32
    %206 = vector.broadcast %cst_113 : f32 to vector<1x1xf32>
    %207 = arith.addf %203, %206 : vector<1x1xf32>
    %208 = math.rsqrt %207 : vector<1x1xf32>
    %209 = vector.broadcast %208 : vector<1x1xf32> to vector<1x512xf32>
    %210 = arith.mulf %205, %209 : vector<1x512xf32>
    %211 = arith.mulf %210, %191 : vector<1x512xf32>
    %212 = arith.addf %211, %192 : vector<1x512xf32>
    %cst_114 = arith.constant 0.000000e+00 : f32
    %213 = vector.broadcast %cst_114 : f32 to vector<1x512xf32>
    %214 = arith.maximumf %212, %213 : vector<1x512xf32>
    %215 = arith.truncf %214 : vector<1x512xf32> to vector<1x512xbf16>
    %c0_115 = arith.constant 0 : index
    %c0_116 = arith.constant 0 : index
    %216 = vector.load %arg22[%c0_115, %c0_116] : memref<512x256xbf16, #tpu.memory_space<vmem>>, vector<512x256xbf16>
    %cst_117 = arith.constant dense<0.000000e+00> : vector<1x256xf32>
    %217 = tpu.matmul %215, %216, %cst_117 {dimension_numbers = #tpu.dot_dimension_numbers<[1], [0], [0], [1], [0, 0, 1, 1], [], []>} : vector<1x512xbf16>, vector<512x256xbf16>, vector<1x256xf32> -> vector<1x256xf32>
    %c0_118 = arith.constant 0 : index
    %c0_119 = arith.constant 0 : index
    %218 = vector.load %arg23[%c0_118, %c0_119] : memref<1x256xf32, #tpu.memory_space<vmem>>, vector<1x256xf32>
    %219 = arith.addf %217, %218 : vector<1x256xf32>
    %c0_120 = arith.constant 0 : index
    %c0_121 = arith.constant 0 : index
    %220 = vector.load %arg24[%c0_120, %c0_121] : memref<1x256xf32, #tpu.memory_space<vmem>>, vector<1x256xf32>
    %c0_122 = arith.constant 0 : index
    %c0_123 = arith.constant 0 : index
    %221 = vector.load %arg25[%c0_122, %c0_123] : memref<1x256xf32, #tpu.memory_space<vmem>>, vector<1x256xf32>
    %cst_124 = arith.constant dense<0.000000e+00> : vector<1xf32>
    %222 = vector.multi_reduction <add>, %219, %cst_124 [1] : vector<1x256xf32> to vector<1xf32>
    %223 = vector.shape_cast %222 : vector<1xf32> to vector<1x1xf32>
    %cst_125 = arith.constant 2.560000e+02 : f32
    %224 = vector.broadcast %cst_125 : f32 to vector<1x1xf32>
    %225 = arith.divf %223, %224 : vector<1x1xf32>
    %226 = vector.broadcast %225 : vector<1x1xf32> to vector<1x256xf32>
    %227 = arith.subf %219, %226 : vector<1x256xf32>
    %228 = arith.mulf %227, %227 : vector<1x256xf32>
    %cst_126 = arith.constant dense<0.000000e+00> : vector<1xf32>
    %229 = vector.multi_reduction <add>, %228, %cst_126 [1] : vector<1x256xf32> to vector<1xf32>
    %230 = vector.shape_cast %229 : vector<1xf32> to vector<1x1xf32>
    %cst_127 = arith.constant 2.560000e+02 : f32
    %231 = vector.broadcast %cst_127 : f32 to vector<1x1xf32>
    %232 = arith.divf %230, %231 : vector<1x1xf32>
    %233 = vector.broadcast %225 : vector<1x1xf32> to vector<1x256xf32>
    %234 = arith.subf %219, %233 : vector<1x256xf32>
    %cst_128 = arith.constant 9.99999974E-6 : f32
    %235 = vector.broadcast %cst_128 : f32 to vector<1x1xf32>
    %236 = arith.addf %232, %235 : vector<1x1xf32>
    %237 = math.rsqrt %236 : vector<1x1xf32>
    %238 = vector.broadcast %237 : vector<1x1xf32> to vector<1x256xf32>
    %239 = arith.mulf %234, %238 : vector<1x256xf32>
    %240 = arith.mulf %239, %220 : vector<1x256xf32>
    %241 = arith.addf %240, %221 : vector<1x256xf32>
    %cst_129 = arith.constant 0.000000e+00 : f32
    %242 = vector.broadcast %cst_129 : f32 to vector<1x256xf32>
    %243 = arith.maximumf %241, %242 : vector<1x256xf32>
    %244 = arith.truncf %243 : vector<1x256xf32> to vector<1x256xbf16>
    %c0_130 = arith.constant 0 : index
    %c0_131 = arith.constant 0 : index
    %245 = vector.load %arg26[%c0_130, %c0_131] : memref<256x128xbf16, #tpu.memory_space<vmem>>, vector<256x128xbf16>
    %cst_132 = arith.constant dense<0.000000e+00> : vector<1x128xf32>
    %246 = tpu.matmul %244, %245, %cst_132 {dimension_numbers = #tpu.dot_dimension_numbers<[1], [0], [0], [1], [0, 0, 1, 1], [], []>} : vector<1x256xbf16>, vector<256x128xbf16>, vector<1x128xf32> -> vector<1x128xf32>
    %c0_133 = arith.constant 0 : index
    %c0_134 = arith.constant 0 : index
    %247 = vector.load %arg27[%c0_133, %c0_134] : memref<1x128xf32, #tpu.memory_space<vmem>>, vector<1x128xf32>
    %248 = arith.addf %246, %247 : vector<1x128xf32>
    %c0_135 = arith.constant 0 : index
    %c0_136 = arith.constant 0 : index
    %249 = vector.load %arg28[%c0_135, %c0_136] : memref<1x128xf32, #tpu.memory_space<vmem>>, vector<1x128xf32>
    %c0_137 = arith.constant 0 : index
    %c0_138 = arith.constant 0 : index
    %250 = vector.load %arg29[%c0_137, %c0_138] : memref<1x128xf32, #tpu.memory_space<vmem>>, vector<1x128xf32>
    %cst_139 = arith.constant dense<0.000000e+00> : vector<1xf32>
    %251 = vector.multi_reduction <add>, %248, %cst_139 [1] : vector<1x128xf32> to vector<1xf32>
    %252 = vector.shape_cast %251 : vector<1xf32> to vector<1x1xf32>
    %cst_140 = arith.constant 1.280000e+02 : f32
    %253 = vector.broadcast %cst_140 : f32 to vector<1x1xf32>
    %254 = arith.divf %252, %253 : vector<1x1xf32>
    %255 = vector.broadcast %254 : vector<1x1xf32> to vector<1x128xf32>
    %256 = arith.subf %248, %255 : vector<1x128xf32>
    %257 = arith.mulf %256, %256 : vector<1x128xf32>
    %cst_141 = arith.constant dense<0.000000e+00> : vector<1xf32>
    %258 = vector.multi_reduction <add>, %257, %cst_141 [1] : vector<1x128xf32> to vector<1xf32>
    %259 = vector.shape_cast %258 : vector<1xf32> to vector<1x1xf32>
    %cst_142 = arith.constant 1.280000e+02 : f32
    %260 = vector.broadcast %cst_142 : f32 to vector<1x1xf32>
    %261 = arith.divf %259, %260 : vector<1x1xf32>
    %262 = vector.broadcast %254 : vector<1x1xf32> to vector<1x128xf32>
    %263 = arith.subf %248, %262 : vector<1x128xf32>
    %cst_143 = arith.constant 9.99999974E-6 : f32
    %264 = vector.broadcast %cst_143 : f32 to vector<1x1xf32>
    %265 = arith.addf %261, %264 : vector<1x1xf32>
    %266 = math.rsqrt %265 : vector<1x1xf32>
    %267 = vector.broadcast %266 : vector<1x1xf32> to vector<1x128xf32>
    %268 = arith.mulf %263, %267 : vector<1x128xf32>
    %269 = arith.mulf %268, %249 : vector<1x128xf32>
    %270 = arith.addf %269, %250 : vector<1x128xf32>
    %cst_144 = arith.constant 0.000000e+00 : f32
    %271 = vector.broadcast %cst_144 : f32 to vector<1x128xf32>
    %272 = arith.maximumf %270, %271 : vector<1x128xf32>
    %273 = arith.truncf %272 : vector<1x128xf32> to vector<1x128xbf16>
    %c0_145 = arith.constant 0 : index
    %c0_146 = arith.constant 0 : index
    %274 = vector.load %arg30[%c0_145, %c0_146] : memref<128x64xbf16, #tpu.memory_space<vmem>>, vector<128x64xbf16>
    %cst_147 = arith.constant dense<0.000000e+00> : vector<1x64xf32>
    %275 = tpu.matmul %273, %274, %cst_147 {dimension_numbers = #tpu.dot_dimension_numbers<[1], [0], [0], [1], [0, 0, 1, 1], [], []>} : vector<1x128xbf16>, vector<128x64xbf16>, vector<1x64xf32> -> vector<1x64xf32>
    %c0_148 = arith.constant 0 : index
    %c0_149 = arith.constant 0 : index
    %276 = vector.load %arg31[%c0_148, %c0_149] : memref<1x64xf32, #tpu.memory_space<vmem>>, vector<1x64xf32>
    %277 = arith.addf %275, %276 : vector<1x64xf32>
    %c0_150 = arith.constant 0 : index
    %c0_151 = arith.constant 0 : index
    %278 = vector.load %arg32[%c0_150, %c0_151] : memref<1x64xf32, #tpu.memory_space<vmem>>, vector<1x64xf32>
    %c0_152 = arith.constant 0 : index
    %c0_153 = arith.constant 0 : index
    %279 = vector.load %arg33[%c0_152, %c0_153] : memref<1x64xf32, #tpu.memory_space<vmem>>, vector<1x64xf32>
    %cst_154 = arith.constant dense<0.000000e+00> : vector<1xf32>
    %280 = vector.multi_reduction <add>, %277, %cst_154 [1] : vector<1x64xf32> to vector<1xf32>
    %281 = vector.shape_cast %280 : vector<1xf32> to vector<1x1xf32>
    %cst_155 = arith.constant 6.400000e+01 : f32
    %282 = vector.broadcast %cst_155 : f32 to vector<1x1xf32>
    %283 = arith.divf %281, %282 : vector<1x1xf32>
    %284 = vector.broadcast %283 : vector<1x1xf32> to vector<1x64xf32>
    %285 = arith.subf %277, %284 : vector<1x64xf32>
    %286 = arith.mulf %285, %285 : vector<1x64xf32>
    %cst_156 = arith.constant dense<0.000000e+00> : vector<1xf32>
    %287 = vector.multi_reduction <add>, %286, %cst_156 [1] : vector<1x64xf32> to vector<1xf32>
    %288 = vector.shape_cast %287 : vector<1xf32> to vector<1x1xf32>
    %cst_157 = arith.constant 6.400000e+01 : f32
    %289 = vector.broadcast %cst_157 : f32 to vector<1x1xf32>
    %290 = arith.divf %288, %289 : vector<1x1xf32>
    %291 = vector.broadcast %283 : vector<1x1xf32> to vector<1x64xf32>
    %292 = arith.subf %277, %291 : vector<1x64xf32>
    %cst_158 = arith.constant 9.99999974E-6 : f32
    %293 = vector.broadcast %cst_158 : f32 to vector<1x1xf32>
    %294 = arith.addf %290, %293 : vector<1x1xf32>
    %295 = math.rsqrt %294 : vector<1x1xf32>
    %296 = vector.broadcast %295 : vector<1x1xf32> to vector<1x64xf32>
    %297 = arith.mulf %292, %296 : vector<1x64xf32>
    %298 = arith.mulf %297, %278 : vector<1x64xf32>
    %299 = arith.addf %298, %279 : vector<1x64xf32>
    %cst_159 = arith.constant 0.000000e+00 : f32
    %300 = vector.broadcast %cst_159 : f32 to vector<1x64xf32>
    %301 = arith.maximumf %299, %300 : vector<1x64xf32>
    %302 = arith.truncf %301 : vector<1x64xf32> to vector<1x64xbf16>
    %c0_160 = arith.constant 0 : index
    %c0_161 = arith.constant 0 : index
    %303 = vector.load %arg34[%c0_160, %c0_161] : memref<64x1xbf16, #tpu.memory_space<vmem>>, vector<64x1xbf16>
    %cst_162 = arith.constant dense<0.000000e+00> : vector<1x1xf32>
    %304 = tpu.matmul %302, %303, %cst_162 {dimension_numbers = #tpu.dot_dimension_numbers<[1], [0], [0], [1], [0, 0, 1, 1], [], []>} : vector<1x64xbf16>, vector<64x1xbf16>, vector<1x1xf32> -> vector<1x1xf32>
    %c0_163 = arith.constant 0 : index
    %c0_164 = arith.constant 0 : index
    %305 = vector.load %arg35[%c0_163, %c0_164] : memref<1x1xf32, #tpu.memory_space<vmem>>, vector<1x1xf32>
    %306 = arith.addf %304, %305 : vector<1x1xf32>
    %c0_165 = arith.constant 0 : index
    %c0_166 = arith.constant 0 : index
    %c0_167 = arith.constant 0 : index
    %307 = vector.load %arg36[%c0_165, %c0_166, %c0_167] : memref<1x1x1xf32, #tpu.memory_space<vmem>>, vector<1x1x1xf32>
    %308 = vector.shape_cast %307 : vector<1x1x1xf32> to vector<1x1xf32>
    %309 = vector.shape_cast %306 : vector<1x1xf32> to vector<1x1x1xf32>
    tpu.vector_store %arg36[%c0_165, %c0_166, %c0_167], %309 {strides = array<i32>} : memref<1x1x1xf32, #tpu.memory_space<vmem>>, vector<1x1x1xf32>,
    return
  }
  func.func @transform_0(%arg0: i32) -> (i32, i32, i32) {
    %c0_i32 = arith.constant 0 : i32
    %c0_i32_0 = arith.constant 0 : i32
    %c0_i32_1 = arith.constant 0 : i32
    return %arg0, %c0_i32, %c0_i32_0 : i32, i32, i32
  }
  func.func @transform_1(%arg0: i32) -> (i32, i32) {
    %c0_i32 = arith.constant 0 : i32
    %c0_i32_0 = arith.constant 0 : i32
    %c0_i32_1 = arith.constant 0 : i32
    return %c0_i32, %c0_i32_0 : i32, i32
  }
  func.func @transform_2(%arg0: i32) -> (i32, i32) {
    %c0_i32 = arith.constant 0 : i32
    %c0_i32_0 = arith.constant 0 : i32
    %c0_i32_1 = arith.constant 0 : i32
    return %c0_i32, %c0_i32_0 : i32, i32
  }
  func.func @transform_3(%arg0: i32) -> (i32, i32) {
    %c0_i32 = arith.constant 0 : i32
    %c0_i32_0 = arith.constant 0 : i32
    %c0_i32_1 = arith.constant 0 : i32
    return %c0_i32, %c0_i32_0 : i32, i32
  }
  func.func @transform_4(%arg0: i32) -> (i32, i32) {
    %c0_i32 = arith.constant 0 : i32
    %c0_i32_0 = arith.constant 0 : i32
    %c0_i32_1 = arith.constant 0 : i32
    return %c0_i32, %c0_i32_0 : i32, i32
  }
  func.func @transform_5(%arg0: i32) -> (i32, i32) {
    %c0_i32 = arith.constant 0 : i32
    %c0_i32_0 = arith.constant 0 : i32
    %c0_i32_1 = arith.constant 0 : i32
    return %c0_i32, %c0_i32_0 : i32, i32
  }
  func.func @transform_6(%arg0: i32) -> (i32, i32) {
    %c0_i32 = arith.constant 0 : i32
    %c0_i32_0 = arith.constant 0 : i32
    %c0_i32_1 = arith.constant 0 : i32
    return %c0_i32, %c0_i32_0 : i32, i32
  }
  func.func @transform_7(%arg0: i32) -> (i32, i32) {
    %c0_i32 = arith.constant 0 : i32
    %c0_i32_0 = arith.constant 0 : i32
    %c0_i32_1 = arith.constant 0 : i32
    return %c0_i32, %c0_i32_0 : i32, i32
  }
  func.func @transform_8(%arg0: i32) -> (i32, i32) {
    %c0_i32 = arith.constant 0 : i32
    %c0_i32_0 = arith.constant 0 : i32
    %c0_i32_1 = arith.constant 0 : i32
    return %c0_i32, %c0_i32_0 : i32, i32
  }
  func.func @transform_9(%arg0: i32) -> (i32, i32) {
    %c0_i32 = arith.constant 0 : i32
    %c0_i32_0 = arith.constant 0 : i32
    %c0_i32_1 = arith.constant 0 : i32
    return %c0_i32, %c0_i32_0 : i32, i32
  }
  func.func @transform_10(%arg0: i32) -> (i32, i32) {
    %c0_i32 = arith.constant 0 : i32
    %c0_i32_0 = arith.constant 0 : i32
    %c0_i32_1 = arith.constant 0 : i32
    return %c0_i32, %c0_i32_0 : i32, i32
  }
  func.func @transform_11(%arg0: i32) -> (i32, i32) {
    %c0_i32 = arith.constant 0 : i32
    %c0_i32_0 = arith.constant 0 : i32
    %c0_i32_1 = arith.constant 0 : i32
    return %c0_i32, %c0_i32_0 : i32, i32
  }
  func.func @transform_12(%arg0: i32) -> (i32, i32) {
    %c0_i32 = arith.constant 0 : i32
    %c0_i32_0 = arith.constant 0 : i32
    %c0_i32_1 = arith.constant 0 : i32
    return %c0_i32, %c0_i32_0 : i32, i32
  }
  func.func @transform_13(%arg0: i32) -> (i32, i32) {
    %c0_i32 = arith.constant 0 : i32
    %c0_i32_0 = arith.constant 0 : i32
    %c0_i32_1 = arith.constant 0 : i32
    return %c0_i32, %c0_i32_0 : i32, i32
  }
  func.func @transform_14(%arg0: i32) -> (i32, i32) {
    %c0_i32 = arith.constant 0 : i32
    %c0_i32_0 = arith.constant 0 : i32
    %c0_i32_1 = arith.constant 0 : i32
    return %c0_i32, %c0_i32_0 : i32, i32
  }
  func.func @transform_15(%arg0: i32) -> (i32, i32) {
    %c0_i32 = arith.constant 0 : i32
    %c0_i32_0 = arith.constant 0 : i32
    %c0_i32_1 = arith.constant 0 : i32
    return %c0_i32, %c0_i32_0 : i32, i32
  }
  func.func @transform_16(%arg0: i32) -> (i32, i32) {
    %c0_i32 = arith.constant 0 : i32
    %c0_i32_0 = arith.constant 0 : i32
    %c0_i32_1 = arith.constant 0 : i32
    return %c0_i32, %c0_i32_0 : i32, i32
  }
  func.func @transform_17(%arg0: i32) -> (i32, i32) {
    %c0_i32 = arith.constant 0 : i32
    %c0_i32_0 = arith.constant 0 : i32
    %c0_i32_1 = arith.constant 0 : i32
    return %c0_i32, %c0_i32_0 : i32, i32
  }
  func.func @transform_18(%arg0: i32) -> (i32, i32) {
    %c0_i32 = arith.constant 0 : i32
    %c0_i32_0 = arith.constant 0 : i32
    %c0_i32_1 = arith.constant 0 : i32
    return %c0_i32, %c0_i32_0 : i32, i32
  }
  func.func @transform_19(%arg0: i32) -> (i32, i32) {
    %c0_i32 = arith.constant 0 : i32
    %c0_i32_0 = arith.constant 0 : i32
    %c0_i32_1 = arith.constant 0 : i32
    return %c0_i32, %c0_i32_0 : i32, i32
  }
  func.func @transform_20(%arg0: i32) -> (i32, i32) {
    %c0_i32 = arith.constant 0 : i32
    %c0_i32_0 = arith.constant 0 : i32
    %c0_i32_1 = arith.constant 0 : i32
    return %c0_i32, %c0_i32_0 : i32, i32
  }
  func.func @transform_21(%arg0: i32) -> (i32, i32) {
    %c0_i32 = arith.constant 0 : i32
    %c0_i32_0 = arith.constant 0 : i32
    %c0_i32_1 = arith.constant 0 : i32
    return %c0_i32, %c0_i32_0 : i32, i32
  }
  func.func @transform_22(%arg0: i32) -> (i32, i32) {
    %c0_i32 = arith.constant 0 : i32
    %c0_i32_0 = arith.constant 0 : i32
    %c0_i32_1 = arith.constant 0 : i32
    return %c0_i32, %c0_i32_0 : i32, i32
  }
  func.func @transform_23(%arg0: i32) -> (i32, i32) {
    %c0_i32 = arith.constant 0 : i32
    %c0_i32_0 = arith.constant 0 : i32
    %c0_i32_1 = arith.constant 0 : i32
    return %c0_i32, %c0_i32_0 : i32, i32
  }
  func.func @transform_24(%arg0: i32) -> (i32, i32) {
    %c0_i32 = arith.constant 0 : i32
    %c0_i32_0 = arith.constant 0 : i32
    %c0_i32_1 = arith.constant 0 : i32
    return %c0_i32, %c0_i32_0 : i32, i32
  }
  func.func @transform_25(%arg0: i32) -> (i32, i32) {
    %c0_i32 = arith.constant 0 : i32
    %c0_i32_0 = arith.constant 0 : i32
    %c0_i32_1 = arith.constant 0 : i32
    return %c0_i32, %c0_i32_0 : i32, i32
  }
  func.func @transform_26(%arg0: i32) -> (i32, i32) {
    %c0_i32 = arith.constant 0 : i32
    %c0_i32_0 = arith.constant 0 : i32
    %c0_i32_1 = arith.constant 0 : i32
    return %c0_i32, %c0_i32_0 : i32, i32
  }
  func.func @transform_27(%arg0: i32) -> (i32, i32) {
    %c0_i32 = arith.constant 0 : i32
    %c0_i32_0 = arith.constant 0 : i32
    %c0_i32_1 = arith.constant 0 : i32
    return %c0_i32, %c0_i32_0 : i32, i32
  }
  func.func @transform_28(%arg0: i32) -> (i32, i32) {
    %c0_i32 = arith.constant 0 : i32
    %c0_i32_0 = arith.constant 0 : i32
    %c0_i32_1 = arith.constant 0 : i32
    return %c0_i32, %c0_i32_0 : i32, i32
  }
  func.func @transform_29(%arg0: i32) -> (i32, i32) {
    %c0_i32 = arith.constant 0 : i32
    %c0_i32_0 = arith.constant 0 : i32
    %c0_i32_1 = arith.constant 0 : i32
    return %c0_i32, %c0_i32_0 : i32, i32
  }
  func.func @transform_30(%arg0: i32) -> (i32, i32) {
    %c0_i32 = arith.constant 0 : i32
    %c0_i32_0 = arith.constant 0 : i32
    %c0_i32_1 = arith.constant 0 : i32
    return %c0_i32, %c0_i32_0 : i32, i32
  }
  func.func @transform_31(%arg0: i32) -> (i32, i32) {
    %c0_i32 = arith.constant 0 : i32
    %c0_i32_0 = arith.constant 0 : i32
    %c0_i32_1 = arith.constant 0 : i32
    return %c0_i32, %c0_i32_0 : i32, i32
  }
  func.func @transform_32(%arg0: i32) -> (i32, i32) {
    %c0_i32 = arith.constant 0 : i32
    %c0_i32_0 = arith.constant 0 : i32
    %c0_i32_1 = arith.constant 0 : i32
    return %c0_i32, %c0_i32_0 : i32, i32
  }
  func.func @transform_33(%arg0: i32) -> (i32, i32) {
    %c0_i32 = arith.constant 0 : i32
    %c0_i32_0 = arith.constant 0 : i32
    %c0_i32_1 = arith.constant 0 : i32
    return %c0_i32, %c0_i32_0 : i32, i32
  }
  func.func @transform_34(%arg0: i32) -> (i32, i32) {
    %c0_i32 = arith.constant 0 : i32
    %c0_i32_0 = arith.constant 0 : i32
    %c0_i32_1 = arith.constant 0 : i32
    return %c0_i32, %c0_i32_0 : i32, i32
  }
  func.func @transform_35(%arg0: i32) -> (i32, i32, i32) {
    %c0_i32 = arith.constant 0 : i32
    %c0_i32_0 = arith.constant 0 : i32
    %c0_i32_1 = arith.constant 0 : i32
    return %arg0, %c0_i32, %c0_i32_0 : i32, i32, i32
  }
}

</mosaic_0001>

<llo_original>
// kernel: paper_scoring_cnn_forward.1
$region0: #{paper_scoring_cnn_forward.1}
  #allocation0 [shape = 'u32[]', space=smem, size = 0x4, offset = 0x4, fixed_abs, tag = 'smem constant byte address 0x4 - core index']
  #allocation1 [shape = 'u32[144,128]{1,0:T(1,128)}', space=vmem, size = 0x12000, scoped, tag = 'internal scratch']
  #allocation2 [shape = 'f32[64,16]{1,0:T(8,128)}', space=vmem, size = 0x8000, scoped, tag = 'scratch operand']
  #allocation3 [shape = 'f32[32,32]{1,0:T(8,128)}', space=vmem, size = 0x4000, scoped, tag = 'scratch operand']
  #allocation4 [shape = 'f32[16,64]{1,0:T(8,128)}', space=vmem, size = 0x2000, scoped, tag = 'scratch operand']
  #allocation5 [shape = 'f32[8,128]{1,0:T(8,128)}', space=vmem, size = 0x1000, scoped, tag = 'scratch operand']
  #allocation6 [shape = 'f32[1,512]{1,0:T(1,128)}', space=vmem, size = 0x800, scoped, tag = 'scratch operand']
  #allocation7 [shape = 'f32[1,1]{1,0:T(1,128)S(1)}', space=vmem, size = 0x200, scoped, tag = 'scoped memory for paper_scoring_cnn_forward.1']
  %s0 = inlined_call_operand.smem [shape: u32[36], index: -1, kind: input, shape index: {}]
  %s1 = sld [smem:[%s0]]
  %s2 = scalar_lea.smem %s0, 1
  %s3 = sld [smem:[%s2]]
  %s4 = scalar_lea.smem %s0, 2
  %s5 = sld [smem:[%s4]]
  %s6 = scalar_lea.smem %s0, 3
  %s7 = sld [smem:[%s6]]
  %s8 = scalar_lea.smem %s0, 4
  %s9 = sld [smem:[%s8]]
  %s10 = scalar_lea.smem %s0, 5
  %s11 = sld [smem:[%s10]]
  %s12 = scalar_lea.smem %s0, 6
  %s13 = sld [smem:[%s12]]
  %s14 = scalar_lea.smem %s0, 7
  %s15 = sld [smem:[%s14]]
  %s16 = scalar_lea.smem %s0, 8
  %s17 = sld [smem:[%s16]]
  %s18 = scalar_lea.smem %s0, 9
  %s19 = sld [smem:[%s18]]
  %s20 = scalar_lea.smem %s0, 10
  %s21 = sld [smem:[%s20]]
  %s22 = scalar_lea.smem %s0, 11
  %s23 = sld [smem:[%s22]]
  %s24 = scalar_lea.smem %s0, 12
  %s25 = sld [smem:[%s24]]
  %s26 = scalar_lea.smem %s0, 13
  %s27 = sld [smem:[%s26]]
  %s28 = scalar_lea.smem %s0, 14
  %s29 = sld [smem:[%s28]]
  %s30 = scalar_lea.smem %s0, 15
  %s31 = sld [smem:[%s30]]
  %s32 = scalar_lea.smem %s0, 16
  %s33 = sld [smem:[%s32]]
  %s34 = scalar_lea.smem %s0, 17
  %s35 = sld [smem:[%s34]]
  %s36 = scalar_lea.smem %s0, 18
  %s37 = sld [smem:[%s36]]
  %s38 = scalar_lea.smem %s0, 19
  %s39 = sld [smem:[%s38]]
  %s40 = scalar_lea.smem %s0, 20
  %s41 = sld [smem:[%s40]]
  %s42 = scalar_lea.smem %s0, 21
  %s43 = sld [smem:[%s42]]
  %s44 = scalar_lea.smem %s0, 22
  %s45 = sld [smem:[%s44]]
  %s46 = scalar_lea.smem %s0, 23
  %s47 = sld [smem:[%s46]]
  %s48 = scalar_lea.smem %s0, 24
  %s49 = sld [smem:[%s48]]
  %s50 = scalar_lea.smem %s0, 25
  %s51 = sld [smem:[%s50]]
  %s52 = scalar_lea.smem %s0, 26
  %s53 = sld [smem:[%s52]]
  %s54 = scalar_lea.smem %s0, 27
  %s55 = sld [smem:[%s54]]
  %s56 = scalar_lea.smem %s0, 28
  %s57 = sld [smem:[%s56]]
  %s58 = scalar_lea.smem %s0, 29
  %s59 = sld [smem:[%s58]]
  %s60 = scalar_lea.smem %s0, 30
  %s61 = sld [smem:[%s60]]
  %s62 = scalar_lea.smem %s0, 31
  %s63 = sld [smem:[%s62]]
  %s64 = scalar_lea.smem %s0, 32
  %s65 = sld [smem:[%s64]]
  %s66 = scalar_lea.smem %s0, 33
  %s67 = sld [smem:[%s66]]
  %s68 = scalar_lea.smem %s0, 34
  %s69 = sld [smem:[%s68]]
  %s70 = scalar_lea.smem %s0, 35
  %s71 = sld [smem:[%s70]]
  %s72 = sld [smem:[#allocation0]]
  $region217: #{paper_scoring_cnn_forward.1} parent=0
    _
  %s74 = ssub.s32 1, %s72
  %s75 = scalar_select 0, %s74, %s72
  %v76 = vstv %s69
  %77 = vst [vmem:[#allocation7] sm:$0x1] %v76
  $region1: #{paper_scoring_cnn_forward.1} parent=0
    #allocation8 [shape = 'u8[512]{0}', space=vmem, size = 0x400, scoped, tag = 'input window, operand 1, single buffered']
    #allocation9 [shape = 's32[2]{0}', space=sflag, size = 0x8, scoped, tag = 'scoped memory for paper_scoring_cnn_forward.1']
    #allocation10 [shape = 'u8[512]{0}', space=vmem, size = 0x400, scoped, tag = 'input window, operand 2, single buffered']
    #allocation11 [shape = 's32[1]{0}', space=sflag, size = 0x4, scoped, tag = 'scoped memory for paper_scoring_cnn_forward.1']
    #allocation12 [shape = 'u8[512]{0}', space=vmem, size = 0x400, scoped, tag = 'input window, operand 3, single buffered']
    #allocation13 [shape = 'u8[512]{0}', space=vmem, size = 0x400, scoped, tag = 'input window, operand 4, single buffered']
    #allocation14 [shape = 's32[1]{0}', space=sflag, size = 0x4, scoped, tag = 'scoped memory for paper_scoring_cnn_forward.1']
    #allocation15 [shape = 'u8[4096]{0}', space=vmem, size = 0x1000, scoped, tag = 'input window, operand 5, single buffered']
    #allocation16 [shape = 'u8[4096]{0}', space=vmem, size = 0x1000, scoped, tag = 'input window, operand 6, single buffered']
    #allocation17 [shape = 's32[1]{0}', space=sflag, size = 0x4, scoped, tag = 'scoped memory for paper_scoring_cnn_forward.1']
    #allocation18 [shape = 'u8[4096]{0}', space=vmem, size = 0x1000, scoped, tag = 'input window, operand 7, single buffered']
    #allocation19 [shape = 'u8[512]{0}', space=vmem, size = 0x400, scoped, tag = 'input window, operand 8, single buffered']
    #allocation20 [shape = 's32[1]{0}', space=sflag, size = 0x4, scoped, tag = 'scoped memory for paper_scoring_cnn_forward.1']
    #allocation21 [shape = 'u8[512]{0}', space=vmem, size = 0x400, scoped, tag = 'input window, operand 12, single buffered']
    #allocation22 [shape = 'u8[524288]{0}', space=vmem, size = 0x80000, scoped, tag = 'input window, operand 17, single buffered']
    #allocation23 [shape = 's32[1]{0}', space=sflag, size = 0x4, scoped, tag = 'scoped memory for paper_scoring_cnn_forward.1']
    #allocation24 [shape = 'u8[262144]{0}', space=vmem, size = 0x40000, scoped, tag = 'input window, operand 21, single buffered']
    %78 = vsyncpa [#allocation9], 0
    %79 = vsyncpa [#allocation11], 0
    %80 = vsyncpa [#allocation14], 0
    %81 = vsyncpa [#allocation17], 0
    %82 = vsyncpa [#allocation20], 0
    %83 = vsyncpa [#allocation23], 0
    loop: start=0, step=1, limit=4
    $region2: #{paper_scoring_cnn_forward.1} parent=1 // loop_pre_header
      _
    $region3: #{paper_scoring_cnn_forward.1} parent=1 // loop_header
      %s85 = sphi 0, %s89
      %p86 = scmp.ge.s32.totalorder %s85, 4
      %s95 = sphi 0, %s97
      %s98 = sphi 0, %s95
      %s99 = sphi 0, %s98
      %s115 = sphi 0, %s99
      %s119 = sphi 0, %s119
      %s121 = sphi 0, %s119
      %s122 = sphi 0, %s121
      %s136 = sphi 0, %s122
      %s140 = sphi 0, %s140
      %s142 = sphi 0, %s140
      %s143 = sphi 0, %s142
      %s157 = sphi 0, %s143
      %s161 = sphi 0, %s161
      %s163 = sphi 0, %s161
      %s164 = sphi 0, %s163
      %s178 = sphi 0, %s164
      %s182 = sphi 0, %s182
      %s184 = sphi 0, %s182
      %s185 = sphi 0, %s184
      %s199 = sphi 0, %s185
      %s203 = sphi 0, %s203
      %s205 = sphi 0, %s203
      %s206 = sphi 0, %s205
      %s220 = sphi 0, %s206
      %s224 = sphi 0, %s224
      %s226 = sphi 0, %s224
      %s227 = sphi 0, %s226
      %s241 = sphi 0, %s227
      %s245 = sphi 0, %s245
      %s247 = sphi 0, %s245
      %s248 = sphi 0, %s247
      %s262 = sphi 0, %s248
      %s266 = sphi 0, %s266
      %s268 = sphi 0, %s266
      %s269 = sphi 0, %s268
      %s283 = sphi 0, %s269
      %s287 = sphi 0, %s287
      %s289 = sphi 0, %s287
      %s290 = sphi 0, %s289
      %s304 = sphi 0, %s290
      %s308 = sphi 0, %s308
      %s310 = sphi 0, %s308
      %s311 = sphi 0, %s310
      %s325 = sphi 0, %s311
      %s329 = sphi 0, %s329
      %s331 = sphi 0, %s329
      %s332 = sphi 0, %s331
      %s346 = sphi 0, %s332
      %s350 = sphi 0, %s350
      %s352 = sphi 0, %s350
      %s353 = sphi 0, %s352
      %s367 = sphi 0, %s353
      %s371 = sphi 0, %s371
      %s373 = sphi 0, %s371
      %s374 = sphi 0, %s373
      %s388 = sphi 0, %s374
      %s392 = sphi 0, %s392
      %s394 = sphi 0, %s392
      %s395 = sphi 0, %s394
      %s409 = sphi 0, %s395
      %s413 = sphi 0, %s413
      %s415 = sphi 0, %s413
      %s416 = sphi 0, %s415
      %s430 = sphi 0, %s416
      %s434 = sphi 0, %s434
      %s436 = sphi 0, %s434
      %s437 = sphi 0, %s436
      %s451 = sphi 0, %s437
      %s455 = sphi 0, %s455
      %s457 = sphi 0, %s455
      %s458 = sphi 0, %s457
      %s472 = sphi 0, %s458
      %s476 = sphi 0, %s476
      %s478 = sphi 0, %s476
      %s479 = sphi 0, %s478
      %s493 = sphi 0, %s479
      %s497 = sphi 0, %s497
      %s499 = sphi 0, %s497
      %s500 = sphi 0, %s499
      %s514 = sphi 0, %s500
      %s518 = sphi 0, %s518
      %s520 = sphi 0, %s518
      %s521 = sphi 0, %s520
      %s535 = sphi 0, %s521
      %s539 = sphi 0, %s539
      %s541 = sphi 0, %s539
      %s542 = sphi 0, %s541
      %s556 = sphi 0, %s542
      %s560 = sphi 0, %s560
      %s562 = sphi 0, %s560
      %s563 = sphi 0, %s562
      %s577 = sphi 0, %s563
      %s581 = sphi 0, %s581
      %s583 = sphi 0, %s581
      %s584 = sphi 0, %s583
      %s598 = sphi 0, %s584
      %s602 = sphi 0, %s602
      %s604 = sphi 0, %s602
      %s605 = sphi 0, %s604
      %s619 = sphi 0, %s605
      %s623 = sphi 0, %s623
      %s625 = sphi 0, %s623
      %s626 = sphi 0, %s625
      %s640 = sphi 0, %s626
      %s644 = sphi 0, %s644
      %s646 = sphi 0, %s644
      %s647 = sphi 0, %s646
      %s661 = sphi 0, %s647
      %s665 = sphi 0, %s665
      %s667 = sphi 0, %s665
      %s668 = sphi 0, %s667
      %s682 = sphi 0, %s668
      %s686 = sphi 0, %s686
      %s688 = sphi 0, %s686
      %s689 = sphi 0, %s688
      %s703 = sphi 0, %s689
      %s707 = sphi 0, %s707
      %s709 = sphi 0, %s707
      %s710 = sphi 0, %s709
      %s724 = sphi 0, %s710
      %s728 = sphi 0, %s728
      %s730 = sphi 0, %s728
      %s731 = sphi 0, %s730
      %s745 = sphi 0, %s731
      %s749 = sphi 0, %s749
      %s751 = sphi 0, %s749
      %s752 = sphi 0, %s751
      %s766 = sphi 0, %s752
      %s770 = sphi 0, %s770
      %s772 = sphi 0, %s770
      %s773 = sphi 0, %s772
      %s787 = sphi 0, %s773
      %s791 = sphi 0, %s791
      %s793 = sphi 0, %s791
      %s794 = sphi 0, %s793
      %s808 = sphi 0, %s794
      %s812 = sphi 0, %s812
      %s814 = sphi 0, %s812
      %s815 = sphi 0, %s814
      %s829 = sphi 0, %s815
      %s835 = sphi 0, %s837
      %s838 = sphi 0, %s835
      %s839 = sphi 0, %s838
      %s855 = sphi 0, %s839
    $region4: #{paper_scoring_cnn_forward.1} parent=1 // loop_header_branch
      %88 = sbr.rel (%p86) target = $region8
    $region5: #{paper_scoring_cnn_forward.1} parent=1 // loop_body
      %s90 = ssub.s32 %s85, 1
      %s91 = ssub.s32 %s85, 2
      %s92 = sadd.s32 %s85, 1
      %s93 = ssub.s32 %s85, %s92
      %p94 = scmp.eq.s32.totalorder %s93, 0
      %s96 = sadd.s32 %s95, 1
      %s97 = scalar_select %p94, %s95, %s96
      %p100 = pneg %p94
      %p101 = scmp.eq.s32.totalorder %s85, 1
      %p102 = por %p100, %p101
      %p103 = scmp.ne.s32.totalorder %s95, %s98
      %p104 = scmp.eq.s32.totalorder %s85, 0
      %p105 = por %p103, %p104
      %p106 = scmp.ne.s32.totalorder %s95, %s98
      %p107 = scmp.eq.s32.totalorder %s90, 1
      %p108 = por %p106, %p107
      %p109 = scmp.ne.s32.totalorder %s98, %s99
      %p110 = scmp.eq.s32.totalorder %s90, 0
      %p111 = por %p109, %p110
      %p112 = scmp.ne.s32.totalorder %s98, %s99
      %p113 = scmp.eq.s32.totalorder %s91, 1
      %p114 = por %p112, %p113
      %p116 = scmp.ne.s32.totalorder %s99, %s115
      %p117 = scmp.eq.s32.totalorder %s91, 0
      %p118 = por %p116, %p117
      %s120 = sadd.s32 %s119, 1
      %p123 = scmp.eq.s32.totalorder %s85, 1
      %p124 = scmp.ne.s32.totalorder %s119, %s121
      %p125 = scmp.eq.s32.totalorder %s85, 0
      %p126 = por %p124, %p125
      %p127 = scmp.ne.s32.totalorder %s119, %s121
      %p128 = scmp.eq.s32.totalorder %s90, 1
      %p129 = por %p127, %p128
      %p130 = scmp.ne.s32.totalorder %s121, %s122
      %p131 = scmp.eq.s32.totalorder %s90, 0
      %p132 = por %p130, %p131
      %p133 = scmp.ne.s32.totalorder %s121, %s122
      %p134 = scmp.eq.s32.totalorder %s91, 1
      %p135 = por %p133, %p134
      %p137 = scmp.ne.s32.totalorder %s122, %s136
      %p138 = scmp.eq.s32.totalorder %s91, 0
      %p139 = por %p137, %p138
      %s141 = sadd.s32 %s140, 1
      %p144 = scmp.eq.s32.totalorder %s85, 1
      %p145 = scmp.ne.s32.totalorder %s140, %s142
      %p146 = scmp.eq.s32.totalorder %s85, 0
      %p147 = por %p145, %p146
      %p148 = scmp.ne.s32.totalorder %s140, %s142
      %p149 = scmp.eq.s32.totalorder %s90, 1
      %p150 = por %p148, %p149
      %p151 = scmp.ne.s32.totalorder %s142, %s143
      %p152 = scmp.eq.s32.totalorder %s90, 0
      %p153 = por %p151, %p152
      %p154 = scmp.ne.s32.totalorder %s142, %s143
      %p155 = scmp.eq.s32.totalorder %s91, 1
      %p156 = por %p154, %p155
      %p158 = scmp.ne.s32.totalorder %s143, %s157
      %p159 = scmp.eq.s32.totalorder %s91, 0
      %p160 = por %p158, %p159
      %s162 = sadd.s32 %s161, 1
      %p165 = scmp.eq.s32.totalorder %s85, 1
      %p166 = scmp.ne.s32.totalorder %s161, %s163
      %p167 = scmp.eq.s32.totalorder %s85, 0
      %p168 = por %p166, %p167
      %p169 = scmp.ne.s32.totalorder %s161, %s163
      %p170 = scmp.eq.s32.totalorder %s90, 1
      %p171 = por %p169, %p170
      %p172 = scmp.ne.s32.totalorder %s163, %s164
      %p173 = scmp.eq.s32.totalorder %s90, 0
      %p174 = por %p172, %p173
      %p175 = scmp.ne.s32.totalorder %s163, %s164
      %p176 = scmp.eq.s32.totalorder %s91, 1
      %p177 = por %p175, %p176
      %p179 = scmp.ne.s32.totalorder %s164, %s178
      %p180 = scmp.eq.s32.totalorder %s91, 0
      %p181 = por %p179, %p180
      %s183 = sadd.s32 %s182, 1
      %p186 = scmp.eq.s32.totalorder %s85, 1
      %p187 = scmp.ne.s32.totalorder %s182, %s184
      %p188 = scmp.eq.s32.totalorder %s85, 0
      %p189 = por %p187, %p188
      %p190 = scmp.ne.s32.totalorder %s182, %s184
      %p191 = scmp.eq.s32.totalorder %s90, 1
      %p192 = por %p190, %p191
      %p193 = scmp.ne.s32.totalorder %s184, %s185
      %p194 = scmp.eq.s32.totalorder %s90, 0
      %p195 = por %p193, %p194
      %p196 = scmp.ne.s32.totalorder %s184, %s185
      %p197 = scmp.eq.s32.totalorder %s91, 1
      %p198 = por %p196, %p197
      %p200 = scmp.ne.s32.totalorder %s185, %s199
      %p201 = scmp.eq.s32.totalorder %s91, 0
      %p202 = por %p200, %p201
      %s204 = sadd.s32 %s203, 1
      %p207 = scmp.eq.s32.totalorder %s85, 1
      %p208 = scmp.ne.s32.totalorder %s203, %s205
      %p209 = scmp.eq.s32.totalorder %s85, 0
      %p210 = por %p208, %p209
      %p211 = scmp.ne.s32.totalorder %s203, %s205
      %p212 = scmp.eq.s32.totalorder %s90, 1
      %p213 = por %p211, %p212
      %p214 = scmp.ne.s32.totalorder %s205, %s206
      %p215 = scmp.eq.s32.totalorder %s90, 0
      %p216 = por %p214, %p215
      %p217 = scmp.ne.s32.totalorder %s205, %s206
      %p218 = scmp.eq.s32.totalorder %s91, 1
      %p219 = por %p217, %p218
      %p221 = scmp.ne.s32.totalorder %s206, %s220
      %p222 = scmp.eq.s32.totalorder %s91, 0
      %p223 = por %p221, %p222
      %s225 = sadd.s32 %s224, 1
      %p228 = scmp.eq.s32.totalorder %s85, 1
      %p229 = scmp.ne.s32.totalorder %s224, %s226
      %p230 = scmp.eq.s32.totalorder %s85, 0
      %p231 = por %p229, %p230
      %p232 = scmp.ne.s32.totalorder %s224, %s226
      %p233 = scmp.eq.s32.totalorder %s90, 1
      %p234 = por %p232, %p233
      %p235 = scmp.ne.s32.totalorder %s226, %s227
      %p236 = scmp.eq.s32.totalorder %s90, 0
      %p237 = por %p235, %p236
      %p238 = scmp.ne.s32.totalorder %s226, %s227
      %p239 = scmp.eq.s32.totalorder %s91, 1
      %p240 = por %p238, %p239
      %p242 = scmp.ne.s32.totalorder %s227, %s241
      %p243 = scmp.eq.s32.totalorder %s91, 0
      %p244 = por %p242, %p243
      %s246 = sadd.s32 %s245, 1
      %p249 = scmp.eq.s32.totalorder %s85, 1
      %p250 = scmp.ne.s32.totalorder %s245, %s247
      %p251 = scmp.eq.s32.totalorder %s85, 0
      %p252 = por %p250, %p251
      %p253 = scmp.ne.s32.totalorder %s245, %s247
      %p254 = scmp.eq.s32.totalorder %s90, 1
      %p255 = por %p253, %p254
      %p256 = scmp.ne.s32.totalorder %s247, %s248
      %p257 = scmp.eq.s32.totalorder %s90, 0
      %p258 = por %p256, %p257
      %p259 = scmp.ne.s32.totalorder %s247, %s248
      %p260 = scmp.eq.s32.totalorder %s91, 1
      %p261 = por %p259, %p260
      %p263 = scmp.ne.s32.totalorder %s248, %s262
      %p264 = scmp.eq.s32.totalorder %s91, 0
      %p265 = por %p263, %p264
      %s267 = sadd.s32 %s266, 1
      %p270 = scmp.eq.s32.totalorder %s85, 1
      %p271 = scmp.ne.s32.totalorder %s266, %s268
      %p272 = scmp.eq.s32.totalorder %s85, 0
      %p273 = por %p271, %p272
      %p274 = scmp.ne.s32.totalorder %s266, %s268
      %p275 = scmp.eq.s32.totalorder %s90, 1
      %p276 = por %p274, %p275
      %p277 = scmp.ne.s32.totalorder %s268, %s269
      %p278 = scmp.eq.s32.totalorder %s90, 0
      %p279 = por %p277, %p278
      %p280 = scmp.ne.s32.totalorder %s268, %s269
      %p281 = scmp.eq.s32.totalorder %s91, 1
      %p282 = por %p280, %p281
      %p284 = scmp.ne.s32.totalorder %s269, %s283
      %p285 = scmp.eq.s32.totalorder %s91, 0
      %p286 = por %p284, %p285
      %s288 = sadd.s32 %s287, 1
      %p291 = scmp.eq.s32.totalorder %s85, 1
      %p292 = scmp.ne.s32.totalorder %s287, %s289
      %p293 = scmp.eq.s32.totalorder %s85, 0
      %p294 = por %p292, %p293
      %p295 = scmp.ne.s32.totalorder %s287, %s289
      %p296 = scmp.eq.s32.totalorder %s90, 1
      %p297 = por %p295, %p296
      %p298 = scmp.ne.s32.totalorder %s289, %s290
      %p299 = scmp.eq.s32.totalorder %s90, 0
      %p300 = por %p298, %p299
      %p301 = scmp.ne.s32.totalorder %s289, %s290
      %p302 = scmp.eq.s32.totalorder %s91, 1
      %p303 = por %p301, %p302
      %p305 = scmp.ne.s32.totalorder %s290, %s304
      %p306 = scmp.eq.s32.totalorder %s91, 0
      %p307 = por %p305, %p306
      %s309 = sadd.s32 %s308, 1
      %p312 = scmp.eq.s32.totalorder %s85, 1
      %p313 = scmp.ne.s32.totalorder %s308, %s310
      %p314 = scmp.eq.s32.totalorder %s85, 0
      %p315 = por %p313, %p314
      %p316 = scmp.ne.s32.totalorder %s308, %s310
      %p317 = scmp.eq.s32.totalorder %s90, 1
      %p318 = por %p316, %p317
      %p319 = scmp.ne.s32.totalorder %s310, %s311
      %p320 = scmp.eq.s32.totalorder %s90, 0
      %p321 = por %p319, %p320
      %p322 = scmp.ne.s32.totalorder %s310, %s311
      %p323 = scmp.eq.s32.totalorder %s91, 1
      %p324 = por %p322, %p323
      %p326 = scmp.ne.s32.totalorder %s311, %s325
      %p327 = scmp.eq.s32.totalorder %s91, 0
      %p328 = por %p326, %p327
      %s330 = sadd.s32 %s329, 1
      %p333 = scmp.eq.s32.totalorder %s85, 1
      %p334 = scmp.ne.s32.totalorder %s329, %s331
      %p335 = scmp.eq.s32.totalorder %s85, 0
      %p336 = por %p334, %p335
      %p337 = scmp.ne.s32.totalorder %s329, %s331
      %p338 = scmp.eq.s32.totalorder %s90, 1
      %p339 = por %p337, %p338
      %p340 = scmp.ne.s32.totalorder %s331, %s332
      %p341 = scmp.eq.s32.totalorder %s90, 0
      %p342 = por %p340, %p341
      %p343 = scmp.ne.s32.totalorder %s331, %s332
      %p344 = scmp.eq.s32.totalorder %s91, 1
      %p345 = por %p343, %p344
      %p347 = scmp.ne.s32.totalorder %s332, %s346
      %p348 = scmp.eq.s32.totalorder %s91, 0
      %p349 = por %p347, %p348
      %s351 = sadd.s32 %s350, 1
      %p354 = scmp.eq.s32.totalorder %s85, 1
      %p355 = scmp.ne.s32.totalorder %s350, %s352
      %p356 = scmp.eq.s32.totalorder %s85, 0
      %p357 = por %p355, %p356
      %p358 = scmp.ne.s32.totalorder %s350, %s352
      %p359 = scmp.eq.s32.totalorder %s90, 1
      %p360 = por %p358, %p359
      %p361 = scmp.ne.s32.totalorder %s352, %s353
      %p362 = scmp.eq.s32.totalorder %s90, 0
      %p363 = por %p361, %p362
      %p364 = scmp.ne.s32.totalorder %s352, %s353
      %p365 = scmp.eq.s32.totalorder %s91, 1
      %p366 = por %p364, %p365
      %p368 = scmp.ne.s32.totalorder %s353, %s367
      %p369 = scmp.eq.s32.totalorder %s91, 0
      %p370 = por %p368, %p369
      %s372 = sadd.s32 %s371, 1
      %p375 = scmp.eq.s32.totalorder %s85, 1
      %p376 = scmp.ne.s32.totalorder %s371, %s373
      %p377 = scmp.eq.s32.totalorder %s85, 0
      %p378 = por %p376, %p377
      %p379 = scmp.ne.s32.totalorder %s371, %s373
      %p380 = scmp.eq.s32.totalorder %s90, 1
      %p381 = por %p379, %p380
      %p382 = scmp.ne.s32.totalorder %s373, %s374
      %p383 = scmp.eq.s32.totalorder %s90, 0
      %p384 = por %p382, %p383
      %p385 = scmp.ne.s32.totalorder %s373, %s374
      %p386 = scmp.eq.s32.totalorder %s91, 1
      %p387 = por %p385, %p386
      %p389 = scmp.ne.s32.totalorder %s374, %s388
      %p390 = scmp.eq.s32.totalorder %s91, 0
      %p391 = por %p389, %p390
      %s393 = sadd.s32 %s392, 1
      %p396 = scmp.eq.s32.totalorder %s85, 1
      %p397 = scmp.ne.s32.totalorder %s392, %s394
      %p398 = scmp.eq.s32.totalorder %s85, 0
      %p399 = por %p397, %p398
      %p400 = scmp.ne.s32.totalorder %s392, %s394
      %p401 = scmp.eq.s32.totalorder %s90, 1
      %p402 = por %p400, %p401
      %p403 = scmp.ne.s32.totalorder %s394, %s395
      %p404 = scmp.eq.s32.totalorder %s90, 0
      %p405 = por %p403, %p404
      %p406 = scmp.ne.s32.totalorder %s394, %s395
      %p407 = scmp.eq.s32.totalorder %s91, 1
      %p408 = por %p406, %p407
      %p410 = scmp.ne.s32.totalorder %s395, %s409
      %p411 = scmp.eq.s32.totalorder %s91, 0
      %p412 = por %p410, %p411
      %s414 = sadd.s32 %s413, 1
      %p417 = scmp.eq.s32.totalorder %s85, 1
      %p418 = scmp.ne.s32.totalorder %s413, %s415
      %p419 = scmp.eq.s32.totalorder %s85, 0
      %p420 = por %p418, %p419
      %p421 = scmp.ne.s32.totalorder %s413, %s415
      %p422 = scmp.eq.s32.totalorder %s90, 1
      %p423 = por %p421, %p422
      %p424 = scmp.ne.s32.totalorder %s415, %s416
      %p425 = scmp.eq.s32.totalorder %s90, 0
      %p426 = por %p424, %p425
      %p427 = scmp.ne.s32.totalorder %s415, %s416
      %p428 = scmp.eq.s32.totalorder %s91, 1
      %p429 = por %p427, %p428
      %p431 = scmp.ne.s32.totalorder %s416, %s430
      %p432 = scmp.eq.s32.totalorder %s91, 0
      %p433 = por %p431, %p432
      %s435 = sadd.s32 %s434, 1
      %p438 = scmp.eq.s32.totalorder %s85, 1
      %p439 = scmp.ne.s32.totalorder %s434, %s436
      %p440 = scmp.eq.s32.totalorder %s85, 0
      %p441 = por %p439, %p440
      %p442 = scmp.ne.s32.totalorder %s434, %s436
      %p443 = scmp.eq.s32.totalorder %s90, 1
      %p444 = por %p442, %p443
      %p445 = scmp.ne.s32.totalorder %s436, %s437
      %p446 = scmp.eq.s32.totalorder %s90, 0
      %p447 = por %p445, %p446
      %p448 = scmp.ne.s32.totalorder %s436, %s437
      %p449 = scmp.eq.s32.totalorder %s91, 1
      %p450 = por %p448, %p449
      %p452 = scmp.ne.s32.totalorder %s437, %s451
      %p453 = scmp.eq.s32.totalorder %s91, 0
      %p454 = por %p452, %p453
      %s456 = sadd.s32 %s455, 1
      %p459 = scmp.eq.s32.totalorder %s85, 1
      %p460 = scmp.ne.s32.totalorder %s455, %s457
      %p461 = scmp.eq.s32.totalorder %s85, 0
      %p462 = por %p460, %p461
      %p463 = scmp.ne.s32.totalorder %s455, %s457
      %p464 = scmp.eq.s32.totalorder %s90, 1
      %p465 = por %p463, %p464
      %p466 = scmp.ne.s32.totalorder %s457, %s458
      %p467 = scmp.eq.s32.totalorder %s90, 0
      %p468 = por %p466, %p467
      %p469 = scmp.ne.s32.totalorder %s457, %s458
      %p470 = scmp.eq.s32.totalorder %s91, 1
      %p471 = por %p469, %p470
      %p473 = scmp.ne.s32.totalorder %s458, %s472
      %p474 = scmp.eq.s32.totalorder %s91, 0
      %p475 = por %p473, %p474
      %s477 = sadd.s32 %s476, 1
      %p480 = scmp.eq.s32.totalorder %s85, 1
      %p481 = scmp.ne.s32.totalorder %s476, %s478
      %p482 = scmp.eq.s32.totalorder %s85, 0
      %p483 = por %p481, %p482
      %p484 = scmp.ne.s32.totalorder %s476, %s478
      %p485 = scmp.eq.s32.totalorder %s90, 1
      %p486 = por %p484, %p485
      %p487 = scmp.ne.s32.totalorder %s478, %s479
      %p488 = scmp.eq.s32.totalorder %s90, 0
      %p489 = por %p487, %p488
      %p490 = scmp.ne.s32.totalorder %s478, %s479
      %p491 = scmp.eq.s32.totalorder %s91, 1
      %p492 = por %p490, %p491
      %p494 = scmp.ne.s32.totalorder %s479, %s493
      %p495 = scmp.eq.s32.totalorder %s91, 0
      %p496 = por %p494, %p495
      %s498 = sadd.s32 %s497, 1
      %p501 = scmp.eq.s32.totalorder %s85, 1
      %p502 = scmp.ne.s32.totalorder %s497, %s499
      %p503 = scmp.eq.s32.totalorder %s85, 0
      %p504 = por %p502, %p503
      %p505 = scmp.ne.s32.totalorder %s497, %s499
      %p506 = scmp.eq.s32.totalorder %s90, 1
      %p507 = por %p505, %p506
      %p508 = scmp.ne.s32.totalorder %s499, %s500
      %p509 = scmp.eq.s32.totalorder %s90, 0
      %p510 = por %p508, %p509
      %p511 = scmp.ne.s32.totalorder %s499, %s500
      %p512 = scmp.eq.s32.totalorder %s91, 1
      %p513 = por %p511, %p512
      %p515 = scmp.ne.s32.totalorder %s500, %s514
      %p516 = scmp.eq.s32.totalorder %s91, 0
      %p517 = por %p515, %p516
      %s519 = sadd.s32 %s518, 1
      %p522 = scmp.eq.s32.totalorder %s85, 1
      %p523 = scmp.ne.s32.totalorder %s518, %s520
      %p524 = scmp.eq.s32.totalorder %s85, 0
      %p525 = por %p523, %p524
      %p526 = scmp.ne.s32.totalorder %s518, %s520
      %p527 = scmp.eq.s32.totalorder %s90, 1
      %p528 = por %p526, %p527
      %p529 = scmp.ne.s32.totalorder %s520, %s521
      %p530 = scmp.eq.s32.totalorder %s90, 0
      %p531 = por %p529, %p530
      %p532 = scmp.ne.s32.totalorder %s520, %s521
      %p533 = scmp.eq.s32.totalorder %s91, 1
      %p534 = por %p532, %p533
      %p536 = scmp.ne.s32.totalorder %s521, %s535
      %p537 = scmp.eq.s32.totalorder %s91, 0
      %p538 = por %p536, %p537
      %s540 = sadd.s32 %s539, 1
      %p543 = scmp.eq.s32.totalorder %s85, 1
      %p544 = scmp.ne.s32.totalorder %s539, %s541
      %p545 = scmp.eq.s32.totalorder %s85, 0
      %p546 = por %p544, %p545
      %p547 = scmp.ne.s32.totalorder %s539, %s541
      %p548 = scmp.eq.s32.totalorder %s90, 1
      %p549 = por %p547, %p548
      %p550 = scmp.ne.s32.totalorder %s541, %s542
      %p551 = scmp.eq.s32.totalorder %s90, 0
      %p552 = por %p550, %p551
      %p553 = scmp.ne.s32.totalorder %s541, %s542
      %p554 = scmp.eq.s32.totalorder %s91, 1
      %p555 = por %p553, %p554
      %p557 = scmp.ne.s32.totalorder %s542, %s556
      %p558 = scmp.eq.s32.totalorder %s91, 0
      %p559 = por %p557, %p558
      %s561 = sadd.s32 %s560, 1
      %p564 = scmp.eq.s32.totalorder %s85, 1
      %p565 = scmp.ne.s32.totalorder %s560, %s562
      %p566 = scmp.eq.s32.totalorder %s85, 0
      %p567 = por %p565, %p566
      %p568 = scmp.ne.s32.totalorder %s560, %s562
      %p569 = scmp.eq.s32.totalorder %s90, 1
      %p570 = por %p568, %p569
      %p571 = scmp.ne.s32.totalorder %s562, %s563
      %p572 = scmp.eq.s32.totalorder %s90, 0
      %p573 = por %p571, %p572
      %p574 = scmp.ne.s32.totalorder %s562, %s563
      %p575 = scmp.eq.s32.totalorder %s91, 1
      %p576 = por %p574, %p575
      %p578 = scmp.ne.s32.totalorder %s563, %s577
      %p579 = scmp.eq.s32.totalorder %s91, 0
      %p580 = por %p578, %p579
      %s582 = sadd.s32 %s581, 1
      %p585 = scmp.eq.s32.totalorder %s85, 1
      %p586 = scmp.ne.s32.totalorder %s581, %s583
      %p587 = scmp.eq.s32.totalorder %s85, 0
      %p588 = por %p586, %p587
      %p589 = scmp.ne.s32.totalorder %s581, %s583
      %p590 = scmp.eq.s32.totalorder %s90, 1
      %p591 = por %p589, %p590
      %p592 = scmp.ne.s32.totalorder %s583, %s584
      %p593 = scmp.eq.s32.totalorder %s90, 0
      %p594 = por %p592, %p593
      %p595 = scmp.ne.s32.totalorder %s583, %s584
      %p596 = scmp.eq.s32.totalorder %s91, 1
      %p597 = por %p595, %p596
      %p599 = scmp.ne.s32.totalorder %s584, %s598
      %p600 = scmp.eq.s32.totalorder %s91, 0
      %p601 = por %p599, %p600
      %s603 = sadd.s32 %s602, 1
      %p606 = scmp.eq.s32.totalorder %s85, 1
      %p607 = scmp.ne.s32.totalorder %s602, %s604
      %p608 = scmp.eq.s32.totalorder %s85, 0
      %p609 = por %p607, %p608
      %p610 = scmp.ne.s32.totalorder %s602, %s604
      %p611 = scmp.eq.s32.totalorder %s90, 1
      %p612 = por %p610, %p611
      %p613 = scmp.ne.s32.totalorder %s604, %s605
      %p614 = scmp.eq.s32.totalorder %s90, 0
      %p615 = por %p613, %p614
      %p616 = scmp.ne.s32.totalorder %s604, %s605
      %p617 = scmp.eq.s32.totalorder %s91, 1
      %p618 = por %p616, %p617
      %p620 = scmp.ne.s32.totalorder %s605, %s619
      %p621 = scmp.eq.s32.totalorder %s91, 0
      %p622 = por %p620, %p621
      %s624 = sadd.s32 %s623, 1
      %p627 = scmp.eq.s32.totalorder %s85, 1
      %p628 = scmp.ne.s32.totalorder %s623, %s625
      %p629 = scmp.eq.s32.totalorder %s85, 0
      %p630 = por %p628, %p629
      %p631 = scmp.ne.s32.totalorder %s623, %s625
      %p632 = scmp.eq.s32.totalorder %s90, 1
      %p633 = por %p631, %p632
      %p634 = scmp.ne.s32.totalorder %s625, %s626
      %p635 = scmp.eq.s32.totalorder %s90, 0
      %p636 = por %p634, %p635
      %p637 = scmp.ne.s32.totalorder %s625, %s626
      %p638 = scmp.eq.s32.totalorder %s91, 1
      %p639 = por %p637, %p638
      %p641 = scmp.ne.s32.totalorder %s626, %s640
      %p642 = scmp.eq.s32.totalorder %s91, 0
      %p643 = por %p641, %p642
      %s645 = sadd.s32 %s644, 1
      %p648 = scmp.eq.s32.totalorder %s85, 1
      %p649 = scmp.ne.s32.totalorder %s644, %s646
      %p650 = scmp.eq.s32.totalorder %s85, 0
      %p651 = por %p649, %p650
      %p652 = scmp.ne.s32.totalorder %s644, %s646
      %p653 = scmp.eq.s32.totalorder %s90, 1
      %p654 = por %p652, %p653
      %p655 = scmp.ne.s32.totalorder %s646, %s647
      %p656 = scmp.eq.s32.totalorder %s90, 0
      %p657 = por %p655, %p656
      %p658 = scmp.ne.s32.totalorder %s646, %s647
      %p659 = scmp.eq.s32.totalorder %s91, 1
      %p660 = por %p658, %p659
      %p662 = scmp.ne.s32.totalorder %s647, %s661
      %p663 = scmp.eq.s32.totalorder %s91, 0
      %p664 = por %p662, %p663
      %s666 = sadd.s32 %s665, 1
      %p669 = scmp.eq.s32.totalorder %s85, 1
      %p670 = scmp.ne.s32.totalorder %s665, %s667
      %p671 = scmp.eq.s32.totalorder %s85, 0
      %p672 = por %p670, %p671
      %p673 = scmp.ne.s32.totalorder %s665, %s667
      %p674 = scmp.eq.s32.totalorder %s90, 1
      %p675 = por %p673, %p674
      %p676 = scmp.ne.s32.totalorder %s667, %s668
      %p677 = scmp.eq.s32.totalorder %s90, 0
      %p678 = por %p676, %p677
      %p679 = scmp.ne.s32.totalorder %s667, %s668
      %p680 = scmp.eq.s32.totalorder %s91, 1
      %p681 = por %p679, %p680
      %p683 = scmp.ne.s32.totalorder %s668, %s682
      %p684 = scmp.eq.s32.totalorder %s91, 0
      %p685 = por %p683, %p684
      %s687 = sadd.s32 %s686, 1
      %p690 = scmp.eq.s32.totalorder %s85, 1
      %p691 = scmp.ne.s32.totalorder %s686, %s688
      %p692 = scmp.eq.s32.totalorder %s85, 0
      %p693 = por %p691, %p692
      %p694 = scmp.ne.s32.totalorder %s686, %s688
      %p695 = scmp.eq.s32.totalorder %s90, 1
      %p696 = por %p694, %p695
      %p697 = scmp.ne.s32.totalorder %s688, %s689
      %p698 = scmp.eq.s32.totalorder %s90, 0
      %p699 = por %p697, %p698
      %p700 = scmp.ne.s32.totalorder %s688, %s689
      %p701 = scmp.eq.s32.totalorder %s91, 1
      %p702 = por %p700, %p701
      %p704 = scmp.ne.s32.totalorder %s689, %s703
      %p705 = scmp.eq.s32.totalorder %s91, 0
      %p706 = por %p704, %p705
      %s708 = sadd.s32 %s707, 1
      %p711 = scmp.eq.s32.totalorder %s85, 1
      %p712 = scmp.ne.s32.totalorder %s707, %s709
      %p713 = scmp.eq.s32.totalorder %s85, 0
      %p714 = por %p712, %p713
      %p715 = scmp.ne.s32.totalorder %s707, %s709
      %p716 = scmp.eq.s32.totalorder %s90, 1
      %p717 = por %p715, %p716
      %p718 = scmp.ne.s32.totalorder %s709, %s710
      %p719 = scmp.eq.s32.totalorder %s90, 0
      %p720 = por %p718, %p719
      %p721 = scmp.ne.s32.totalorder %s709, %s710
      %p722 = scmp.eq.s32.totalorder %s91, 1
      %p723 = por %p721, %p722
      %p725 = scmp.ne.s32.totalorder %s710, %s724
      %p726 = scmp.eq.s32.totalorder %s91, 0
      %p727 = por %p725, %p726
      %s729 = sadd.s32 %s728, 1
      %p732 = scmp.eq.s32.totalorder %s85, 1
      %p733 = scmp.ne.s32.totalorder %s728, %s730
      %p734 = scmp.eq.s32.totalorder %s85, 0
      %p735 = por %p733, %p734
      %p736 = scmp.ne.s32.totalorder %s728, %s730
      %p737 = scmp.eq.s32.totalorder %s90, 1
      %p738 = por %p736, %p737
      %p739 = scmp.ne.s32.totalorder %s730, %s731
      %p740 = scmp.eq.s32.totalorder %s90, 0
      %p741 = por %p739, %p740
      %p742 = scmp.ne.s32.totalorder %s730, %s731
      %p743 = scmp.eq.s32.totalorder %s91, 1
      %p744 = por %p742, %p743
      %p746 = scmp.ne.s32.totalorder %s731, %s745
      %p747 = scmp.eq.s32.totalorder %s91, 0
      %p748 = por %p746, %p747
      %s750 = sadd.s32 %s749, 1
      %p753 = scmp.eq.s32.totalorder %s85, 1
      %p754 = scmp.ne.s32.totalorder %s749, %s751
      %p755 = scmp.eq.s32.totalorder %s85, 0
      %p756 = por %p754, %p755
      %p757 = scmp.ne.s32.totalorder %s749, %s751
      %p758 = scmp.eq.s32.totalorder %s90, 1
      %p759 = por %p757, %p758
      %p760 = scmp.ne.s32.totalorder %s751, %s752
      %p761 = scmp.eq.s32.totalorder %s90, 0
      %p762 = por %p760, %p761
      %p763 = scmp.ne.s32.totalorder %s751, %s752
      %p764 = scmp.eq.s32.totalorder %s91, 1
      %p765 = por %p763, %p764
      %p767 = scmp.ne.s32.totalorder %s752, %s766
      %p768 = scmp.eq.s32.totalorder %s91, 0
      %p769 = por %p767, %p768
      %s771 = sadd.s32 %s770, 1
      %p774 = scmp.eq.s32.totalorder %s85, 1
      %p775 = scmp.ne.s32.totalorder %s770, %s772
      %p776 = scmp.eq.s32.totalorder %s85, 0
      %p777 = por %p775, %p776
      %p778 = scmp.ne.s32.totalorder %s770, %s772
      %p779 = scmp.eq.s32.totalorder %s90, 1
      %p780 = por %p778, %p779
      %p781 = scmp.ne.s32.totalorder %s772, %s773
      %p782 = scmp.eq.s32.totalorder %s90, 0
      %p783 = por %p781, %p782
      %p784 = scmp.ne.s32.totalorder %s772, %s773
      %p785 = scmp.eq.s32.totalorder %s91, 1
      %p786 = por %p784, %p785
      %p788 = scmp.ne.s32.totalorder %s773, %s787
      %p789 = scmp.eq.s32.totalorder %s91, 0
      %p790 = por %p788, %p789
      %s792 = sadd.s32 %s791, 1
      %p795 = scmp.eq.s32.totalorder %s85, 1
      %p796 = scmp.ne.s32.totalorder %s791, %s793
      %p797 = scmp.eq.s32.totalorder %s85, 0
      %p798 = por %p796, %p797
      %p799 = scmp.ne.s32.totalorder %s791, %s793
      %p800 = scmp.eq.s32.totalorder %s90, 1
      %p801 = por %p799, %p800
      %p802 = scmp.ne.s32.totalorder %s793, %s794
      %p803 = scmp.eq.s32.totalorder %s90, 0
      %p804 = por %p802, %p803
      %p805 = scmp.ne.s32.totalorder %s793, %s794
      %p806 = scmp.eq.s32.totalorder %s91, 1
      %p807 = por %p805, %p806
      %p809 = scmp.ne.s32.totalorder %s794, %s808
      %p810 = scmp.eq.s32.totalorder %s91, 0
      %p811 = por %p809, %p810
      %s813 = sadd.s32 %s812, 1
      %p816 = scmp.eq.s32.totalorder %s85, 1
      %p817 = scmp.ne.s32.totalorder %s812, %s814
      %p818 = scmp.eq.s32.totalorder %s85, 0
      %p819 = por %p817, %p818
      %p820 = scmp.ne.s32.totalorder %s812, %s814
      %p821 = scmp.eq.s32.totalorder %s90, 1
      %p822 = por %p820, %p821
      %p823 = scmp.ne.s32.totalorder %s814, %s815
      %p824 = scmp.eq.s32.totalorder %s90, 0
      %p825 = por %p823, %p824
      %p826 = scmp.ne.s32.totalorder %s814, %s815
      %p827 = scmp.eq.s32.totalorder %s91, 1
      %p828 = por %p826, %p827
      %p830 = scmp.ne.s32.totalorder %s815, %s829
      %p831 = scmp.eq.s32.totalorder %s91, 0
      %p832 = por %p830, %p831
      %s833 = ssub.s32 %s85, %s92
      %p834 = scmp.eq.s32.totalorder %s833, 0
      %s836 = sadd.s32 %s835, 1
      %s837 = scalar_select %p834, %s835, %s836
      %p840 = pneg %p834
      %p841 = scmp.eq.s32.totalorder %s85, 1
      %p842 = por %p840, %p841
      %p843 = scmp.ne.s32.totalorder %s835, %s838
      %p844 = scmp.eq.s32.totalorder %s85, 0
      %p845 = por %p843, %p844
      %p846 = scmp.ne.s32.totalorder %s835, %s838
      %p847 = scmp.eq.s32.totalorder %s90, 1
      %p848 = por %p846, %p847
      %p849 = scmp.ne.s32.totalorder %s838, %s839
      %p850 = scmp.eq.s32.totalorder %s90, 0
      %p851 = por %p849, %p850
      %p852 = scmp.ne.s32.totalorder %s838, %s839
      %p853 = scmp.eq.s32.totalorder %s91, 1
      %p854 = por %p852, %p853
      %p856 = scmp.ne.s32.totalorder %s839, %s855
      %p857 = scmp.eq.s32.totalorder %s91, 0
      %p858 = por %p856, %p857
      %p859 = scmp.le.s32.totalorder 1, %s85
      %p860 = scmp.lt.s32.totalorder %s85, 3
      %p861 = pnand %p859, %p860
      %p862 = pneg %p861
      // Predicated region
      $region9: #{paper_scoring_cnn_forward.1} parent=5 // pred_check
        _
      $region10: #{paper_scoring_cnn_forward.1} parent=5 // pred_check_branch
        %864 = sbr.rel (%p861) target = $region12
      $region11: #{paper_scoring_cnn_forward.1} parent=5 // pred_region
        %s865 = ssub.s32 %s85, 1
        // Predicated region
        $region13: #{paper_scoring_cnn_forward.1} parent=11 // pred_check
          %p866 = pneg %p132
        $region14: #{paper_scoring_cnn_forward.1} parent=11 // pred_check_branch
          %868 = sbr.rel (%p866) target = $region16
        $region15: #{paper_scoring_cnn_forward.1} parent=11 // pred_region
          %s870 = ssub.s32 16, 16
          %871 = vsyncadd [#allocation9], %s870
          %s873 = sshll.u32 [#allocation8], 4
          %s874 = int_to_ptr.vmem [resolvable:$true] %s873
          %876 = dma.hbm_to_vmem [thread:$0]  %s3, 16, %s874, [#allocation9]
        $region16: #{paper_scoring_cnn_forward.1} parent=11 // pred_fallthru
          _
        // Predicated region
        $region17: #{paper_scoring_cnn_forward.1} parent=11 // pred_check
          %p877 = pneg %p153
        $region18: #{paper_scoring_cnn_forward.1} parent=11 // pred_check_branch
          %879 = sbr.rel (%p877) target = $region20
        $region19: #{paper_scoring_cnn_forward.1} parent=11 // pred_region
          %s881 = ssub.s32 16, 16
          %882 = vsyncadd [#allocation11], %s881
          %s884 = sshll.u32 [#allocation10], 4
          %s885 = int_to_ptr.vmem [resolvable:$true] %s884
          %887 = dma.hbm_to_vmem [thread:$0]  %s5, 16, %s885, [#allocation11]
        $region20: #{paper_scoring_cnn_forward.1} parent=11 // pred_fallthru
          _
        // Predicated region
        $region21: #{paper_scoring_cnn_forward.1} parent=11 // pred_check
          %p888 = pneg %p174
        $region22: #{paper_scoring_cnn_forward.1} parent=11 // pred_check_branch
          %890 = sbr.rel (%p888) target = $region24
        $region23: #{paper_scoring_cnn_forward.1} parent=11 // pred_region
          %s892 = ssub.s32 16, 16
          %893 = vsyncadd [#allocation11], %s892
          %s895 = sshll.u32 [#allocation12], 4
          %s896 = int_to_ptr.vmem [resolvable:$true] %s895
          %898 = dma.hbm_to_vmem [thread:$0]  %s7, 16, %s896, [#allocation11]
        $region24: #{paper_scoring_cnn_forward.1} parent=11 // pred_fallthru
          _
        // Predicated region
        $region25: #{paper_scoring_cnn_forward.1} parent=11 // pred_check
          %p899 = pneg %p195
        $region26: #{paper_scoring_cnn_forward.1} parent=11 // pred_check_branch
          %901 = sbr.rel (%p899) target = $region28
        $region27: #{paper_scoring_cnn_forward.1} parent=11 // pred_region
          %s903 = ssub.s32 16, 16
          %904 = vsyncadd [#allocation14], %s903
          %s906 = sshll.u32 [#allocation13], 4
          %s907 = int_to_ptr.vmem [resolvable:$true] %s906
          %909 = dma.hbm_to_vmem [thread:$0]  %s9, 16, %s907, [#allocation14]
        $region28: #{paper_scoring_cnn_forward.1} parent=11 // pred_fallthru
          _
        // Predicated region
        $region29: #{paper_scoring_cnn_forward.1} parent=11 // pred_check
          %p910 = pneg %p216
        $region30: #{paper_scoring_cnn_forward.1} parent=11 // pred_check_branch
          %912 = sbr.rel (%p910) target = $region32
        $region31: #{paper_scoring_cnn_forward.1} parent=11 // pred_region
          %s914 = ssub.s32 128, 128
          %915 = vsyncadd [#allocation14], %s914
          %s916 = sshll.u32 [#allocation15], 4
          %s917 = int_to_ptr.vmem [resolvable:$true] %s916
          %922 = dma.hbm_to_vmem [thread:$0]  %s11, 128, %s917, [#allocation14], 64, 64, 4
        $region32: #{paper_scoring_cnn_forward.1} parent=11 // pred_fallthru
          _
        // Predicated region
        $region33: #{paper_scoring_cnn_forward.1} parent=11 // pred_check
          %p923 = pneg %p237
        $region34: #{paper_scoring_cnn_forward.1} parent=11 // pred_check_branch
          %925 = sbr.rel (%p923) target = $region36
        $region35: #{paper_scoring_cnn_forward.1} parent=11 // pred_region
          %s927 = ssub.s32 128, 128
          %928 = vsyncadd [#allocation17], %s927
          %s929 = sshll.u32 [#allocation16], 4
          %s930 = int_to_ptr.vmem [resolvable:$true] %s929
          %935 = dma.hbm_to_vmem [thread:$0]  %s13, 128, %s930, [#allocation17], 64, 64, 4
        $region36: #{paper_scoring_cnn_forward.1} parent=11 // pred_fallthru
          _
        // Predicated region
        $region37: #{paper_scoring_cnn_forward.1} parent=11 // pred_check
          %p936 = pneg %p258
        $region38: #{paper_scoring_cnn_forward.1} parent=11 // pred_check_branch
          %938 = sbr.rel (%p936) target = $region40
        $region39: #{paper_scoring_cnn_forward.1} parent=11 // pred_region
          %s940 = ssub.s32 128, 128
          %941 = vsyncadd [#allocation17], %s940
          %s942 = sshll.u32 [#allocation18], 4
          %s943 = int_to_ptr.vmem [resolvable:$true] %s942
          %948 = dma.hbm_to_vmem [thread:$0]  %s15, 128, %s943, [#allocation17], 64, 64, 4
        $region40: #{paper_scoring_cnn_forward.1} parent=11 // pred_fallthru
          _
        // Predicated region
        $region41: #{paper_scoring_cnn_forward.1} parent=11 // pred_check
          %p949 = pneg %p279
        $region42: #{paper_scoring_cnn_forward.1} parent=11 // pred_check_branch
          %951 = sbr.rel (%p949) target = $region44
        $region43: #{paper_scoring_cnn_forward.1} parent=11 // pred_region
          %s953 = ssub.s32 16, 16
          %954 = vsyncadd [#allocation20], %s953
          %s956 = sshll.u32 [#allocation19], 4
          %s957 = int_to_ptr.vmem [resolvable:$true] %s956
          %959 = dma.hbm_to_vmem [thread:$0]  %s17, 16, %s957, [#allocation20]
        $region44: #{paper_scoring_cnn_forward.1} parent=11 // pred_fallthru
          _
        // Predicated region
        $region45: #{paper_scoring_cnn_forward.1} parent=11 // pred_check
          %p960 = pneg %p300
        $region46: #{paper_scoring_cnn_forward.1} parent=11 // pred_check_branch
          %962 = sbr.rel (%p960) target = $region48
        $region47: #{paper_scoring_cnn_forward.1} parent=11 // pred_region
          _
        $region48: #{paper_scoring_cnn_forward.1} parent=11 // pred_fallthru
          _
        // Predicated region
        $region49: #{paper_scoring_cnn_forward.1} parent=11 // pred_check
          %p963 = pneg %p321
        $region50: #{paper_scoring_cnn_forward.1} parent=11 // pred_check_branch
          %965 = sbr.rel (%p963) target = $region52
        $region51: #{paper_scoring_cnn_forward.1} parent=11 // pred_region
          _
        $region52: #{paper_scoring_cnn_forward.1} parent=11 // pred_fallthru
          _
        // Predicated region
        $region53: #{paper_scoring_cnn_forward.1} parent=11 // pred_check
          %p966 = pneg %p342
        $region54: #{paper_scoring_cnn_forward.1} parent=11 // pred_check_branch
          %968 = sbr.rel (%p966) target = $region56
        $region55: #{paper_scoring_cnn_forward.1} parent=11 // pred_region
          _
        $region56: #{paper_scoring_cnn_forward.1} parent=11 // pred_fallthru
          _
        // Predicated region
        $region57: #{paper_scoring_cnn_forward.1} parent=11 // pred_check
          %p969 = pneg %p363
        $region58: #{paper_scoring_cnn_forward.1} parent=11 // pred_check_branch
          %971 = sbr.rel (%p969) target = $region60
        $region59: #{paper_scoring_cnn_forward.1} parent=11 // pred_region
          %s973 = ssub.s32 16, 16
          %974 = vsyncadd [#allocation20], %s973
          %s976 = sshll.u32 [#allocation21], 4
          %s977 = int_to_ptr.vmem [resolvable:$true] %s976
          %979 = dma.hbm_to_vmem [thread:$0]  %s25, 16, %s977, [#allocation20]
        $region60: #{paper_scoring_cnn_forward.1} parent=11 // pred_fallthru
          _
        // Predicated region
        $region61: #{paper_scoring_cnn_forward.1} parent=11 // pred_check
          %p980 = pneg %p384
        $region62: #{paper_scoring_cnn_forward.1} parent=11 // pred_check_branch
          %982 = sbr.rel (%p980) target = $region64
        $region63: #{paper_scoring_cnn_forward.1} parent=11 // pred_region
          _
        $region64: #{paper_scoring_cnn_forward.1} parent=11 // pred_fallthru
          _
        // Predicated region
        $region65: #{paper_scoring_cnn_forward.1} parent=11 // pred_check
          %p983 = pneg %p405
        $region66: #{paper_scoring_cnn_forward.1} parent=11 // pred_check_branch
          %985 = sbr.rel (%p983) target = $region68
        $region67: #{paper_scoring_cnn_forward.1} parent=11 // pred_region
          _
        $region68: #{paper_scoring_cnn_forward.1} parent=11 // pred_fallthru
          _
        // Predicated region
        $region69: #{paper_scoring_cnn_forward.1} parent=11 // pred_check
          %p986 = pneg %p426
        $region70: #{paper_scoring_cnn_forward.1} parent=11 // pred_check_branch
          %988 = sbr.rel (%p986) target = $region72
        $region71: #{paper_scoring_cnn_forward.1} parent=11 // pred_region
          _
        $region72: #{paper_scoring_cnn_forward.1} parent=11 // pred_fallthru
          _
        // Predicated region
        $region73: #{paper_scoring_cnn_forward.1} parent=11 // pred_check
          %p989 = pneg %p447
        $region74: #{paper_scoring_cnn_forward.1} parent=11 // pred_check_branch
          %991 = sbr.rel (%p989) target = $region76
        $region75: #{paper_scoring_cnn_forward.1} parent=11 // pred_region
          _
        $region76: #{paper_scoring_cnn_forward.1} parent=11 // pred_fallthru
          _
        // Predicated region
        $region77: #{paper_scoring_cnn_forward.1} parent=11 // pred_check
          %p992 = pneg %p468
        $region78: #{paper_scoring_cnn_forward.1} parent=11 // pred_check_branch
          %994 = sbr.rel (%p992) target = $region80
        $region79: #{paper_scoring_cnn_forward.1} parent=11 // pred_region
          %s996 = ssub.s32 16384, 16384
          %997 = vsyncadd [#allocation23], %s996
          %s998 = sshll.u32 [#allocation22], 4
          %s999 = int_to_ptr.vmem [resolvable:$true] %s998
          %1004 = dma.hbm_to_vmem [thread:$0]  %s35, 16384, %s999, [#allocation23], 256, 256, 16
        $region80: #{paper_scoring_cnn_forward.1} parent=11 // pred_fallthru
          _
        // Predicated region
        $region81: #{paper_scoring_cnn_forward.1} parent=11 // pred_check
          %p1005 = pneg %p489
        $region82: #{paper_scoring_cnn_forward.1} parent=11 // pred_check_branch
          %1007 = sbr.rel (%p1005) target = $region84
        $region83: #{paper_scoring_cnn_forward.1} parent=11 // pred_region
          _
        $region84: #{paper_scoring_cnn_forward.1} parent=11 // pred_fallthru
          _
        // Predicated region
        $region85: #{paper_scoring_cnn_forward.1} parent=11 // pred_check
          %p1008 = pneg %p510
        $region86: #{paper_scoring_cnn_forward.1} parent=11 // pred_check_branch
          %1010 = sbr.rel (%p1008) target = $region88
        $region87: #{paper_scoring_cnn_forward.1} parent=11 // pred_region
          _
        $region88: #{paper_scoring_cnn_forward.1} parent=11 // pred_fallthru
          _
        // Predicated region
        $region89: #{paper_scoring_cnn_forward.1} parent=11 // pred_check
          %p1011 = pneg %p531
        $region90: #{paper_scoring_cnn_forward.1} parent=11 // pred_check_branch
          %1013 = sbr.rel (%p1011) target = $region92
        $region91: #{paper_scoring_cnn_forward.1} parent=11 // pred_region
          _
        $region92: #{paper_scoring_cnn_forward.1} parent=11 // pred_fallthru
          _
        // Predicated region
        $region93: #{paper_scoring_cnn_forward.1} parent=11 // pred_check
          %p1014 = pneg %p552
        $region94: #{paper_scoring_cnn_forward.1} parent=11 // pred_check_branch
          %1016 = sbr.rel (%p1014) target = $region96
        $region95: #{paper_scoring_cnn_forward.1} parent=11 // pred_region
          %s1018 = ssub.s32 8192, 8192
          %1019 = vsyncadd [#allocation23], %s1018
          %s1020 = sshll.u32 [#allocation24], 4
          %s1021 = int_to_ptr.vmem [resolvable:$true] %s1020
          %1026 = dma.hbm_to_vmem [thread:$0]  %s43, 8192, %s1021, [#allocation23], 128, 128, 8
        $region96: #{paper_scoring_cnn_forward.1} parent=11 // pred_fallthru
          _
        // Predicated region
        $region97: #{paper_scoring_cnn_forward.1} parent=11 // pred_check
          %p1027 = pneg %p573
        $region98: #{paper_scoring_cnn_forward.1} parent=11 // pred_check_branch
          %1029 = sbr.rel (%p1027) target = $region100
        $region99: #{paper_scoring_cnn_forward.1} parent=11 // pred_region
          _
        $region100: #{paper_scoring_cnn_forward.1} parent=11 // pred_fallthru
          _
        // Predicated region
        $region101: #{paper_scoring_cnn_forward.1} parent=11 // pred_check
          %p1030 = pneg %p594
        $region102: #{paper_scoring_cnn_forward.1} parent=11 // pred_check_branch
          %1032 = sbr.rel (%p1030) target = $region104
        $region103: #{paper_scoring_cnn_forward.1} parent=11 // pred_region
          _
        $region104: #{paper_scoring_cnn_forward.1} parent=11 // pred_fallthru
          _
        // Predicated region
        $region105: #{paper_scoring_cnn_forward.1} parent=11 // pred_check
          %p1033 = pneg %p615
        $region106: #{paper_scoring_cnn_forward.1} parent=11 // pred_check_branch
          %1035 = sbr.rel (%p1033) target = $region108
        $region107: #{paper_scoring_cnn_forward.1} parent=11 // pred_region
          _
        $region108: #{paper_scoring_cnn_forward.1} parent=11 // pred_fallthru
          _
        // Predicated region
        $region109: #{paper_scoring_cnn_forward.1} parent=11 // pred_check
          %p1036 = pneg %p636
        $region110: #{paper_scoring_cnn_forward.1} parent=11 // pred_check_branch
          %1038 = sbr.rel (%p1036) target = $region112
        $region111: #{paper_scoring_cnn_forward.1} parent=11 // pred_region
          _
        $region112: #{paper_scoring_cnn_forward.1} parent=11 // pred_fallthru
          _
        // Predicated region
        $region113: #{paper_scoring_cnn_forward.1} parent=11 // pred_check
          %p1039 = pneg %p657
        $region114: #{paper_scoring_cnn_forward.1} parent=11 // pred_check_branch
          %1041 = sbr.rel (%p1039) target = $region116
        $region115: #{paper_scoring_cnn_forward.1} parent=11 // pred_region
          _
        $region116: #{paper_scoring_cnn_forward.1} parent=11 // pred_fallthru
          _
        // Predicated region
        $region117: #{paper_scoring_cnn_forward.1} parent=11 // pred_check
          %p1042 = pneg %p678
        $region118: #{paper_scoring_cnn_forward.1} parent=11 // pred_check_branch
          %1044 = sbr.rel (%p1042) target = $region120
        $region119: #{paper_scoring_cnn_forward.1} parent=11 // pred_region
          _
        $region120: #{paper_scoring_cnn_forward.1} parent=11 // pred_fallthru
          _
        // Predicated region
        $region121: #{paper_scoring_cnn_forward.1} parent=11 // pred_check
          %p1045 = pneg %p699
        $region122: #{paper_scoring_cnn_forward.1} parent=11 // pred_check_branch
          %1047 = sbr.rel (%p1045) target = $region124
        $region123: #{paper_scoring_cnn_forward.1} parent=11 // pred_region
          _
        $region124: #{paper_scoring_cnn_forward.1} parent=11 // pred_fallthru
          _
        // Predicated region
        $region125: #{paper_scoring_cnn_forward.1} parent=11 // pred_check
          %p1048 = pneg %p720
        $region126: #{paper_scoring_cnn_forward.1} parent=11 // pred_check_branch
          %1050 = sbr.rel (%p1048) target = $region128
        $region127: #{paper_scoring_cnn_forward.1} parent=11 // pred_region
          _
        $region128: #{paper_scoring_cnn_forward.1} parent=11 // pred_fallthru
          _
        // Predicated region
        $region129: #{paper_scoring_cnn_forward.1} parent=11 // pred_check
          %p1051 = pneg %p741
        $region130: #{paper_scoring_cnn_forward.1} parent=11 // pred_check_branch
          %1053 = sbr.rel (%p1051) target = $region132
        $region131: #{paper_scoring_cnn_forward.1} parent=11 // pred_region
          _
        $region132: #{paper_scoring_cnn_forward.1} parent=11 // pred_fallthru
          _
        // Predicated region
        $region133: #{paper_scoring_cnn_forward.1} parent=11 // pred_check
          %p1054 = pneg %p762
        $region134: #{paper_scoring_cnn_forward.1} parent=11 // pred_check_branch
          %1056 = sbr.rel (%p1054) target = $region136
        $region135: #{paper_scoring_cnn_forward.1} parent=11 // pred_region
          _
        $region136: #{paper_scoring_cnn_forward.1} parent=11 // pred_fallthru
          _
        // Predicated region
        $region137: #{paper_scoring_cnn_forward.1} parent=11 // pred_check
          %p1057 = pneg %p783
        $region138: #{paper_scoring_cnn_forward.1} parent=11 // pred_check_branch
          %1059 = sbr.rel (%p1057) target = $region140
        $region139: #{paper_scoring_cnn_forward.1} parent=11 // pred_region
          _
        $region140: #{paper_scoring_cnn_forward.1} parent=11 // pred_fallthru
          _
        // Predicated region
        $region141: #{paper_scoring_cnn_forward.1} parent=11 // pred_check
          %p1060 = pneg %p804
        $region142: #{paper_scoring_cnn_forward.1} parent=11 // pred_check_branch
          %1062 = sbr.rel (%p1060) target = $region144
        $region143: #{paper_scoring_cnn_forward.1} parent=11 // pred_region
          _
        $region144: #{paper_scoring_cnn_forward.1} parent=11 // pred_fallthru
          _
        // Predicated region
        $region145: #{paper_scoring_cnn_forward.1} parent=11 // pred_check
          %p1063 = pneg %p825
        $region146: #{paper_scoring_cnn_forward.1} parent=11 // pred_check_branch
          %1065 = sbr.rel (%p1063) target = $region148
        $region147: #{paper_scoring_cnn_forward.1} parent=11 // pred_region
          _
        $region148: #{paper_scoring_cnn_forward.1} parent=11 // pred_fallthru
          _
      $region12: #{paper_scoring_cnn_forward.1} parent=5 // pred_fallthru
        _
      %p1066 = scmp.lt.s32.totalorder %s85, 2
      // Predicated region
      $region149: #{paper_scoring_cnn_forward.1} parent=5 // pred_check
        %p1067 = pneg %p1066
      $region150: #{paper_scoring_cnn_forward.1} parent=5 // pred_check_branch
        %1069 = sbr.rel (%p1067) target = $region152
      $region151: #{paper_scoring_cnn_forward.1} parent=5 // pred_region
        // Predicated region
        $region153: #{paper_scoring_cnn_forward.1} parent=151 // pred_check
          %p1070 = pneg %p105
        $region154: #{paper_scoring_cnn_forward.1} parent=151 // pred_check_branch
          %1072 = sbr.rel (%p1070) target = $region156
        $region155: #{paper_scoring_cnn_forward.1} parent=151 // pred_region
          %p1073 = scmp.lt.s32.totalorder %s85, 1
          %s1074 = scalar_select %p1073, %s85, 1
          %s1075 = smul.addr %s1074, 8
          %s1076 = smul.addr %s1075, 8
          %s1077 = scalar_lea.vmem %s1, %s1076
        $region156: #{paper_scoring_cnn_forward.1} parent=151 // pred_fallthru
          _
      $region152: #{paper_scoring_cnn_forward.1} parent=5 // pred_fallthru
        _
      %p1078 = scmp.le.s32.totalorder 1, %s85
      %p1079 = scmp.lt.s32.totalorder %s85, 3
      %p1080 = pnand %p1078, %p1079
      %p1081 = pneg %p1080
      // Predicated region
      $region157: #{paper_scoring_cnn_forward.1} parent=5 // pred_check
        _
      $region158: #{paper_scoring_cnn_forward.1} parent=5 // pred_check_branch
        %1083 = sbr.rel (%p1080) target = $region160
      $region159: #{paper_scoring_cnn_forward.1} parent=5 // pred_region
        %s1084 = ssub.s32 %s85, 1
        // Predicated region
        $region161: #{paper_scoring_cnn_forward.1} parent=159 // pred_check
          %p1085 = pneg %p132
        $region162: #{paper_scoring_cnn_forward.1} parent=159 // pred_check_branch
          %1087 = sbr.rel (%p1085) target = $region164
        $region163: #{paper_scoring_cnn_forward.1} parent=159 // pred_region
          %1088 = dma.done [#allocation9], 16
        $region164: #{paper_scoring_cnn_forward.1} parent=159 // pred_fallthru
          _
        // Predicated region
        $region165: #{paper_scoring_cnn_forward.1} parent=159 // pred_check
          %p1089 = pneg %p153
        $region166: #{paper_scoring_cnn_forward.1} parent=159 // pred_check_branch
          %1091 = sbr.rel (%p1089) target = $region168
        $region167: #{paper_scoring_cnn_forward.1} parent=159 // pred_region
          %1092 = dma.done [#allocation11], 16
        $region168: #{paper_scoring_cnn_forward.1} parent=159 // pred_fallthru
          _
        // Predicated region
        $region169: #{paper_scoring_cnn_forward.1} parent=159 // pred_check
          %p1093 = pneg %p174
        $region170: #{paper_scoring_cnn_forward.1} parent=159 // pred_check_branch
          %1095 = sbr.rel (%p1093) target = $region172
        $region171: #{paper_scoring_cnn_forward.1} parent=159 // pred_region
          %1096 = dma.done [#allocation11], 16
        $region172: #{paper_scoring_cnn_forward.1} parent=159 // pred_fallthru
          _
        // Predicated region
        $region173: #{paper_scoring_cnn_forward.1} parent=159 // pred_check
          %p1097 = pneg %p195
        $region174: #{paper_scoring_cnn_forward.1} parent=159 // pred_check_branch
          %1099 = sbr.rel (%p1097) target = $region176
        $region175: #{paper_scoring_cnn_forward.1} parent=159 // pred_region
          %1100 = dma.done [#allocation14], 16
        $region176: #{paper_scoring_cnn_forward.1} parent=159 // pred_fallthru
          _
        // Predicated region
        $region177: #{paper_scoring_cnn_forward.1} parent=159 // pred_check
          %p1101 = pneg %p216
        $region178: #{paper_scoring_cnn_forward.1} parent=159 // pred_check_branch
          %1103 = sbr.rel (%p1101) target = $region180
        $region179: #{paper_scoring_cnn_forward.1} parent=159 // pred_region
          %1104 = dma.done [#allocation14], 128
        $region180: #{paper_scoring_cnn_forward.1} parent=159 // pred_fallthru
          _
        // Predicated region
        $region181: #{paper_scoring_cnn_forward.1} parent=159 // pred_check
          %p1105 = pneg %p237
        $region182: #{paper_scoring_cnn_forward.1} parent=159 // pred_check_branch
          %1107 = sbr.rel (%p1105) target = $region184
        $region183: #{paper_scoring_cnn_forward.1} parent=159 // pred_region
          %1108 = dma.done [#allocation17], 128
        $region184: #{paper_scoring_cnn_forward.1} parent=159 // pred_fallthru
          _
        // Predicated region
        $region185: #{paper_scoring_cnn_forward.1} parent=159 // pred_check
          %p1109 = pneg %p258
        $region186: #{paper_scoring_cnn_forward.1} parent=159 // pred_check_branch
          %1111 = sbr.rel (%p1109) target = $region188
        $region187: #{paper_scoring_cnn_forward.1} parent=159 // pred_region
          %1112 = dma.done [#allocation17], 128
        $region188: #{paper_scoring_cnn_forward.1} parent=159 // pred_fallthru
          _
        // Predicated region
        $region189: #{paper_scoring_cnn_forward.1} parent=159 // pred_check
          %p1113 = pneg %p279
        $region190: #{paper_scoring_cnn_forward.1} parent=159 // pred_check_branch
          %1115 = sbr.rel (%p1113) target = $region192
        $region191: #{paper_scoring_cnn_forward.1} parent=159 // pred_region
          %1116 = dma.done [#allocation20], 16
        $region192: #{paper_scoring_cnn_forward.1} parent=159 // pred_fallthru
          _
        // Predicated region
        $region193: #{paper_scoring_cnn_forward.1} parent=159 // pred_check
          %p1117 = pneg %p363
        $region194: #{paper_scoring_cnn_forward.1} parent=159 // pred_check_branch
          %1119 = sbr.rel (%p1117) target = $region196
        $region195: #{paper_scoring_cnn_forward.1} parent=159 // pred_region
          %1120 = dma.done [#allocation20], 16
        $region196: #{paper_scoring_cnn_forward.1} parent=159 // pred_fallthru
          _
        // Predicated region
        $region197: #{paper_scoring_cnn_forward.1} parent=159 // pred_check
          %p1121 = pneg %p468
        $region198: #{paper_scoring_cnn_forward.1} parent=159 // pred_check_branch
          %1123 = sbr.rel (%p1121) target = $region200
        $region199: #{paper_scoring_cnn_forward.1} parent=159 // pred_region
          %1124 = dma.done [#allocation23], 16384
        $region200: #{paper_scoring_cnn_forward.1} parent=159 // pred_fallthru
          _
        // Predicated region
        $region201: #{paper_scoring_cnn_forward.1} parent=159 // pred_check
          %p1125 = pneg %p552
        $region202: #{paper_scoring_cnn_forward.1} parent=159 // pred_check_branch
          %1127 = sbr.rel (%p1125) target = $region204
        $region203: #{paper_scoring_cnn_forward.1} parent=159 // pred_region
          %1128 = dma.done [#allocation23], 8192
        $region204: #{paper_scoring_cnn_forward.1} parent=159 // pred_fallthru
          _
        %p1129 = scmp.lt.s32.totalorder %s90, 1
        %s1130 = scalar_select %p1129, %s90, 1
        %s1131 = smul.addr %s1130, 8
        %s1132 = smul.addr %s1131, 8
        %s1133 = scalar_lea.vmem %s1, %s1132
        %p1134 = pneg %p111
        %p1135 = pneg %p108
        %p1136 = pneg %p132
        %p1137 = pneg %p129
        %p1138 = pneg %p153
        %p1139 = pneg %p150
        %p1140 = pneg %p174
        %p1141 = pneg %p171
        %p1142 = pneg %p195
        %p1143 = pneg %p192
        %p1144 = pneg %p216
        %p1145 = pneg %p213
        %p1146 = pneg %p237
        %p1147 = pneg %p234
        %p1148 = pneg %p258
        %p1149 = pneg %p255
        %p1150 = pneg %p279
        %p1151 = pneg %p276
        %p1152 = pneg %p300
        %p1153 = pneg %p297
        %p1154 = pneg %p321
        %p1155 = pneg %p318
        %p1156 = pneg %p342
        %p1157 = pneg %p339
        %p1158 = pneg %p363
        %p1159 = pneg %p360
        %p1160 = pneg %p384
        %p1161 = pneg %p381
        %p1162 = pneg %p405
        %p1163 = pneg %p402
        %p1164 = pneg %p426
        %p1165 = pneg %p423
        %p1166 = pneg %p447
        %p1167 = pneg %p444
        %p1168 = pneg %p468
        %p1169 = pneg %p465
        %p1170 = pneg %p489
        %p1171 = pneg %p486
        %p1172 = pneg %p510
        %p1173 = pneg %p507
        %p1174 = pneg %p531
        %p1175 = pneg %p528
        %p1176 = pneg %p552
        %p1177 = pneg %p549
        %p1178 = pneg %p573
        %p1179 = pneg %p570
        %p1180 = pneg %p594
        %p1181 = pneg %p591
        %p1182 = pneg %p615
        %p1183 = pneg %p612
        %p1184 = pneg %p636
        %p1185 = pneg %p633
        %p1186 = pneg %p657
        %p1187 = pneg %p654
        %p1188 = pneg %p678
        %p1189 = pneg %p675
        %p1190 = pneg %p699
        %p1191 = pneg %p696
        %p1192 = pneg %p720
        %p1193 = pneg %p717
        %p1194 = pneg %p741
        %p1195 = pneg %p738
        %p1196 = pneg %p762
        %p1197 = pneg %p759
        %p1198 = pneg %p783
        %p1199 = pneg %p780
        %p1200 = pneg %p804
        %p1201 = pneg %p801
        %p1202 = pneg %p825
        %p1203 = pneg %p822
        %p1204 = pneg %p851
        %p1205 = pneg %p848
        %p1206 = scmp.lt.s32.totalorder %s90, 1
        %s1207 = scalar_select %p1206, %s90, 1
        %s1208 = scalar_lea.vmem %s71, %s1207
        %p1209 = scmp.lt.s32.totalorder %s90, 1
        %s1210 = scalar_select %p1209, %s90, 1
        %s1211 = smul.addr %s1210, 8
        %s1212 = smul.addr %s1211, 8
        %s1213 = scalar_lea.vmem %s1, %s1212
        %p1214 = scmp.lt.s32.totalorder %s90, 1
        %s1215 = scalar_select %p1214, %s90, 1
        %s1216 = scalar_lea.vmem %s71, %s1215
        %v1218 = vld [vmem:[%s1213] sm:$0xff]
        %v1219 = vld [vmem:[%s1213 + $0x8] sm:$0xff]
        %v1220 = vld [vmem:[%s1213 + $0x10] sm:$0xff]
        %v1221 = vld [vmem:[%s1213 + $0x18] sm:$0xff]
        %v1222 = vld [vmem:[%s1213 + $0x20] sm:$0xff]
        %v1223 = vld [vmem:[%s1213 + $0x28] sm:$0xff]
        %v1224 = vld [vmem:[%s1213 + $0x30] sm:$0xff]
        %v1225 = vld [vmem:[%s1213 + $0x38] sm:$0xff]
        %vm1234 = vcmask 1040384
        %v1235 = vrot.slane %v1218, 7
        %v1236 = vrot.slane %v1219, 7
        %v1237 = vsel %vm1234, %v1235, %v1236
        %v1238 = vrot.slane %v1220, 7
        %v1239 = vsel %vm1234, %v1236, %v1238
        %v1240 = vrot.slane %v1221, 7
        %v1241 = vsel %vm1234, %v1238, %v1240
        %v1242 = vrot.slane %v1222, 7
        %v1243 = vsel %vm1234, %v1240, %v1242
        %v1244 = vrot.slane %v1223, 7
        %v1245 = vsel %vm1234, %v1242, %v1244
        %v1246 = vrot.slane %v1224, 7
        %v1247 = vsel %vm1234, %v1244, %v1246
        %v1248 = vrot.slane %v1225, 7
        %v1249 = vsel %vm1234, %v1246, %v1248
        %v1251 = vsel %vm1234, 0.0, %v1235
        %vm1252 = vcmask 1046528
        %v1253 = vrot.slane %v1218, 1
        %v1254 = vrot.slane %v1219, 1
        %v1255 = vsel %vm1252, %v1253, %v1254
        %v1256 = vrot.slane %v1220, 1
        %v1257 = vsel %vm1252, %v1254, %v1256
        %v1258 = vrot.slane %v1221, 1
        %v1259 = vsel %vm1252, %v1256, %v1258
        %v1260 = vrot.slane %v1222, 1
        %v1261 = vsel %vm1252, %v1258, %v1260
        %v1262 = vrot.slane %v1223, 1
        %v1263 = vsel %vm1252, %v1260, %v1262
        %v1264 = vrot.slane %v1224, 1
        %v1265 = vsel %vm1252, %v1262, %v1264
        %v1266 = vrot.slane %v1225, 1
        %v1267 = vsel %vm1252, %v1264, %v1266
        %v1269 = vsel %vm1252, %v1266, 0.0
        %v1270 = vld [vmem:[#allocation8] sm:$0x1]
        %1272 = vset.pattern.permute.xlu0 0
        %1273 = vperm.xlu0 %1272, %v1251
        %v1274 = vpop.permute.xlu0 %1273
        %1276 = vset.pattern.permute.xlu0 0
        %1277 = vperm.xlu0 %1276, %v1237
        %v1278 = vpop.permute.xlu0 %1277
        %1280 = vset.pattern.permute.xlu0 0
        %1281 = vperm.xlu0 %1280, %v1239
        %v1282 = vpop.permute.xlu0 %1281
        %1284 = vset.pattern.permute.xlu0 0
        %1285 = vperm.xlu0 %1284, %v1241
        %v1286 = vpop.permute.xlu0 %1285
        %1288 = vset.pattern.permute.xlu0 0
        %1289 = vperm.xlu0 %1288, %v1243
        %v1290 = vpop.permute.xlu0 %1289
        %1292 = vset.pattern.permute.xlu0 0
        %1293 = vperm.xlu0 %1292, %v1245
        %v1294 = vpop.permute.xlu0 %1293
        %1296 = vset.pattern.permute.xlu0 0
        %1297 = vperm.xlu0 %1296, %v1247
        %v1298 = vpop.permute.xlu0 %1297
        %1300 = vset.pattern.permute.xlu0 0
        %1301 = vperm.xlu0 %1300, %v1249
        %v1302 = vpop.permute.xlu0 %1301
        %v1305 = vlaneseq
        %v1306 = vshrl.u32 %v1305, 7
        %v1307 = vsub.s32 0, %v1306
        %v1308 = vrot.slane %v1270, %v1307
        %v1310 = vmul.f32 %v1274, %v1308
        %v1311 = vmul.f32 %v1278, %v1308
        %v1312 = vmul.f32 %v1282, %v1308
        %v1313 = vmul.f32 %v1286, %v1308
        %v1314 = vmul.f32 %v1290, %v1308
        %v1315 = vmul.f32 %v1294, %v1308
        %v1316 = vmul.f32 %v1298, %v1308
        %v1317 = vmul.f32 %v1302, %v1308
        %v1318 = vld [vmem:[#allocation10] sm:$0x1]
        %1319 = vset.pattern.permute.xlu0 0
        %1320 = vperm.xlu0 %1319, %v1218
        %v1321 = vpop.permute.xlu0 %1320
        %1323 = vset.pattern.permute.xlu0 0
        %1324 = vperm.xlu0 %1323, %v1219
        %v1325 = vpop.permute.xlu0 %1324
        %1327 = vset.pattern.permute.xlu0 0
        %1328 = vperm.xlu0 %1327, %v1220
        %v1329 = vpop.permute.xlu0 %1328
        %1331 = vset.pattern.permute.xlu0 0
        %1332 = vperm.xlu0 %1331, %v1221
        %v1333 = vpop.permute.xlu0 %1332
        %1335 = vset.pattern.permute.xlu0 0
        %1336 = vperm.xlu0 %1335, %v1222
        %v1337 = vpop.permute.xlu0 %1336
        %1339 = vset.pattern.permute.xlu0 0
        %1340 = vperm.xlu0 %1339, %v1223
        %v1341 = vpop.permute.xlu0 %1340
        %1343 = vset.pattern.permute.xlu0 0
        %1344 = vperm.xlu0 %1343, %v1224
        %v1345 = vpop.permute.xlu0 %1344
        %1347 = vset.pattern.permute.xlu0 0
        %1348 = vperm.xlu0 %1347, %v1225
        %v1349 = vpop.permute.xlu0 %1348
        %v1352 = vlaneseq
        %v1353 = vshrl.u32 %v1352, 7
        %v1354 = vsub.s32 0, %v1353
        %v1355 = vrot.slane %v1318, %v1354
        %v1357 = vmul.f32 %v1321, %v1355
        %v1358 = vmul.f32 %v1325, %v1355
        %v1359 = vmul.f32 %v1329, %v1355
        %v1360 = vmul.f32 %v1333, %v1355
        %v1361 = vmul.f32 %v1337, %v1355
        %v1362 = vmul.f32 %v1341, %v1355
        %v1363 = vmul.f32 %v1345, %v1355
        %v1364 = vmul.f32 %v1349, %v1355
        %v1365 = vadd.f32 %v1310, %v1357
        %v1366 = vadd.f32 %v1311, %v1358
        %v1367 = vadd.f32 %v1312, %v1359
        %v1368 = vadd.f32 %v1313, %v1360
        %v1369 = vadd.f32 %v1314, %v1361
        %v1370 = vadd.f32 %v1315, %v1362
        %v1371 = vadd.f32 %v1316, %v1363
        %v1372 = vadd.f32 %v1317, %v1364
        %v1373 = vld [vmem:[#allocation12] sm:$0x1]
        %1374 = vset.pattern.permute.xlu0 0
        %1375 = vperm.xlu0 %1374, %v1255
        %v1376 = vpop.permute.xlu0 %1375
        %1378 = vset.pattern.permute.xlu0 0
        %1379 = vperm.xlu0 %1378, %v1257
        %v1380 = vpop.permute.xlu0 %1379
        %1382 = vset.pattern.permute.xlu0 0
        %1383 = vperm.xlu0 %1382, %v1259
        %v1384 = vpop.permute.xlu0 %1383
        %1386 = vset.pattern.permute.xlu0 0
        %1387 = vperm.xlu0 %1386, %v1261
        %v1388 = vpop.permute.xlu0 %1387
        %1390 = vset.pattern.permute.xlu0 0
        %1391 = vperm.xlu0 %1390, %v1263
        %v1392 = vpop.permute.xlu0 %1391
        %1394 = vset.pattern.permute.xlu0 0
        %1395 = vperm.xlu0 %1394, %v1265
        %v1396 = vpop.permute.xlu0 %1395
        %1398 = vset.pattern.permute.xlu0 0
        %1399 = vperm.xlu0 %1398, %v1267
        %v1400 = vpop.permute.xlu0 %1399
        %1403 = vset.pattern.permute.xlu0 0
        %1404 = vperm.xlu0 %1403, %v1269
        %v1405 = vpop.permute.xlu0 %1404
        %v1408 = vlaneseq
        %v1409 = vshrl.u32 %v1408, 7
        %v1410 = vsub.s32 0, %v1409
        %v1411 = vrot.slane %v1373, %v1410
        %v1413 = vmul.f32 %v1376, %v1411
        %v1414 = vmul.f32 %v1380, %v1411
        %v1415 = vmul.f32 %v1384, %v1411
        %v1416 = vmul.f32 %v1388, %v1411
        %v1417 = vmul.f32 %v1392, %v1411
        %v1418 = vmul.f32 %v1396, %v1411
        %v1419 = vmul.f32 %v1400, %v1411
        %v1420 = vmul.f32 %v1405, %v1411
        %v1421 = vadd.f32 %v1365, %v1413
        %v1422 = vadd.f32 %v1366, %v1414
        %v1423 = vadd.f32 %v1367, %v1415
        %v1424 = vadd.f32 %v1368, %v1416
        %v1425 = vadd.f32 %v1369, %v1417
        %v1426 = vadd.f32 %v1370, %v1418
        %v1427 = vadd.f32 %v1371, %v1419
        %v1428 = vadd.f32 %v1372, %v1420
        %v1429 = vld [vmem:[#allocation13] sm:$0x1]
        %v1431 = vlaneseq
        %v1432 = vshrl.u32 %v1431, 7
        %v1433 = vsub.s32 0, %v1432
        %v1434 = vrot.slane %v1429, %v1433
        %v1436 = vadd.f32 %v1421, %v1434
        %v1437 = vadd.f32 %v1422, %v1434
        %v1438 = vadd.f32 %v1423, %v1434
        %v1439 = vadd.f32 %v1424, %v1434
        %v1440 = vadd.f32 %v1425, %v1434
        %v1441 = vadd.f32 %v1426, %v1434
        %v1442 = vadd.f32 %v1427, %v1434
        %v1443 = vadd.f32 %v1428, %v1434
        %vm1444 = vcmask 130048
        %v1445 = vsel %vm1444, %v1436, 0.0
        %v1446 = vsel %vm1444, %v1437, 0.0
        %v1447 = vadd.f32 %v1445, %v1446
        %v1448 = vsel %vm1444, %v1438, 0.0
        %v1449 = vadd.f32 %v1447, %v1448
        %v1450 = vsel %vm1444, %v1439, 0.0
        %v1451 = vadd.f32 %v1449, %v1450
        %v1452 = vsel %vm1444, %v1440, 0.0
        %v1453 = vadd.f32 %v1451, %v1452
        %v1454 = vsel %vm1444, %v1441, 0.0
        %v1455 = vadd.f32 %v1453, %v1454
        %v1456 = vsel %vm1444, %v1442, 0.0
        %v1457 = vadd.f32 %v1455, %v1456
        %v1458 = vsel %vm1444, %v1443, 0.0
        %v1459 = vadd.f32 %v1457, %v1458
        %v1460 = vrot.slane %v1459, 4
        %v1461 = vadd.f32 %v1459, %v1460
        %v1462 = vrot.slane %v1461, 2
        %v1463 = vadd.f32 %v1461, %v1462
        %v1464 = vrot.slane %v1463, 1
        %v1465 = vadd.f32 %v1463, %v1464
        %v1466 = vrcp.pop 64.0
        %v1467 = vmul.f32 %v1465, %v1466
        %v1468 = vsub.f32 %v1436, %v1467
        %v1469 = vsub.f32 %v1437, %v1467
        %v1470 = vsub.f32 %v1438, %v1467
        %v1471 = vsub.f32 %v1439, %v1467
        %v1472 = vsub.f32 %v1440, %v1467
        %v1473 = vsub.f32 %v1441, %v1467
        %v1474 = vsub.f32 %v1442, %v1467
        %v1475 = vsub.f32 %v1443, %v1467
        %v1476 = vmul.f32 %v1468, %v1468
        %v1477 = vmul.f32 %v1469, %v1469
        %v1478 = vmul.f32 %v1470, %v1470
        %v1479 = vmul.f32 %v1471, %v1471
        %v1480 = vmul.f32 %v1472, %v1472
        %v1481 = vmul.f32 %v1473, %v1473
        %v1482 = vmul.f32 %v1474, %v1474
        %v1483 = vmul.f32 %v1475, %v1475
        %v1484 = vsel %vm1444, %v1476, 0.0
        %v1485 = vsel %vm1444, %v1477, 0.0
        %v1486 = vadd.f32 %v1484, %v1485
        %v1487 = vsel %vm1444, %v1478, 0.0
        %v1488 = vadd.f32 %v1486, %v1487
        %v1489 = vsel %vm1444, %v1479, 0.0
        %v1490 = vadd.f32 %v1488, %v1489
        %v1491 = vsel %vm1444, %v1480, 0.0
        %v1492 = vadd.f32 %v1490, %v1491
        %v1493 = vsel %vm1444, %v1481, 0.0
        %v1494 = vadd.f32 %v1492, %v1493
        %v1495 = vsel %vm1444, %v1482, 0.0
        %v1496 = vadd.f32 %v1494, %v1495
        %v1497 = vsel %vm1444, %v1483, 0.0
        %v1498 = vadd.f32 %v1496, %v1497
        %v1499 = vrot.slane %v1498, 4
        %v1500 = vadd.f32 %v1498, %v1499
        %v1501 = vrot.slane %v1500, 2
        %v1502 = vadd.f32 %v1500, %v1501
        %v1503 = vrot.slane %v1502, 1
        %v1504 = vadd.f32 %v1502, %v1503
        %v1505 = vmul.f32 %v1504, %v1466
        %v1506 = vadd.f32 %v1505, 1e-05
        %v1507 = vrsqrt.pop %v1506
        %v1508 = vmul.f32 %v1468, %v1507
        %v1509 = vmul.f32 %v1469, %v1507
        %v1510 = vmul.f32 %v1470, %v1507
        %v1511 = vmul.f32 %v1471, %v1507
        %v1512 = vmul.f32 %v1472, %v1507
        %v1513 = vmul.f32 %v1473, %v1507
        %v1514 = vmul.f32 %v1474, %v1507
        %v1515 = vmul.f32 %v1475, %v1507
        %v1516 = vmax.f32 %v1508, 0.0
        %v1517 = vmax.f32 %v1509, 0.0
        %v1518 = vmax.f32 %v1510, 0.0
        %v1519 = vmax.f32 %v1511, 0.0
        %v1520 = vmax.f32 %v1512, 0.0
        %v1521 = vmax.f32 %v1513, 0.0
        %v1522 = vmax.f32 %v1514, 0.0
        %v1523 = vmax.f32 %v1515, 0.0
        %1524 = vst.msk [vmem:[#allocation2] sm:$0xff] %vm1444, %v1516
        %1525 = vst.msk [vmem:[#allocation2 + $0x8] sm:$0xff] %vm1444, %v1517
        %1526 = vst.msk [vmem:[#allocation2 + $0x10] sm:$0xff] %vm1444, %v1518
        %1527 = vst.msk [vmem:[#allocation2 + $0x18] sm:$0xff] %vm1444, %v1519
        %1528 = vst.msk [vmem:[#allocation2 + $0x20] sm:$0xff] %vm1444, %v1520
        %1529 = vst.msk [vmem:[#allocation2 + $0x28] sm:$0xff] %vm1444, %v1521
        %1530 = vst.msk [vmem:[#allocation2 + $0x30] sm:$0xff] %vm1444, %v1522
        %1531 = vst.msk [vmem:[#allocation2 + $0x38] sm:$0xff] %vm1444, %v1523
        %v1532 = vld [vmem:[#allocation2] ss:$2 sm:$0xff]
        %s1533 = scalar_lea.vmem [#allocation2], 16
        %v1534 = vld [vmem:[%s1533] ss:$2 sm:$0xff]
        %s1535 = scalar_lea.vmem [#allocation2], 32
        %v1536 = vld [vmem:[%s1535] ss:$2 sm:$0xff]
        %s1537 = scalar_lea.vmem [#allocation2], 48
        %v1538 = vld [vmem:[%s1537] ss:$2 sm:$0xff]
        %s1539 = scalar_lea.vmem [#allocation2], 1
        %v1540 = vld [vmem:[%s1539] ss:$2 sm:$0xff]
        %s1541 = scalar_lea.vmem [#allocation2], 17
        %v1542 = vld [vmem:[%s1541] ss:$2 sm:$0xff]
        %s1543 = scalar_lea.vmem [#allocation2], 33
        %v1544 = vld [vmem:[%s1543] ss:$2 sm:$0xff]
        %s1545 = scalar_lea.vmem [#allocation2], 49
        %v1546 = vld [vmem:[%s1545] ss:$2 sm:$0xff]
        %v1547 = vmax.f32 %v1532, %v1540
        %v1548 = vmax.f32 %v1534, %v1542
        %v1549 = vmax.f32 %v1536, %v1544
        %v1550 = vmax.f32 %v1538, %v1546
        %v1555 = vrot.slane %v1547, 7
        %v1556 = vrot.slane %v1548, 7
        %v1557 = vsel %vm1234, %v1555, %v1556
        %v1558 = vrot.slane %v1549, 7
        %v1559 = vsel %vm1234, %v1556, %v1558
        %v1560 = vrot.slane %v1550, 7
        %v1561 = vsel %vm1234, %v1558, %v1560
        %v1566 = vsel %vm1234, 0.0, %v1555
        %v1567 = vrot.slane %v1547, 1
        %v1568 = vrot.slane %v1548, 1
        %v1569 = vsel %vm1252, %v1567, %v1568
        %v1570 = vrot.slane %v1549, 1
        %v1571 = vsel %vm1252, %v1568, %v1570
        %v1572 = vrot.slane %v1550, 1
        %v1573 = vsel %vm1252, %v1570, %v1572
        %v1578 = vsel %vm1252, %v1572, 0.0
        %v1579 = vpack.c.bf16 %v1557, %v1566
        %v1580 = vpack.c.bf16 %v1561, %v1559
        %v1581 = vld [vmem:[#allocation15] sm:$0xf]
        %v1582 = vld [vmem:[#allocation15 + $0x4] sm:$0xf]
        %v1583 = vpack.c.bf16 %v1548, %v1547
        %v1584 = vpack.c.bf16 %v1550, %v1549
        %v1585 = vld [vmem:[#allocation16] sm:$0xf]
        %v1586 = vld [vmem:[#allocation16 + $0x4] sm:$0xf]
        %v1589 = vunpack.c.l.b16 %v1585
        %v1590 = vunpack.c.l.b16 %v1586
        %v1591 = vpack.c.b16 %v1590, %v1589
        %v1594 = vsel %vm1444, %v1583, 0
        %v1597 = vsel %vm1444, %v1584, 0
        %1599 = vmatprep.subr.bf16.mxu0 0
        %1600 = vmatpush1.bf16.msra.mxu0 %v1591
        %1601 = vmatprep.subr.bf16.mxu0 0
        %1602 = vmatpush1.bf16.msra.mxu0 0
        %1603 = vmatprep.subr.bf16.mxu0 0
        %1604 = vmatpush1.bf16.msra.mxu0 0
        %1605 = vmatprep.subr.bf16.mxu0 0
        %1606 = vmatpush1.bf16.msra.mxu0 0
        %1607 = vmatprep.subr.bf16.mxu0 0
        %1608 = vmatpush1.bf16.msra.mxu0 0
        %1609 = vmatprep.subr.bf16.mxu0 0
        %1610 = vmatpush1.bf16.msra.mxu0 0
        %1611 = vmatprep.subr.bf16.mxu0 0
        %1612 = vmatpush1.bf16.msra.mxu0 0
        %1613 = vmatprep.subr.bf16.mxu0 0
        %1614 = vmatpush1.bf16.msra.mxu0 0
        %1615 = vmatprep.subr.bf16.mxu0 0
        %1616 = vmatpush1.bf16.msra.mxu0 0
        %1617 = vmatprep.subr.bf16.mxu0 0
        %1618 = vmatpush1.bf16.msra.mxu0 0
        %1619 = vmatprep.subr.bf16.mxu0 0
        %1620 = vmatpush1.bf16.msra.mxu0 0
        %1621 = vmatprep.subr.bf16.mxu0 0
        %1622 = vmatpush1.bf16.msra.mxu0 0
        %1623 = vmatprep.subr.bf16.mxu0 0
        %1624 = vmatpush1.bf16.msra.mxu0 0
        %1625 = vmatprep.subr.bf16.mxu0 0
        %1626 = vmatpush1.bf16.msra.mxu0 0
        %1627 = vmatprep.subr.bf16.mxu0 0
        %1628 = vmatpush1.bf16.msra.mxu0 0
        %1629 = vmatprep.subr.bf16.mxu0 0
        %1630 = vmatpush1.bf16.msra.mxu0 0
        %1631 = vmatprep.mubr.bf16.mxu0 0
        %1632 = vmatmul.mubr.bf16.gmra.mrb[0].mxu0 %v1594
        %v1633 = vpop.f32.mrb[0].mxu0
        %v1634 = vadd.f32 0.0, %v1633
        %v1635 = vpop.f32.mrb[0].mxu0
        %v1636 = vpop.f32.mrb[0].mxu0
        %v1637 = vadd.f32 0.0, %v1636
        %v1638 = vpop.f32.mrb[0].mxu0
        %1639 = vmatprep.mubr.bf16.mxu0 0
        %1640 = vmatmul.mubr.bf16.gmra.mrb[0].mxu0 %v1597
        %v1641 = vpop.f32.mrb[0].mxu0
        %v1642 = vadd.f32 0.0, %v1641
        %v1643 = vpop.f32.mrb[0].mxu0
        %v1644 = vpop.f32.mrb[0].mxu0
        %v1645 = vadd.f32 0.0, %v1644
        %v1646 = vpop.f32.mrb[0].mxu0
        %1647 = vdwg.mxu0
        %v1650 = vunpack.c.l.b16 %v1581
        %v1651 = vunpack.c.l.b16 %v1582
        %v1652 = vpack.c.b16 %v1651, %v1650
        %v1655 = vsel %vm1444, %v1579, 0
        %v1658 = vsel %vm1444, %v1580, 0
        %1660 = vmatprep.subr.bf16.mxu0 0
        %1661 = vmatpush1.bf16.msra.mxu0 %v1652
        %1662 = vmatprep.subr.bf16.mxu0 0
        %1663 = vmatpush1.bf16.msra.mxu0 0
        %1664 = vmatprep.subr.bf16.mxu0 0
        %1665 = vmatpush1.bf16.msra.mxu0 0
        %1666 = vmatprep.subr.bf16.mxu0 0
        %1667 = vmatpush1.bf16.msra.mxu0 0
        %1668 = vmatprep.subr.bf16.mxu0 0
        %1669 = vmatpush1.bf16.msra.mxu0 0
        %1670 = vmatprep.subr.bf16.mxu0 0
        %1671 = vmatpush1.bf16.msra.mxu0 0
        %1672 = vmatprep.subr.bf16.mxu0 0
        %1673 = vmatpush1.bf16.msra.mxu0 0
        %1674 = vmatprep.subr.bf16.mxu0 0
        %1675 = vmatpush1.bf16.msra.mxu0 0
        %1676 = vmatprep.subr.bf16.mxu0 0
        %1677 = vmatpush1.bf16.msra.mxu0 0
        %1678 = vmatprep.subr.bf16.mxu0 0
        %1679 = vmatpush1.bf16.msra.mxu0 0
        %1680 = vmatprep.subr.bf16.mxu0 0
        %1681 = vmatpush1.bf16.msra.mxu0 0
        %1682 = vmatprep.subr.bf16.mxu0 0
        %1683 = vmatpush1.bf16.msra.mxu0 0
        %1684 = vmatprep.subr.bf16.mxu0 0
        %1685 = vmatpush1.bf16.msra.mxu0 0
        %1686 = vmatprep.subr.bf16.mxu0 0
        %1687 = vmatpush1.bf16.msra.mxu0 0
        %1688 = vmatprep.subr.bf16.mxu0 0
        %1689 = vmatpush1.bf16.msra.mxu0 0
        %1690 = vmatprep.subr.bf16.mxu0 0
        %1691 = vmatpush1.bf16.msra.mxu0 0
        %1692 = vmatprep.mubr.bf16.mxu0 0
        %1693 = vmatmul.mubr.bf16.gmra.mrb[0].mxu0 %v1655
        %v1694 = vpop.f32.mrb[0].mxu0
        %v1695 = vadd.f32 %v1634, %v1694
        %v1696 = vpop.f32.mrb[0].mxu0
        %v1697 = vpop.f32.mrb[0].mxu0
        %v1698 = vadd.f32 %v1637, %v1697
        %v1699 = vpop.f32.mrb[0].mxu0
        %1700 = vmatprep.mubr.bf16.mxu0 0
        %1701 = vmatmul.mubr.bf16.gmra.mrb[0].mxu0 %v1658
        %v1702 = vpop.f32.mrb[0].mxu0
        %v1703 = vadd.f32 %v1642, %v1702
        %v1704 = vpop.f32.mrb[0].mxu0
        %v1705 = vpop.f32.mrb[0].mxu0
        %v1706 = vadd.f32 %v1645, %v1705
        %v1707 = vpop.f32.mrb[0].mxu0
        %1708 = vdwg.mxu0
        %v1709 = vpack.c.bf16 %v1571, %v1569
        %v1710 = vpack.c.bf16 %v1578, %v1573
        %v1711 = vld [vmem:[#allocation18] sm:$0xf]
        %v1712 = vld [vmem:[#allocation18 + $0x4] sm:$0xf]
        %v1715 = vunpack.c.l.b16 %v1711
        %v1716 = vunpack.c.l.b16 %v1712
        %v1717 = vpack.c.b16 %v1716, %v1715
        %v1720 = vsel %vm1444, %v1709, 0
        %v1723 = vsel %vm1444, %v1710, 0
        %1725 = vmatprep.subr.bf16.mxu0 0
        %1726 = vmatpush1.bf16.msra.mxu0 %v1717
        %1727 = vmatprep.subr.bf16.mxu0 0
        %1728 = vmatpush1.bf16.msra.mxu0 0
        %1729 = vmatprep.subr.bf16.mxu0 0
        %1730 = vmatpush1.bf16.msra.mxu0 0
        %1731 = vmatprep.subr.bf16.mxu0 0
        %1732 = vmatpush1.bf16.msra.mxu0 0
        %1733 = vmatprep.subr.bf16.mxu0 0
        %1734 = vmatpush1.bf16.msra.mxu0 0
        %1735 = vmatprep.subr.bf16.mxu0 0
        %1736 = vmatpush1.bf16.msra.mxu0 0
        %1737 = vmatprep.subr.bf16.mxu0 0
        %1738 = vmatpush1.bf16.msra.mxu0 0
        %1739 = vmatprep.subr.bf16.mxu0 0
        %1740 = vmatpush1.bf16.msra.mxu0 0
        %1741 = vmatprep.subr.bf16.mxu0 0
        %1742 = vmatpush1.bf16.msra.mxu0 0
        %1743 = vmatprep.subr.bf16.mxu0 0
        %1744 = vmatpush1.bf16.msra.mxu0 0
        %1745 = vmatprep.subr.bf16.mxu0 0
        %1746 = vmatpush1.bf16.msra.mxu0 0
        %1747 = vmatprep.subr.bf16.mxu0 0
        %1748 = vmatpush1.bf16.msra.mxu0 0
        %1749 = vmatprep.subr.bf16.mxu0 0
        %1750 = vmatpush1.bf16.msra.mxu0 0
        %1751 = vmatprep.subr.bf16.mxu0 0
        %1752 = vmatpush1.bf16.msra.mxu0 0
        %1753 = vmatprep.subr.bf16.mxu0 0
        %1754 = vmatpush1.bf16.msra.mxu0 0
        %1755 = vmatprep.subr.bf16.mxu0 0
        %1756 = vmatpush1.bf16.msra.mxu0 0
        %1757 = vmatprep.mubr.bf16.mxu0 0
        %1758 = vmatmul.mubr.bf16.gmra.mrb[0].mxu0 %v1720
        %v1759 = vpop.f32.mrb[0].mxu0
        %v1760 = vadd.f32 0.0, %v1759
        %v1761 = vpop.f32.mrb[0].mxu0
        %v1762 = vpop.f32.mrb[0].mxu0
        %v1763 = vadd.f32 0.0, %v1762
        %v1764 = vpop.f32.mrb[0].mxu0
        %1765 = vmatprep.mubr.bf16.mxu0 0
        %1766 = vmatmul.mubr.bf16.gmra.mrb[0].mxu0 %v1723
        %v1767 = vpop.f32.mrb[0].mxu0
        %v1768 = vadd.f32 0.0, %v1767
        %v1769 = vpop.f32.mrb[0].mxu0
        %v1770 = vpop.f32.mrb[0].mxu0
        %v1771 = vadd.f32 0.0, %v1770
        %v1772 = vpop.f32.mrb[0].mxu0
        %1773 = vdwg.mxu0
        %v1774 = vadd.f32 %v1695, %v1760
        %v1775 = vadd.f32 %v1698, %v1763
        %v1776 = vadd.f32 %v1703, %v1768
        %v1777 = vadd.f32 %v1706, %v1771
        %v1778 = vld [vmem:[#allocation19] sm:$0x1]
        %v1780 = vlaneseq
        %v1781 = vshrl.u32 %v1780, 7
        %v1782 = vsub.s32 0, %v1781
        %v1783 = vrot.slane %v1778, %v1782
        %v1785 = vadd.f32 %v1774, %v1783
        %v1786 = vadd.f32 %v1775, %v1783
        %v1787 = vadd.f32 %v1776, %v1783
        %v1788 = vadd.f32 %v1777, %v1783
        %vm1789 = vcmask 261120
        %v1790 = vsel %vm1789, %v1785, 0.0
        %v1791 = vsel %vm1789, %v1786, 0.0
        %v1792 = vadd.f32 %v1790, %v1791
        %v1793 = vsel %vm1789, %v1787, 0.0
        %v1794 = vadd.f32 %v1792, %v1793
        %v1795 = vsel %vm1789, %v1788, 0.0
        %v1796 = vadd.f32 %v1794, %v1795
        %v1797 = vrot.slane %v1796, 4
        %v1798 = vadd.f32 %v1796, %v1797
        %v1799 = vrot.slane %v1798, 2
        %v1800 = vadd.f32 %v1798, %v1799
        %v1801 = vrot.slane %v1800, 1
        %v1802 = vadd.f32 %v1800, %v1801
        %v1803 = vrcp.pop 32.0
        %v1804 = vmul.f32 %v1802, %v1803
        %v1805 = vsub.f32 %v1785, %v1804
        %v1806 = vsub.f32 %v1786, %v1804
        %v1807 = vsub.f32 %v1787, %v1804
        %v1808 = vsub.f32 %v1788, %v1804
        %v1809 = vmul.f32 %v1805, %v1805
        %v1810 = vmul.f32 %v1806, %v1806
        %v1811 = vmul.f32 %v1807, %v1807
        %v1812 = vmul.f32 %v1808, %v1808
        %v1813 = vsel %vm1789, %v1809, 0.0
        %v1814 = vsel %vm1789, %v1810, 0.0
        %v1815 = vadd.f32 %v1813, %v1814
        %v1816 = vsel %vm1789, %v1811, 0.0
        %v1817 = vadd.f32 %v1815, %v1816
        %v1818 = vsel %vm1789, %v1812, 0.0
        %v1819 = vadd.f32 %v1817, %v1818
        %v1820 = vrot.slane %v1819, 4
        %v1821 = vadd.f32 %v1819, %v1820
        %v1822 = vrot.slane %v1821, 2
        %v1823 = vadd.f32 %v1821, %v1822
        %v1824 = vrot.slane %v1823, 1
        %v1825 = vadd.f32 %v1823, %v1824
        %v1826 = vmul.f32 %v1825, %v1803
        %v1827 = vadd.f32 %v1826, 1e-05
        %v1828 = vrsqrt.pop %v1827
        %v1829 = vmul.f32 %v1805, %v1828
        %v1830 = vmul.f32 %v1806, %v1828
        %v1831 = vmul.f32 %v1807, %v1828
        %v1832 = vmul.f32 %v1808, %v1828
        %v1833 = vmax.f32 %v1829, 0.0
        %v1834 = vmax.f32 %v1830, 0.0
        %v1835 = vmax.f32 %v1831, 0.0
        %v1836 = vmax.f32 %v1832, 0.0
        %1837 = vst.msk [vmem:[#allocation3] sm:$0xff] %vm1789, %v1833
        %1838 = vst.msk [vmem:[#allocation3 + $0x8] sm:$0xff] %vm1789, %v1834
        %1839 = vst.msk [vmem:[#allocation3 + $0x10] sm:$0xff] %vm1789, %v1835
        %1840 = vst.msk [vmem:[#allocation3 + $0x18] sm:$0xff] %vm1789, %v1836
        %v1841 = vld [vmem:[#allocation3] ss:$2 sm:$0xff]
        %s1842 = scalar_lea.vmem [#allocation3], 16
        %v1843 = vld [vmem:[%s1842] ss:$2 sm:$0xff]
        %s1844 = scalar_lea.vmem [#allocation3], 1
        %v1845 = vld [vmem:[%s1844] ss:$2 sm:$0xff]
        %s1846 = scalar_lea.vmem [#allocation3], 17
        %v1847 = vld [vmem:[%s1846] ss:$2 sm:$0xff]
        %v1848 = vmax.f32 %v1841, %v1845
        %v1849 = vmax.f32 %v1843, %v1847
        %v1852 = vrot.slane %v1848, 7
        %v1853 = vrot.slane %v1849, 7
        %v1854 = vsel %vm1234, %v1852, %v1853
        %v1857 = vsel %vm1234, 0.0, %v1852
        %v1858 = vrot.slane %v1848, 1
        %v1859 = vrot.slane %v1849, 1
        %v1860 = vsel %vm1252, %v1858, %v1859
        %v1863 = vsel %vm1252, %v1859, 0.0
        %v1864 = vpack.c.bf16 %v1854, %v1857
        %v1865 = vld [vmem:[%s19] sm:$0xf]
        %v1866 = vld [vmem:[%s19 + $0x4] sm:$0xf]
        %v1867 = vld [vmem:[%s19 + $0x8] sm:$0xf]
        %v1868 = vld [vmem:[%s19 + $0xc] sm:$0xf]
        %v1869 = vpack.c.bf16 %v1849, %v1848
        %v1870 = vld [vmem:[%s21] sm:$0xf]
        %v1871 = vld [vmem:[%s21 + $0x4] sm:$0xf]
        %v1872 = vld [vmem:[%s21 + $0x8] sm:$0xf]
        %v1873 = vld [vmem:[%s21 + $0xc] sm:$0xf]
        %v1878 = vunpack.c.l.b16 %v1870
        %v1879 = vunpack.c.l.b16 %v1871
        %v1880 = vunpack.c.l.b16 %v1872
        %v1881 = vunpack.c.l.b16 %v1873
        %v1882 = vpack.c.b16 %v1879, %v1878
        %v1883 = vpack.c.b16 %v1881, %v1880
        %v1887 = vsel %vm1789, %v1869, 0
        %1889 = vmatprep.subr.bf16.mxu0 0
        %1890 = vmatpush1.bf16.msra.mxu0 %v1882
        %1891 = vmatprep.subr.bf16.mxu0 0
        %1892 = vmatpush1.bf16.msra.mxu0 %v1883
        %1893 = vmatprep.subr.bf16.mxu0 0
        %1894 = vmatpush1.bf16.msra.mxu0 0
        %1895 = vmatprep.subr.bf16.mxu0 0
        %1896 = vmatpush1.bf16.msra.mxu0 0
        %1897 = vmatprep.subr.bf16.mxu0 0
        %1898 = vmatpush1.bf16.msra.mxu0 0
        %1899 = vmatprep.subr.bf16.mxu0 0
        %1900 = vmatpush1.bf16.msra.mxu0 0
        %1901 = vmatprep.subr.bf16.mxu0 0
        %1902 = vmatpush1.bf16.msra.mxu0 0
        %1903 = vmatprep.subr.bf16.mxu0 0
        %1904 = vmatpush1.bf16.msra.mxu0 0
        %1905 = vmatprep.subr.bf16.mxu0 0
        %1906 = vmatpush1.bf16.msra.mxu0 0
        %1907 = vmatprep.subr.bf16.mxu0 0
        %1908 = vmatpush1.bf16.msra.mxu0 0
        %1909 = vmatprep.subr.bf16.mxu0 0
        %1910 = vmatpush1.bf16.msra.mxu0 0
        %1911 = vmatprep.subr.bf16.mxu0 0
        %1912 = vmatpush1.bf16.msra.mxu0 0
        %1913 = vmatprep.subr.bf16.mxu0 0
        %1914 = vmatpush1.bf16.msra.mxu0 0
        %1915 = vmatprep.subr.bf16.mxu0 0
        %1916 = vmatpush1.bf16.msra.mxu0 0
        %1917 = vmatprep.subr.bf16.mxu0 0
        %1918 = vmatpush1.bf16.msra.mxu0 0
        %1919 = vmatprep.subr.bf16.mxu0 0
        %1920 = vmatpush1.bf16.msra.mxu0 0
        %1921 = vmatprep.mubr.bf16.mxu0 0
        %1922 = vmatmul.mubr.bf16.gmra.mrb[0].mxu0 %v1887
        %v1923 = vpop.f32.mrb[0].mxu0
        %v1924 = vadd.f32 0.0, %v1923
        %v1925 = vpop.f32.mrb[0].mxu0
        %v1926 = vpop.f32.mrb[0].mxu0
        %v1927 = vadd.f32 0.0, %v1926
        %v1928 = vpop.f32.mrb[0].mxu0
        %1929 = vdwg.mxu0
        %v1934 = vunpack.c.l.b16 %v1865
        %v1935 = vunpack.c.l.b16 %v1866
        %v1936 = vunpack.c.l.b16 %v1867
        %v1937 = vunpack.c.l.b16 %v1868
        %v1938 = vpack.c.b16 %v1935, %v1934
        %v1939 = vpack.c.b16 %v1937, %v1936
        %v1943 = vsel %vm1789, %v1864, 0
        %1945 = vmatprep.subr.bf16.mxu0 0
        %1946 = vmatpush1.bf16.msra.mxu0 %v1938
        %1947 = vmatprep.subr.bf16.mxu0 0
        %1948 = vmatpush1.bf16.msra.mxu0 %v1939
        %1949 = vmatprep.subr.bf16.mxu0 0
        %1950 = vmatpush1.bf16.msra.mxu0 0
        %1951 = vmatprep.subr.bf16.mxu0 0
        %1952 = vmatpush1.bf16.msra.mxu0 0
        %1953 = vmatprep.subr.bf16.mxu0 0
        %1954 = vmatpush1.bf16.msra.mxu0 0
        %1955 = vmatprep.subr.bf16.mxu0 0
        %1956 = vmatpush1.bf16.msra.mxu0 0
        %1957 = vmatprep.subr.bf16.mxu0 0
        %1958 = vmatpush1.bf16.msra.mxu0 0
        %1959 = vmatprep.subr.bf16.mxu0 0
        %1960 = vmatpush1.bf16.msra.mxu0 0
        %1961 = vmatprep.subr.bf16.mxu0 0
        %1962 = vmatpush1.bf16.msra.mxu0 0
        %1963 = vmatprep.subr.bf16.mxu0 0
        %1964 = vmatpush1.bf16.msra.mxu0 0
        %1965 = vmatprep.subr.bf16.mxu0 0
        %1966 = vmatpush1.bf16.msra.mxu0 0
        %1967 = vmatprep.subr.bf16.mxu0 0
        %1968 = vmatpush1.bf16.msra.mxu0 0
        %1969 = vmatprep.subr.bf16.mxu0 0
        %1970 = vmatpush1.bf16.msra.mxu0 0
        %1971 = vmatprep.subr.bf16.mxu0 0
        %1972 = vmatpush1.bf16.msra.mxu0 0
        %1973 = vmatprep.subr.bf16.mxu0 0
        %1974 = vmatpush1.bf16.msra.mxu0 0
        %1975 = vmatprep.subr.bf16.mxu0 0
        %1976 = vmatpush1.bf16.msra.mxu0 0
        %1977 = vmatprep.mubr.bf16.mxu0 0
        %1978 = vmatmul.mubr.bf16.gmra.mrb[0].mxu0 %v1943
        %v1979 = vpop.f32.mrb[0].mxu0
        %v1980 = vadd.f32 %v1924, %v1979
        %v1981 = vpop.f32.mrb[0].mxu0
        %v1982 = vpop.f32.mrb[0].mxu0
        %v1983 = vadd.f32 %v1927, %v1982
        %v1984 = vpop.f32.mrb[0].mxu0
        %1985 = vdwg.mxu0
        %v1986 = vpack.c.bf16 %v1863, %v1860
        %v1987 = vld [vmem:[%s23] sm:$0xf]
        %v1988 = vld [vmem:[%s23 + $0x4] sm:$0xf]
        %v1989 = vld [vmem:[%s23 + $0x8] sm:$0xf]
        %v1990 = vld [vmem:[%s23 + $0xc] sm:$0xf]
        %v1995 = vunpack.c.l.b16 %v1987
        %v1996 = vunpack.c.l.b16 %v1988
        %v1997 = vunpack.c.l.b16 %v1989
        %v1998 = vunpack.c.l.b16 %v1990
        %v1999 = vpack.c.b16 %v1996, %v1995
        %v2000 = vpack.c.b16 %v1998, %v1997
        %v2004 = vsel %vm1789, %v1986, 0
        %2006 = vmatprep.subr.bf16.mxu0 0
        %2007 = vmatpush1.bf16.msra.mxu0 %v1999
        %2008 = vmatprep.subr.bf16.mxu0 0
        %2009 = vmatpush1.bf16.msra.mxu0 %v2000
        %2010 = vmatprep.subr.bf16.mxu0 0
        %2011 = vmatpush1.bf16.msra.mxu0 0
        %2012 = vmatprep.subr.bf16.mxu0 0
        %2013 = vmatpush1.bf16.msra.mxu0 0
        %2014 = vmatprep.subr.bf16.mxu0 0
        %2015 = vmatpush1.bf16.msra.mxu0 0
        %2016 = vmatprep.subr.bf16.mxu0 0
        %2017 = vmatpush1.bf16.msra.mxu0 0
        %2018 = vmatprep.subr.bf16.mxu0 0
        %2019 = vmatpush1.bf16.msra.mxu0 0
        %2020 = vmatprep.subr.bf16.mxu0 0
        %2021 = vmatpush1.bf16.msra.mxu0 0
        %2022 = vmatprep.subr.bf16.mxu0 0
        %2023 = vmatpush1.bf16.msra.mxu0 0
        %2024 = vmatprep.subr.bf16.mxu0 0
        %2025 = vmatpush1.bf16.msra.mxu0 0
        %2026 = vmatprep.subr.bf16.mxu0 0
        %2027 = vmatpush1.bf16.msra.mxu0 0
        %2028 = vmatprep.subr.bf16.mxu0 0
        %2029 = vmatpush1.bf16.msra.mxu0 0
        %2030 = vmatprep.subr.bf16.mxu0 0
        %2031 = vmatpush1.bf16.msra.mxu0 0
        %2032 = vmatprep.subr.bf16.mxu0 0
        %2033 = vmatpush1.bf16.msra.mxu0 0
        %2034 = vmatprep.subr.bf16.mxu0 0
        %2035 = vmatpush1.bf16.msra.mxu0 0
        %2036 = vmatprep.subr.bf16.mxu0 0
        %2037 = vmatpush1.bf16.msra.mxu0 0
        %2038 = vmatprep.mubr.bf16.mxu0 0
        %2039 = vmatmul.mubr.bf16.gmra.mrb[0].mxu0 %v2004
        %v2040 = vpop.f32.mrb[0].mxu0
        %v2041 = vadd.f32 0.0, %v2040
        %v2042 = vpop.f32.mrb[0].mxu0
        %v2043 = vpop.f32.mrb[0].mxu0
        %v2044 = vadd.f32 0.0, %v2043
        %v2045 = vpop.f32.mrb[0].mxu0
        %2046 = vdwg.mxu0
        %v2047 = vadd.f32 %v1980, %v2041
        %v2048 = vadd.f32 %v1983, %v2044
        %v2049 = vld [vmem:[#allocation21] sm:$0x1]
        %v2051 = vlaneseq
        %v2052 = vshrl.u32 %v2051, 7
        %v2053 = vsub.s32 0, %v2052
        %v2054 = vrot.slane %v2049, %v2053
        %v2056 = vadd.f32 %v2047, %v2054
        %v2057 = vadd.f32 %v2048, %v2054
        %vm2058 = vcmask 523264
        %v2059 = vsel %vm2058, %v2056, 0.0
        %v2060 = vsel %vm2058, %v2057, 0.0
        %v2061 = vadd.f32 %v2059, %v2060
        %v2062 = vrot.slane %v2061, 4
        %v2063 = vadd.f32 %v2061, %v2062
        %v2064 = vrot.slane %v2063, 2
        %v2065 = vadd.f32 %v2063, %v2064
        %v2066 = vrot.slane %v2065, 1
        %v2067 = vadd.f32 %v2065, %v2066
        %v2068 = vrcp.pop 16.0
        %v2069 = vmul.f32 %v2067, %v2068
        %v2070 = vsub.f32 %v2056, %v2069
        %v2071 = vsub.f32 %v2057, %v2069
        %v2072 = vmul.f32 %v2070, %v2070
        %v2073 = vmul.f32 %v2071, %v2071
        %v2074 = vsel %vm2058, %v2072, 0.0
        %v2075 = vsel %vm2058, %v2073, 0.0
        %v2076 = vadd.f32 %v2074, %v2075
        %v2077 = vrot.slane %v2076, 4
        %v2078 = vadd.f32 %v2076, %v2077
        %v2079 = vrot.slane %v2078, 2
        %v2080 = vadd.f32 %v2078, %v2079
        %v2081 = vrot.slane %v2080, 1
        %v2082 = vadd.f32 %v2080, %v2081
        %v2083 = vmul.f32 %v2082, %v2068
        %v2084 = vadd.f32 %v2083, 1e-05
        %v2085 = vrsqrt.pop %v2084
        %v2086 = vmul.f32 %v2070, %v2085
        %v2087 = vmul.f32 %v2071, %v2085
        %v2088 = vmax.f32 %v2086, 0.0
        %v2089 = vmax.f32 %v2087, 0.0
        %2090 = vst.msk [vmem:[#allocation4] sm:$0xff] %vm2058, %v2088
        %2091 = vst.msk [vmem:[#allocation4 + $0x8] sm:$0xff] %vm2058, %v2089
        %v2092 = vld [vmem:[#allocation4] ss:$2 sm:$0xff]
        %s2093 = scalar_lea.vmem [#allocation4], 1
        %v2094 = vld [vmem:[%s2093] ss:$2 sm:$0xff]
        %v2095 = vmax.f32 %v2092, %v2094
        %v2097 = vrot.slane %v2095, 7
        %v2099 = vsel %vm1234, 0.0, %v2097
        %v2100 = vrot.slane %v2095, 1
        %v2102 = vsel %vm1252, %v2100, 0.0
        %v2103 = vpack.c.bf16 %v2099, %v2099
        %v2104 = vld [vmem:[%s27] sm:$0xf]
        %v2105 = vld [vmem:[%s27 + $0x4] sm:$0xf]
        %v2106 = vld [vmem:[%s27 + $0x8] sm:$0xf]
        %v2107 = vld [vmem:[%s27 + $0xc] sm:$0xf]
        %v2108 = vld [vmem:[%s27 + $0x10] sm:$0xf]
        %v2109 = vld [vmem:[%s27 + $0x14] sm:$0xf]
        %v2110 = vld [vmem:[%s27 + $0x18] sm:$0xf]
        %v2111 = vld [vmem:[%s27 + $0x1c] sm:$0xf]
        %v2112 = vpack.c.bf16 %v2095, %v2095
        %v2113 = vld [vmem:[%s29] sm:$0xf]
        %v2114 = vld [vmem:[%s29 + $0x4] sm:$0xf]
        %v2115 = vld [vmem:[%s29 + $0x8] sm:$0xf]
        %v2116 = vld [vmem:[%s29 + $0xc] sm:$0xf]
        %v2117 = vld [vmem:[%s29 + $0x10] sm:$0xf]
        %v2118 = vld [vmem:[%s29 + $0x14] sm:$0xf]
        %v2119 = vld [vmem:[%s29 + $0x18] sm:$0xf]
        %v2120 = vld [vmem:[%s29 + $0x1c] sm:$0xf]
        %v2129 = vunpack.c.l.b16 %v2113
        %v2130 = vunpack.c.l.b16 %v2114
        %v2131 = vunpack.c.l.b16 %v2115
        %v2132 = vunpack.c.l.b16 %v2116
        %v2133 = vunpack.c.l.b16 %v2117
        %v2134 = vunpack.c.l.b16 %v2118
        %v2135 = vunpack.c.l.b16 %v2119
        %v2136 = vunpack.c.l.b16 %v2120
        %v2137 = vpack.c.b16 %v2130, %v2129
        %v2138 = vpack.c.b16 %v2132, %v2131
        %v2139 = vpack.c.b16 %v2134, %v2133
        %v2140 = vpack.c.b16 %v2136, %v2135
        %v2146 = vsel %vm2058, %v2112, 0
        %2148 = vmatprep.subr.bf16.mxu0 0
        %2149 = vmatpush1.bf16.msra.mxu0 %v2137
        %2150 = vmatprep.subr.bf16.mxu0 0
        %2151 = vmatpush1.bf16.msra.mxu0 %v2138
        %2152 = vmatprep.subr.bf16.mxu0 0
        %2153 = vmatpush1.bf16.msra.mxu0 %v2139
        %2154 = vmatprep.subr.bf16.mxu0 0
        %2155 = vmatpush1.bf16.msra.mxu0 %v2140
        %2156 = vmatprep.subr.bf16.mxu0 0
        %2157 = vmatpush1.bf16.msra.mxu0 0
        %2158 = vmatprep.subr.bf16.mxu0 0
        %2159 = vmatpush1.bf16.msra.mxu0 0
        %2160 = vmatprep.subr.bf16.mxu0 0
        %2161 = vmatpush1.bf16.msra.mxu0 0
        %2162 = vmatprep.subr.bf16.mxu0 0
        %2163 = vmatpush1.bf16.msra.mxu0 0
        %2164 = vmatprep.subr.bf16.mxu0 0
        %2165 = vmatpush1.bf16.msra.mxu0 0
        %2166 = vmatprep.subr.bf16.mxu0 0
        %2167 = vmatpush1.bf16.msra.mxu0 0
        %2168 = vmatprep.subr.bf16.mxu0 0
        %2169 = vmatpush1.bf16.msra.mxu0 0
        %2170 = vmatprep.subr.bf16.mxu0 0
        %2171 = vmatpush1.bf16.msra.mxu0 0
        %2172 = vmatprep.subr.bf16.mxu0 0
        %2173 = vmatpush1.bf16.msra.mxu0 0
        %2174 = vmatprep.subr.bf16.mxu0 0
        %2175 = vmatpush1.bf16.msra.mxu0 0
        %2176 = vmatprep.subr.bf16.mxu0 0
        %2177 = vmatpush1.bf16.msra.mxu0 0
        %2178 = vmatprep.subr.bf16.mxu0 0
        %2179 = vmatpush1.bf16.msra.mxu0 0
        %2180 = vmatprep.mubr.bf16.mxu0 0
        %2181 = vmatmul.mubr.bf16.gmra.mrb[0].mxu0 %v2146
        %v2182 = vpop.f32.mrb[0].mxu0
        %v2183 = vadd.f32 0.0, %v2182
        %v2184 = vpop.f32.mrb[0].mxu0
        %v2185 = vpop.f32.mrb[0].mxu0
        %v2186 = vpop.f32.mrb[0].mxu0
        %2187 = vdwg.mxu0
        %v2196 = vunpack.c.l.b16 %v2104
        %v2197 = vunpack.c.l.b16 %v2105
        %v2198 = vunpack.c.l.b16 %v2106
        %v2199 = vunpack.c.l.b16 %v2107
        %v2200 = vunpack.c.l.b16 %v2108
        %v2201 = vunpack.c.l.b16 %v2109
        %v2202 = vunpack.c.l.b16 %v2110
        %v2203 = vunpack.c.l.b16 %v2111
        %v2204 = vpack.c.b16 %v2197, %v2196
        %v2205 = vpack.c.b16 %v2199, %v2198
        %v2206 = vpack.c.b16 %v2201, %v2200
        %v2207 = vpack.c.b16 %v2203, %v2202
        %v2213 = vsel %vm2058, %v2103, 0
        %2215 = vmatprep.subr.bf16.mxu0 0
        %2216 = vmatpush1.bf16.msra.mxu0 %v2204
        %2217 = vmatprep.subr.bf16.mxu0 0
        %2218 = vmatpush1.bf16.msra.mxu0 %v2205
        %2219 = vmatprep.subr.bf16.mxu0 0
        %2220 = vmatpush1.bf16.msra.mxu0 %v2206
        %2221 = vmatprep.subr.bf16.mxu0 0
        %2222 = vmatpush1.bf16.msra.mxu0 %v2207
        %2223 = vmatprep.subr.bf16.mxu0 0
        %2224 = vmatpush1.bf16.msra.mxu0 0
        %2225 = vmatprep.subr.bf16.mxu0 0
        %2226 = vmatpush1.bf16.msra.mxu0 0
        %2227 = vmatprep.subr.bf16.mxu0 0
        %2228 = vmatpush1.bf16.msra.mxu0 0
        %2229 = vmatprep.subr.bf16.mxu0 0
        %2230 = vmatpush1.bf16.msra.mxu0 0
        %2231 = vmatprep.subr.bf16.mxu0 0
        %2232 = vmatpush1.bf16.msra.mxu0 0
        %2233 = vmatprep.subr.bf16.mxu0 0
        %2234 = vmatpush1.bf16.msra.mxu0 0
        %2235 = vmatprep.subr.bf16.mxu0 0
        %2236 = vmatpush1.bf16.msra.mxu0 0
        %2237 = vmatprep.subr.bf16.mxu0 0
        %2238 = vmatpush1.bf16.msra.mxu0 0
        %2239 = vmatprep.subr.bf16.mxu0 0
        %2240 = vmatpush1.bf16.msra.mxu0 0
        %2241 = vmatprep.subr.bf16.mxu0 0
        %2242 = vmatpush1.bf16.msra.mxu0 0
        %2243 = vmatprep.subr.bf16.mxu0 0
        %2244 = vmatpush1.bf16.msra.mxu0 0
        %2245 = vmatprep.subr.bf16.mxu0 0
        %2246 = vmatpush1.bf16.msra.mxu0 0
        %2247 = vmatprep.mubr.bf16.mxu0 0
        %2248 = vmatmul.mubr.bf16.gmra.mrb[0].mxu0 %v2213
        %v2249 = vpop.f32.mrb[0].mxu0
        %v2250 = vadd.f32 %v2183, %v2249
        %v2251 = vpop.f32.mrb[0].mxu0
        %v2252 = vpop.f32.mrb[0].mxu0
        %v2253 = vpop.f32.mrb[0].mxu0
        %2254 = vdwg.mxu0
        %v2255 = vpack.c.bf16 %v2102, %v2102
        %v2256 = vld [vmem:[%s31] sm:$0xf]
        %v2257 = vld [vmem:[%s31 + $0x4] sm:$0xf]
        %v2258 = vld [vmem:[%s31 + $0x8] sm:$0xf]
        %v2259 = vld [vmem:[%s31 + $0xc] sm:$0xf]
        %v2260 = vld [vmem:[%s31 + $0x10] sm:$0xf]
        %v2261 = vld [vmem:[%s31 + $0x14] sm:$0xf]
        %v2262 = vld [vmem:[%s31 + $0x18] sm:$0xf]
        %v2263 = vld [vmem:[%s31 + $0x1c] sm:$0xf]
        %v2272 = vunpack.c.l.b16 %v2256
        %v2273 = vunpack.c.l.b16 %v2257
        %v2274 = vunpack.c.l.b16 %v2258
        %v2275 = vunpack.c.l.b16 %v2259
        %v2276 = vunpack.c.l.b16 %v2260
        %v2277 = vunpack.c.l.b16 %v2261
        %v2278 = vunpack.c.l.b16 %v2262
        %v2279 = vunpack.c.l.b16 %v2263
        %v2280 = vpack.c.b16 %v2273, %v2272
        %v2281 = vpack.c.b16 %v2275, %v2274
        %v2282 = vpack.c.b16 %v2277, %v2276
        %v2283 = vpack.c.b16 %v2279, %v2278
        %v2289 = vsel %vm2058, %v2255, 0
        %2291 = vmatprep.subr.bf16.mxu0 0
        %2292 = vmatpush1.bf16.msra.mxu0 %v2280
        %2293 = vmatprep.subr.bf16.mxu0 0
        %2294 = vmatpush1.bf16.msra.mxu0 %v2281
        %2295 = vmatprep.subr.bf16.mxu0 0
        %2296 = vmatpush1.bf16.msra.mxu0 %v2282
        %2297 = vmatprep.subr.bf16.mxu0 0
        %2298 = vmatpush1.bf16.msra.mxu0 %v2283
        %2299 = vmatprep.subr.bf16.mxu0 0
        %2300 = vmatpush1.bf16.msra.mxu0 0
        %2301 = vmatprep.subr.bf16.mxu0 0
        %2302 = vmatpush1.bf16.msra.mxu0 0
        %2303 = vmatprep.subr.bf16.mxu0 0
        %2304 = vmatpush1.bf16.msra.mxu0 0
        %2305 = vmatprep.subr.bf16.mxu0 0
        %2306 = vmatpush1.bf16.msra.mxu0 0
        %2307 = vmatprep.subr.bf16.mxu0 0
        %2308 = vmatpush1.bf16.msra.mxu0 0
        %2309 = vmatprep.subr.bf16.mxu0 0
        %2310 = vmatpush1.bf16.msra.mxu0 0
        %2311 = vmatprep.subr.bf16.mxu0 0
        %2312 = vmatpush1.bf16.msra.mxu0 0
        %2313 = vmatprep.subr.bf16.mxu0 0
        %2314 = vmatpush1.bf16.msra.mxu0 0
        %2315 = vmatprep.subr.bf16.mxu0 0
        %2316 = vmatpush1.bf16.msra.mxu0 0
        %2317 = vmatprep.subr.bf16.mxu0 0
        %2318 = vmatpush1.bf16.msra.mxu0 0
        %2319 = vmatprep.subr.bf16.mxu0 0
        %2320 = vmatpush1.bf16.msra.mxu0 0
        %2321 = vmatprep.subr.bf16.mxu0 0
        %2322 = vmatpush1.bf16.msra.mxu0 0
        %2323 = vmatprep.mubr.bf16.mxu0 0
        %2324 = vmatmul.mubr.bf16.gmra.mrb[0].mxu0 %v2289
        %v2325 = vpop.f32.mrb[0].mxu0
        %v2326 = vadd.f32 0.0, %v2325
        %v2327 = vpop.f32.mrb[0].mxu0
        %v2328 = vpop.f32.mrb[0].mxu0
        %v2329 = vpop.f32.mrb[0].mxu0
        %2330 = vdwg.mxu0
        %v2331 = vadd.f32 %v2250, %v2326
        %v2332 = vld [vmem:[%s33] sm:$0x1]
        %v2334 = vlaneseq
        %v2335 = vshrl.u32 %v2334, 7
        %v2336 = vsub.s32 0, %v2335
        %v2337 = vrot.slane %v2332, %v2336
        %v2339 = vadd.f32 %v2331, %v2337
        %v2340 = vrot.slane %v2339, 4
        %v2341 = vadd.f32 %v2339, %v2340
        %v2342 = vrot.slane %v2341, 2
        %v2343 = vadd.f32 %v2341, %v2342
        %v2344 = vrot.slane %v2343, 1
        %v2345 = vadd.f32 %v2343, %v2344
        %v2346 = vrcp.pop 8.0
        %v2347 = vmul.f32 %v2345, %v2346
        %v2348 = vsub.f32 %v2339, %v2347
        %v2349 = vmul.f32 %v2348, %v2348
        %v2350 = vrot.slane %v2349, 4
        %v2351 = vadd.f32 %v2349, %v2350
        %v2352 = vrot.slane %v2351, 2
        %v2353 = vadd.f32 %v2351, %v2352
        %v2354 = vrot.slane %v2353, 1
        %v2355 = vadd.f32 %v2353, %v2354
        %v2356 = vmul.f32 %v2355, %v2346
        %v2357 = vadd.f32 %v2356, 1e-05
        %v2358 = vrsqrt.pop %v2357
        %v2359 = vmul.f32 %v2348, %v2358
        %v2360 = vmax.f32 %v2359, 0.0
        %2361 = vst [vmem:[#allocation5] sm:$0xff] %v2360
        %v2362 = vld [vmem:[#allocation5] ss:$2 sm:$0xf]
        %s2363 = scalar_lea.vmem [#allocation5], 1
        %v2364 = vld [vmem:[%s2363] ss:$2 sm:$0xf]
        %v2365 = vmax.f32 %v2362, %v2364
        %v2366 = vlaneseq
        %vm2367 = vcmp.ge.s32.totalorder %v2366, 0
        %vm2368 = vcmp.lt.s32.totalorder %v2366, 128
        %vm2369 = vmand %vm2367, %vm2368
        %2370 = vst.msk [vmem:[#allocation6] sm:$0x1] %vm2369, %v2365
        %v2373 = vunpack.c.l.s4 1966171168
        %v2374 = vunpack.c.0.s8 %v2373
        %v2375 = vlaneseq
        %v2376 = vshrl.u32 %v2375, 7
        %v2377 = vsub.s32 %v2374, %v2376
        %v2378 = vrot.slane %v2365, %v2377
        %v2379 = vcombine.high %v2378, %v2378
        %v2381 = vunpack.c.l.s4 1966171168
        %v2382 = vunpack.c.0.s8 %v2381
        %v2383 = vlaneseq
        %v2384 = vshrl.u32 %v2383, 7
        %v2385 = vsub.s32 %v2382, %v2384
        %v2386 = vrot.slane %v2378, %v2385
        %v2388 = vunpack.c.l.s4 1966171168
        %v2389 = vunpack.c.0.s8 %v2388
        %v2390 = vlaneseq
        %v2391 = vshrl.u32 %v2390, 7
        %v2392 = vsub.s32 %v2389, %v2391
        %v2393 = vrot.slane %v2379, %v2392
        %2395 = vst.msk [vmem:[#allocation6 + $0x1] sm:$0x1] %vm2369, %v2393
        %v2396 = vcombine.high %v2386, %v2386
        %2398 = vst.msk [vmem:[#allocation6 + $0x2] sm:$0x1] %vm2369, %v2396
        %v2399 = vcombine.high %v2393, %v2393
        %2401 = vst.msk [vmem:[#allocation6 + $0x3] sm:$0x1] %vm2369, %v2399
        %v2402 = vld [vmem:[#allocation6] sm:$0xf]
        %v2404 = vlaneseq
        %v2405 = vshrl.u32 %v2404, 7
        %v2406 = vsub.s32 0, %v2405
        %v2407 = vrot.slane %v2402, %v2406
        %v2408 = vlaneseq
        %v2409 = vshrl.u32 %v2408, 7
        %v2410 = vsub.s32 1, %v2409
        %v2411 = vrot.slane %v2402, %v2410
        %v2412 = vlaneseq
        %v2413 = vshrl.u32 %v2412, 7
        %v2414 = vsub.s32 2, %v2413
        %v2415 = vrot.slane %v2402, %v2414
        %v2416 = vlaneseq
        %v2417 = vshrl.u32 %v2416, 7
        %v2418 = vsub.s32 3, %v2417
        %v2419 = vrot.slane %v2402, %v2418
        %v2424 = vpack.c.bf16 %v2407, %v2407
        %v2425 = vpack.c.bf16 %v2411, %v2411
        %v2426 = vpack.c.bf16 %v2415, %v2415
        %v2427 = vpack.c.bf16 %v2419, %v2419
        %v2428 = vld [vmem:[#allocation22] sm:$0xff]
        %v2429 = vld [vmem:[#allocation22 + $0x8] sm:$0xff]
        %v2430 = vld [vmem:[#allocation22 + $0x10] sm:$0xff]
        %v2431 = vld [vmem:[#allocation22 + $0x18] sm:$0xff]
        %v2432 = vld [vmem:[#allocation22 + $0x20] sm:$0xff]
        %v2433 = vld [vmem:[#allocation22 + $0x28] sm:$0xff]
        %v2434 = vld [vmem:[#allocation22 + $0x30] sm:$0xff]
        %v2435 = vld [vmem:[#allocation22 + $0x38] sm:$0xff]
        %v2436 = vld [vmem:[#allocation22 + $0x40] sm:$0xff]
        %v2437 = vld [vmem:[#allocation22 + $0x48] sm:$0xff]
        %v2438 = vld [vmem:[#allocation22 + $0x50] sm:$0xff]
        %v2439 = vld [vmem:[#allocation22 + $0x58] sm:$0xff]
        %v2440 = vld [vmem:[#allocation22 + $0x60] sm:$0xff]
        %v2441 = vld [vmem:[#allocation22 + $0x68] sm:$0xff]
        %v2442 = vld [vmem:[#allocation22 + $0x70] sm:$0xff]
        %v2443 = vld [vmem:[#allocation22 + $0x78] sm:$0xff]
        %v2444 = vld [vmem:[#allocation22 + $0x80] sm:$0xff]
        %v2445 = vld [vmem:[#allocation22 + $0x88] sm:$0xff]
        %v2446 = vld [vmem:[#allocation22 + $0x90] sm:$0xff]
        %v2447 = vld [vmem:[#allocation22 + $0x98] sm:$0xff]
        %v2448 = vld [vmem:[#allocation22 + $0xa0] sm:$0xff]
        %v2449 = vld [vmem:[#allocation22 + $0xa8] sm:$0xff]
        %v2450 = vld [vmem:[#allocation22 + $0xb0] sm:$0xff]
        %v2451 = vld [vmem:[#allocation22 + $0xb8] sm:$0xff]
        %v2452 = vld [vmem:[#allocation22 + $0xc0] sm:$0xff]
        %v2453 = vld [vmem:[#allocation22 + $0xc8] sm:$0xff]
        %v2454 = vld [vmem:[#allocation22 + $0xd0] sm:$0xff]
        %v2455 = vld [vmem:[#allocation22 + $0xd8] sm:$0xff]
        %v2456 = vld [vmem:[#allocation22 + $0xe0] sm:$0xff]
        %v2457 = vld [vmem:[#allocation22 + $0xe8] sm:$0xff]
        %v2458 = vld [vmem:[#allocation22 + $0xf0] sm:$0xff]
        %v2459 = vld [vmem:[#allocation22 + $0xf8] sm:$0xff]
        %v2460 = vld [vmem:[#allocation22 + $0x100] sm:$0xff]
        %v2461 = vld [vmem:[#allocation22 + $0x108] sm:$0xff]
        %v2462 = vld [vmem:[#allocation22 + $0x110] sm:$0xff]
        %v2463 = vld [vmem:[#allocation22 + $0x118] sm:$0xff]
        %v2464 = vld [vmem:[#allocation22 + $0x120] sm:$0xff]
        %v2465 = vld [vmem:[#allocation22 + $0x128] sm:$0xff]
        %v2466 = vld [vmem:[#allocation22 + $0x130] sm:$0xff]
        %v2467 = vld [vmem:[#allocation22 + $0x138] sm:$0xff]
        %v2468 = vld [vmem:[#allocation22 + $0x140] sm:$0xff]
        %v2469 = vld [vmem:[#allocation22 + $0x148] sm:$0xff]
        %v2470 = vld [vmem:[#allocation22 + $0x150] sm:$0xff]
        %v2471 = vld [vmem:[#allocation22 + $0x158] sm:$0xff]
        %v2472 = vld [vmem:[#allocation22 + $0x160] sm:$0xff]
        %v2473 = vld [vmem:[#allocation22 + $0x168] sm:$0xff]
        %v2474 = vld [vmem:[#allocation22 + $0x170] sm:$0xff]
        %v2475 = vld [vmem:[#allocation22 + $0x178] sm:$0xff]
        %v2476 = vld [vmem:[#allocation22 + $0x180] sm:$0xff]
        %v2477 = vld [vmem:[#allocation22 + $0x188] sm:$0xff]
        %v2478 = vld [vmem:[#allocation22 + $0x190] sm:$0xff]
        %v2479 = vld [vmem:[#allocation22 + $0x198] sm:$0xff]
        %v2480 = vld [vmem:[#allocation22 + $0x1a0] sm:$0xff]
        %v2481 = vld [vmem:[#allocation22 + $0x1a8] sm:$0xff]
        %v2482 = vld [vmem:[#allocation22 + $0x1b0] sm:$0xff]
        %v2483 = vld [vmem:[#allocation22 + $0x1b8] sm:$0xff]
        %v2484 = vld [vmem:[#allocation22 + $0x1c0] sm:$0xff]
        %v2485 = vld [vmem:[#allocation22 + $0x1c8] sm:$0xff]
        %v2486 = vld [vmem:[#allocation22 + $0x1d0] sm:$0xff]
        %v2487 = vld [vmem:[#allocation22 + $0x1d8] sm:$0xff]
        %v2488 = vld [vmem:[#allocation22 + $0x1e0] sm:$0xff]
        %v2489 = vld [vmem:[#allocation22 + $0x1e8] sm:$0xff]
        %v2490 = vld [vmem:[#allocation22 + $0x1f0] sm:$0xff]
        %v2491 = vld [vmem:[#allocation22 + $0x1f8] sm:$0xff]
        %v2492 = vld [vmem:[#allocation22 + $0x200] sm:$0xff]
        %v2493 = vld [vmem:[#allocation22 + $0x208] sm:$0xff]
        %v2494 = vld [vmem:[#allocation22 + $0x210] sm:$0xff]
        %v2495 = vld [vmem:[#allocation22 + $0x218] sm:$0xff]
        %v2496 = vld [vmem:[#allocation22 + $0x220] sm:$0xff]
        %v2497 = vld [vmem:[#allocation22 + $0x228] sm:$0xff]
        %v2498 = vld [vmem:[#allocation22 + $0x230] sm:$0xff]
        %v2499 = vld [vmem:[#allocation22 + $0x238] sm:$0xff]
        %v2500 = vld [vmem:[#allocation22 + $0x240] sm:$0xff]
        %v2501 = vld [vmem:[#allocation22 + $0x248] sm:$0xff]
        %v2502 = vld [vmem:[#allocation22 + $0x250] sm:$0xff]
        %v2503 = vld [vmem:[#allocation22 + $0x258] sm:$0xff]
        %v2504 = vld [vmem:[#allocation22 + $0x260] sm:$0xff]
        %v2505 = vld [vmem:[#allocation22 + $0x268] sm:$0xff]
        %v2506 = vld [vmem:[#allocation22 + $0x270] sm:$0xff]
        %v2507 = vld [vmem:[#allocation22 + $0x278] sm:$0xff]
        %v2508 = vld [vmem:[#allocation22 + $0x280] sm:$0xff]
        %v2509 = vld [vmem:[#allocation22 + $0x288] sm:$0xff]
        %v2510 = vld [vmem:[#allocation22 + $0x290] sm:$0xff]
        %v2511 = vld [vmem:[#allocation22 + $0x298] sm:$0xff]
        %v2512 = vld [vmem:[#allocation22 + $0x2a0] sm:$0xff]
        %v2513 = vld [vmem:[#allocation22 + $0x2a8] sm:$0xff]
        %v2514 = vld [vmem:[#allocation22 + $0x2b0] sm:$0xff]
        %v2515 = vld [vmem:[#allocation22 + $0x2b8] sm:$0xff]
        %v2516 = vld [vmem:[#allocation22 + $0x2c0] sm:$0xff]
        %v2517 = vld [vmem:[#allocation22 + $0x2c8] sm:$0xff]
        %v2518 = vld [vmem:[#allocation22 + $0x2d0] sm:$0xff]
        %v2519 = vld [vmem:[#allocation22 + $0x2d8] sm:$0xff]
        %v2520 = vld [vmem:[#allocation22 + $0x2e0] sm:$0xff]
        %v2521 = vld [vmem:[#allocation22 + $0x2e8] sm:$0xff]
        %v2522 = vld [vmem:[#allocation22 + $0x2f0] sm:$0xff]
        %v2523 = vld [vmem:[#allocation22 + $0x2f8] sm:$0xff]
        %v2524 = vld [vmem:[#allocation22 + $0x300] sm:$0xff]
        %v2525 = vld [vmem:[#allocation22 + $0x308] sm:$0xff]
        %v2526 = vld [vmem:[#allocation22 + $0x310] sm:$0xff]
        %v2527 = vld [vmem:[#allocation22 + $0x318] sm:$0xff]
        %v2528 = vld [vmem:[#allocation22 + $0x320] sm:$0xff]
        %v2529 = vld [vmem:[#allocation22 + $0x328] sm:$0xff]
        %v2530 = vld [vmem:[#allocation22 + $0x330] sm:$0xff]
        %v2531 = vld [vmem:[#allocation22 + $0x338] sm:$0xff]
        %v2532 = vld [vmem:[#allocation22 + $0x340] sm:$0xff]
        %v2533 = vld [vmem:[#allocation22 + $0x348] sm:$0xff]
        %v2534 = vld [vmem:[#allocation22 + $0x350] sm:$0xff]
        %v2535 = vld [vmem:[#allocation22 + $0x358] sm:$0xff]
        %v2536 = vld [vmem:[#allocation22 + $0x360] sm:$0xff]
        %v2537 = vld [vmem:[#allocation22 + $0x368] sm:$0xff]
        %v2538 = vld [vmem:[#allocation22 + $0x370] sm:$0xff]
        %v2539 = vld [vmem:[#allocation22 + $0x378] sm:$0xff]
        %v2540 = vld [vmem:[#allocation22 + $0x380] sm:$0xff]
        %v2541 = vld [vmem:[#allocation22 + $0x388] sm:$0xff]
        %v2542 = vld [vmem:[#allocation22 + $0x390] sm:$0xff]
        %v2543 = vld [vmem:[#allocation22 + $0x398] sm:$0xff]
        %v2544 = vld [vmem:[#allocation22 + $0x3a0] sm:$0xff]
        %v2545 = vld [vmem:[#allocation22 + $0x3a8] sm:$0xff]
        %v2546 = vld [vmem:[#allocation22 + $0x3b0] sm:$0xff]
        %v2547 = vld [vmem:[#allocation22 + $0x3b8] sm:$0xff]
        %v2548 = vld [vmem:[#allocation22 + $0x3c0] sm:$0xff]
        %v2549 = vld [vmem:[#allocation22 + $0x3c8] sm:$0xff]
        %v2550 = vld [vmem:[#allocation22 + $0x3d0] sm:$0xff]
        %v2551 = vld [vmem:[#allocation22 + $0x3d8] sm:$0xff]
        %v2552 = vld [vmem:[#allocation22 + $0x3e0] sm:$0xff]
        %v2553 = vld [vmem:[#allocation22 + $0x3e8] sm:$0xff]
        %v2554 = vld [vmem:[#allocation22 + $0x3f0] sm:$0xff]
        %v2555 = vld [vmem:[#allocation22 + $0x3f8] sm:$0xff]
        %v2556 = vld [vmem:[%s37] sm:$0xf]
        %v2685 = vunpack.c.l.b16 %v2428
        %v2686 = vunpack.c.h.b16 %v2428
        %v2687 = vunpack.c.l.b16 %v2429
        %v2688 = vunpack.c.h.b16 %v2429
        %v2689 = vunpack.c.l.b16 %v2430
        %v2690 = vunpack.c.h.b16 %v2430
        %v2691 = vunpack.c.l.b16 %v2431
        %v2692 = vunpack.c.h.b16 %v2431
        %v2693 = vunpack.c.l.b16 %v2432
        %v2694 = vunpack.c.h.b16 %v2432
        %v2695 = vunpack.c.l.b16 %v2433
        %v2696 = vunpack.c.h.b16 %v2433
        %v2697 = vunpack.c.l.b16 %v2434
        %v2698 = vunpack.c.h.b16 %v2434
        %v2699 = vunpack.c.l.b16 %v2435
        %v2700 = vunpack.c.h.b16 %v2435
        %v2701 = vunpack.c.l.b16 %v2436
        %v2702 = vunpack.c.h.b16 %v2436
        %v2703 = vunpack.c.l.b16 %v2437
        %v2704 = vunpack.c.h.b16 %v2437
        %v2705 = vunpack.c.l.b16 %v2438
        %v2706 = vunpack.c.h.b16 %v2438
        %v2707 = vunpack.c.l.b16 %v2439
        %v2708 = vunpack.c.h.b16 %v2439
        %v2709 = vunpack.c.l.b16 %v2440
        %v2710 = vunpack.c.h.b16 %v2440
        %v2711 = vunpack.c.l.b16 %v2441
        %v2712 = vunpack.c.h.b16 %v2441
        %v2713 = vunpack.c.l.b16 %v2442
        %v2714 = vunpack.c.h.b16 %v2442
        %v2715 = vunpack.c.l.b16 %v2443
        %v2716 = vunpack.c.h.b16 %v2443
        %v2717 = vunpack.c.l.b16 %v2444
        %v2718 = vunpack.c.h.b16 %v2444
        %v2719 = vunpack.c.l.b16 %v2445
        %v2720 = vunpack.c.h.b16 %v2445
        %v2721 = vunpack.c.l.b16 %v2446
        %v2722 = vunpack.c.h.b16 %v2446
        %v2723 = vunpack.c.l.b16 %v2447
        %v2724 = vunpack.c.h.b16 %v2447
        %v2725 = vunpack.c.l.b16 %v2448
        %v2726 = vunpack.c.h.b16 %v2448
        %v2727 = vunpack.c.l.b16 %v2449
        %v2728 = vunpack.c.h.b16 %v2449
        %v2729 = vunpack.c.l.b16 %v2450
        %v2730 = vunpack.c.h.b16 %v2450
        %v2731 = vunpack.c.l.b16 %v2451
        %v2732 = vunpack.c.h.b16 %v2451
        %v2733 = vunpack.c.l.b16 %v2452
        %v2734 = vunpack.c.h.b16 %v2452
        %v2735 = vunpack.c.l.b16 %v2453
        %v2736 = vunpack.c.h.b16 %v2453
        %v2737 = vunpack.c.l.b16 %v2454
        %v2738 = vunpack.c.h.b16 %v2454
        %v2739 = vunpack.c.l.b16 %v2455
        %v2740 = vunpack.c.h.b16 %v2455
        %v2741 = vunpack.c.l.b16 %v2456
        %v2742 = vunpack.c.h.b16 %v2456
        %v2743 = vunpack.c.l.b16 %v2457
        %v2744 = vunpack.c.h.b16 %v2457
        %v2745 = vunpack.c.l.b16 %v2458
        %v2746 = vunpack.c.h.b16 %v2458
        %v2747 = vunpack.c.l.b16 %v2459
        %v2748 = vunpack.c.h.b16 %v2459
        %v2749 = vunpack.c.l.b16 %v2460
        %v2750 = vunpack.c.h.b16 %v2460
        %v2751 = vunpack.c.l.b16 %v2461
        %v2752 = vunpack.c.h.b16 %v2461
        %v2753 = vunpack.c.l.b16 %v2462
        %v2754 = vunpack.c.h.b16 %v2462
        %v2755 = vunpack.c.l.b16 %v2463
        %v2756 = vunpack.c.h.b16 %v2463
        %v2757 = vunpack.c.l.b16 %v2464
        %v2758 = vunpack.c.h.b16 %v2464
        %v2759 = vunpack.c.l.b16 %v2465
        %v2760 = vunpack.c.h.b16 %v2465
        %v2761 = vunpack.c.l.b16 %v2466
        %v2762 = vunpack.c.h.b16 %v2466
        %v2763 = vunpack.c.l.b16 %v2467
        %v2764 = vunpack.c.h.b16 %v2467
        %v2765 = vunpack.c.l.b16 %v2468
        %v2766 = vunpack.c.h.b16 %v2468
        %v2767 = vunpack.c.l.b16 %v2469
        %v2768 = vunpack.c.h.b16 %v2469
        %v2769 = vunpack.c.l.b16 %v2470
        %v2770 = vunpack.c.h.b16 %v2470
        %v2771 = vunpack.c.l.b16 %v2471
        %v2772 = vunpack.c.h.b16 %v2471
        %v2773 = vunpack.c.l.b16 %v2472
        %v2774 = vunpack.c.h.b16 %v2472
        %v2775 = vunpack.c.l.b16 %v2473
        %v2776 = vunpack.c.h.b16 %v2473
        %v2777 = vunpack.c.l.b16 %v2474
        %v2778 = vunpack.c.h.b16 %v2474
        %v2779 = vunpack.c.l.b16 %v2475
        %v2780 = vunpack.c.h.b16 %v2475
        %v2781 = vunpack.c.l.b16 %v2476
        %v2782 = vunpack.c.h.b16 %v2476
        %v2783 = vunpack.c.l.b16 %v2477
        %v2784 = vunpack.c.h.b16 %v2477
        %v2785 = vunpack.c.l.b16 %v2478
        %v2786 = vunpack.c.h.b16 %v2478
        %v2787 = vunpack.c.l.b16 %v2479
        %v2788 = vunpack.c.h.b16 %v2479
        %v2789 = vunpack.c.l.b16 %v2480
        %v2790 = vunpack.c.h.b16 %v2480
        %v2791 = vunpack.c.l.b16 %v2481
        %v2792 = vunpack.c.h.b16 %v2481
        %v2793 = vunpack.c.l.b16 %v2482
        %v2794 = vunpack.c.h.b16 %v2482
        %v2795 = vunpack.c.l.b16 %v2483
        %v2796 = vunpack.c.h.b16 %v2483
        %v2797 = vunpack.c.l.b16 %v2484
        %v2798 = vunpack.c.h.b16 %v2484
        %v2799 = vunpack.c.l.b16 %v2485
        %v2800 = vunpack.c.h.b16 %v2485
        %v2801 = vunpack.c.l.b16 %v2486
        %v2802 = vunpack.c.h.b16 %v2486
        %v2803 = vunpack.c.l.b16 %v2487
        %v2804 = vunpack.c.h.b16 %v2487
        %v2805 = vunpack.c.l.b16 %v2488
        %v2806 = vunpack.c.h.b16 %v2488
        %v2807 = vunpack.c.l.b16 %v2489
        %v2808 = vunpack.c.h.b16 %v2489
        %v2809 = vunpack.c.l.b16 %v2490
        %v2810 = vunpack.c.h.b16 %v2490
        %v2811 = vunpack.c.l.b16 %v2491
        %v2812 = vunpack.c.h.b16 %v2491
        %v2813 = vunpack.c.l.b16 %v2492
        %v2814 = vunpack.c.h.b16 %v2492
        %v2815 = vunpack.c.l.b16 %v2493
        %v2816 = vunpack.c.h.b16 %v2493
        %v2817 = vunpack.c.l.b16 %v2494
        %v2818 = vunpack.c.h.b16 %v2494
        %v2819 = vunpack.c.l.b16 %v2495
        %v2820 = vunpack.c.h.b16 %v2495
        %v2821 = vunpack.c.l.b16 %v2496
        %v2822 = vunpack.c.h.b16 %v2496
        %v2823 = vunpack.c.l.b16 %v2497
        %v2824 = vunpack.c.h.b16 %v2497
        %v2825 = vunpack.c.l.b16 %v2498
        %v2826 = vunpack.c.h.b16 %v2498
        %v2827 = vunpack.c.l.b16 %v2499
        %v2828 = vunpack.c.h.b16 %v2499
        %v2829 = vunpack.c.l.b16 %v2500
        %v2830 = vunpack.c.h.b16 %v2500
        %v2831 = vunpack.c.l.b16 %v2501
        %v2832 = vunpack.c.h.b16 %v2501
        %v2833 = vunpack.c.l.b16 %v2502
        %v2834 = vunpack.c.h.b16 %v2502
        %v2835 = vunpack.c.l.b16 %v2503
        %v2836 = vunpack.c.h.b16 %v2503
        %v2837 = vunpack.c.l.b16 %v2504
        %v2838 = vunpack.c.h.b16 %v2504
        %v2839 = vunpack.c.l.b16 %v2505
        %v2840 = vunpack.c.h.b16 %v2505
        %v2841 = vunpack.c.l.b16 %v2506
        %v2842 = vunpack.c.h.b16 %v2506
        %v2843 = vunpack.c.l.b16 %v2507
        %v2844 = vunpack.c.h.b16 %v2507
        %v2845 = vunpack.c.l.b16 %v2508
        %v2846 = vunpack.c.h.b16 %v2508
        %v2847 = vunpack.c.l.b16 %v2509
        %v2848 = vunpack.c.h.b16 %v2509
        %v2849 = vunpack.c.l.b16 %v2510
        %v2850 = vunpack.c.h.b16 %v2510
        %v2851 = vunpack.c.l.b16 %v2511
        %v2852 = vunpack.c.h.b16 %v2511
        %v2853 = vunpack.c.l.b16 %v2512
        %v2854 = vunpack.c.h.b16 %v2512
        %v2855 = vunpack.c.l.b16 %v2513
        %v2856 = vunpack.c.h.b16 %v2513
        %v2857 = vunpack.c.l.b16 %v2514
        %v2858 = vunpack.c.h.b16 %v2514
        %v2859 = vunpack.c.l.b16 %v2515
        %v2860 = vunpack.c.h.b16 %v2515
        %v2861 = vunpack.c.l.b16 %v2516
        %v2862 = vunpack.c.h.b16 %v2516
        %v2863 = vunpack.c.l.b16 %v2517
        %v2864 = vunpack.c.h.b16 %v2517
        %v2865 = vunpack.c.l.b16 %v2518
        %v2866 = vunpack.c.h.b16 %v2518
        %v2867 = vunpack.c.l.b16 %v2519
        %v2868 = vunpack.c.h.b16 %v2519
        %v2869 = vunpack.c.l.b16 %v2520
        %v2870 = vunpack.c.h.b16 %v2520
        %v2871 = vunpack.c.l.b16 %v2521
        %v2872 = vunpack.c.h.b16 %v2521
        %v2873 = vunpack.c.l.b16 %v2522
        %v2874 = vunpack.c.h.b16 %v2522
        %v2875 = vunpack.c.l.b16 %v2523
        %v2876 = vunpack.c.h.b16 %v2523
        %v2877 = vunpack.c.l.b16 %v2524
        %v2878 = vunpack.c.h.b16 %v2524
        %v2879 = vunpack.c.l.b16 %v2525
        %v2880 = vunpack.c.h.b16 %v2525
        %v2881 = vunpack.c.l.b16 %v2526
        %v2882 = vunpack.c.h.b16 %v2526
        %v2883 = vunpack.c.l.b16 %v2527
        %v2884 = vunpack.c.h.b16 %v2527
        %v2885 = vunpack.c.l.b16 %v2528
        %v2886 = vunpack.c.h.b16 %v2528
        %v2887 = vunpack.c.l.b16 %v2529
        %v2888 = vunpack.c.h.b16 %v2529
        %v2889 = vunpack.c.l.b16 %v2530
        %v2890 = vunpack.c.h.b16 %v2530
        %v2891 = vunpack.c.l.b16 %v2531
        %v2892 = vunpack.c.h.b16 %v2531
        %v2893 = vunpack.c.l.b16 %v2532
        %v2894 = vunpack.c.h.b16 %v2532
        %v2895 = vunpack.c.l.b16 %v2533
        %v2896 = vunpack.c.h.b16 %v2533
        %v2897 = vunpack.c.l.b16 %v2534
        %v2898 = vunpack.c.h.b16 %v2534
        %v2899 = vunpack.c.l.b16 %v2535
        %v2900 = vunpack.c.h.b16 %v2535
        %v2901 = vunpack.c.l.b16 %v2536
        %v2902 = vunpack.c.h.b16 %v2536
        %v2903 = vunpack.c.l.b16 %v2537
        %v2904 = vunpack.c.h.b16 %v2537
        %v2905 = vunpack.c.l.b16 %v2538
        %v2906 = vunpack.c.h.b16 %v2538
        %v2907 = vunpack.c.l.b16 %v2539
        %v2908 = vunpack.c.h.b16 %v2539
        %v2909 = vunpack.c.l.b16 %v2540
        %v2910 = vunpack.c.h.b16 %v2540
        %v2911 = vunpack.c.l.b16 %v2541
        %v2912 = vunpack.c.h.b16 %v2541
        %v2913 = vunpack.c.l.b16 %v2542
        %v2914 = vunpack.c.h.b16 %v2542
        %v2915 = vunpack.c.l.b16 %v2543
        %v2916 = vunpack.c.h.b16 %v2543
        %v2917 = vunpack.c.l.b16 %v2544
        %v2918 = vunpack.c.h.b16 %v2544
        %v2919 = vunpack.c.l.b16 %v2545
        %v2920 = vunpack.c.h.b16 %v2545
        %v2921 = vunpack.c.l.b16 %v2546
        %v2922 = vunpack.c.h.b16 %v2546
        %v2923 = vunpack.c.l.b16 %v2547
        %v2924 = vunpack.c.h.b16 %v2547
        %v2925 = vunpack.c.l.b16 %v2548
        %v2926 = vunpack.c.h.b16 %v2548
        %v2927 = vunpack.c.l.b16 %v2549
        %v2928 = vunpack.c.h.b16 %v2549
        %v2929 = vunpack.c.l.b16 %v2550
        %v2930 = vunpack.c.h.b16 %v2550
        %v2931 = vunpack.c.l.b16 %v2551
        %v2932 = vunpack.c.h.b16 %v2551
        %v2933 = vunpack.c.l.b16 %v2552
        %v2934 = vunpack.c.h.b16 %v2552
        %v2935 = vunpack.c.l.b16 %v2553
        %v2936 = vunpack.c.h.b16 %v2553
        %v2937 = vunpack.c.l.b16 %v2554
        %v2938 = vunpack.c.h.b16 %v2554
        %v2939 = vunpack.c.l.b16 %v2555
        %v2940 = vunpack.c.h.b16 %v2555
        %v2941 = vpack.c.b16 %v2689, %v2685
        %v2942 = vpack.c.b16 %v2690, %v2686
        %v2943 = vpack.c.b16 %v2691, %v2687
        %v2944 = vpack.c.b16 %v2692, %v2688
        %v2945 = vpack.c.b16 %v2697, %v2693
        %v2946 = vpack.c.b16 %v2698, %v2694
        %v2947 = vpack.c.b16 %v2699, %v2695
        %v2948 = vpack.c.b16 %v2700, %v2696
        %v2949 = vpack.c.b16 %v2705, %v2701
        %v2950 = vpack.c.b16 %v2706, %v2702
        %v2951 = vpack.c.b16 %v2707, %v2703
        %v2952 = vpack.c.b16 %v2708, %v2704
        %v2953 = vpack.c.b16 %v2713, %v2709
        %v2954 = vpack.c.b16 %v2714, %v2710
        %v2955 = vpack.c.b16 %v2715, %v2711
        %v2956 = vpack.c.b16 %v2716, %v2712
        %v2957 = vpack.c.b16 %v2721, %v2717
        %v2958 = vpack.c.b16 %v2722, %v2718
        %v2959 = vpack.c.b16 %v2723, %v2719
        %v2960 = vpack.c.b16 %v2724, %v2720
        %v2961 = vpack.c.b16 %v2729, %v2725
        %v2962 = vpack.c.b16 %v2730, %v2726
        %v2963 = vpack.c.b16 %v2731, %v2727
        %v2964 = vpack.c.b16 %v2732, %v2728
        %v2965 = vpack.c.b16 %v2737, %v2733
        %v2966 = vpack.c.b16 %v2738, %v2734
        %v2967 = vpack.c.b16 %v2739, %v2735
        %v2968 = vpack.c.b16 %v2740, %v2736
        %v2969 = vpack.c.b16 %v2745, %v2741
        %v2970 = vpack.c.b16 %v2746, %v2742
        %v2971 = vpack.c.b16 %v2747, %v2743
        %v2972 = vpack.c.b16 %v2748, %v2744
        %v2973 = vpack.c.b16 %v2753, %v2749
        %v2974 = vpack.c.b16 %v2754, %v2750
        %v2975 = vpack.c.b16 %v2755, %v2751
        %v2976 = vpack.c.b16 %v2756, %v2752
        %v2977 = vpack.c.b16 %v2761, %v2757
        %v2978 = vpack.c.b16 %v2762, %v2758
        %v2979 = vpack.c.b16 %v2763, %v2759
        %v2980 = vpack.c.b16 %v2764, %v2760
        %v2981 = vpack.c.b16 %v2769, %v2765
        %v2982 = vpack.c.b16 %v2770, %v2766
        %v2983 = vpack.c.b16 %v2771, %v2767
        %v2984 = vpack.c.b16 %v2772, %v2768
        %v2985 = vpack.c.b16 %v2777, %v2773
        %v2986 = vpack.c.b16 %v2778, %v2774
        %v2987 = vpack.c.b16 %v2779, %v2775
        %v2988 = vpack.c.b16 %v2780, %v2776
        %v2989 = vpack.c.b16 %v2785, %v2781
        %v2990 = vpack.c.b16 %v2786, %v2782
        %v2991 = vpack.c.b16 %v2787, %v2783
        %v2992 = vpack.c.b16 %v2788, %v2784
        %v2993 = vpack.c.b16 %v2793, %v2789
        %v2994 = vpack.c.b16 %v2794, %v2790
        %v2995 = vpack.c.b16 %v2795, %v2791
        %v2996 = vpack.c.b16 %v2796, %v2792
        %v2997 = vpack.c.b16 %v2801, %v2797
        %v2998 = vpack.c.b16 %v2802, %v2798
        %v2999 = vpack.c.b16 %v2803, %v2799
        %v3000 = vpack.c.b16 %v2804, %v2800
        %v3001 = vpack.c.b16 %v2809, %v2805
        %v3002 = vpack.c.b16 %v2810, %v2806
        %v3003 = vpack.c.b16 %v2811, %v2807
        %v3004 = vpack.c.b16 %v2812, %v2808
        %v3005 = vpack.c.b16 %v2817, %v2813
        %v3006 = vpack.c.b16 %v2818, %v2814
        %v3007 = vpack.c.b16 %v2819, %v2815
        %v3008 = vpack.c.b16 %v2820, %v2816
        %v3009 = vpack.c.b16 %v2825, %v2821
        %v3010 = vpack.c.b16 %v2826, %v2822
        %v3011 = vpack.c.b16 %v2827, %v2823
        %v3012 = vpack.c.b16 %v2828, %v2824
        %v3013 = vpack.c.b16 %v2833, %v2829
        %v3014 = vpack.c.b16 %v2834, %v2830
        %v3015 = vpack.c.b16 %v2835, %v2831
        %v3016 = vpack.c.b16 %v2836, %v2832
        %v3017 = vpack.c.b16 %v2841, %v2837
        %v3018 = vpack.c.b16 %v2842, %v2838
        %v3019 = vpack.c.b16 %v2843, %v2839
        %v3020 = vpack.c.b16 %v2844, %v2840
        %v3021 = vpack.c.b16 %v2849, %v2845
        %v3022 = vpack.c.b16 %v2850, %v2846
        %v3023 = vpack.c.b16 %v2851, %v2847
        %v3024 = vpack.c.b16 %v2852, %v2848
        %v3025 = vpack.c.b16 %v2857, %v2853
        %v3026 = vpack.c.b16 %v2858, %v2854
        %v3027 = vpack.c.b16 %v2859, %v2855
        %v3028 = vpack.c.b16 %v2860, %v2856
        %v3029 = vpack.c.b16 %v2865, %v2861
        %v3030 = vpack.c.b16 %v2866, %v2862
        %v3031 = vpack.c.b16 %v2867, %v2863
        %v3032 = vpack.c.b16 %v2868, %v2864
        %v3033 = vpack.c.b16 %v2873, %v2869
        %v3034 = vpack.c.b16 %v2874, %v2870
        %v3035 = vpack.c.b16 %v2875, %v2871
        %v3036 = vpack.c.b16 %v2876, %v2872
        %v3037 = vpack.c.b16 %v2881, %v2877
        %v3038 = vpack.c.b16 %v2882, %v2878
        %v3039 = vpack.c.b16 %v2883, %v2879
        %v3040 = vpack.c.b16 %v2884, %v2880
        %v3041 = vpack.c.b16 %v2889, %v2885
        %v3042 = vpack.c.b16 %v2890, %v2886
        %v3043 = vpack.c.b16 %v2891, %v2887
        %v3044 = vpack.c.b16 %v2892, %v2888
        %v3045 = vpack.c.b16 %v2897, %v2893
        %v3046 = vpack.c.b16 %v2898, %v2894
        %v3047 = vpack.c.b16 %v2899, %v2895
        %v3048 = vpack.c.b16 %v2900, %v2896
        %v3049 = vpack.c.b16 %v2905, %v2901
        %v3050 = vpack.c.b16 %v2906, %v2902
        %v3051 = vpack.c.b16 %v2907, %v2903
        %v3052 = vpack.c.b16 %v2908, %v2904
        %v3053 = vpack.c.b16 %v2913, %v2909
        %v3054 = vpack.c.b16 %v2914, %v2910
        %v3055 = vpack.c.b16 %v2915, %v2911
        %v3056 = vpack.c.b16 %v2916, %v2912
        %v3057 = vpack.c.b16 %v2921, %v2917
        %v3058 = vpack.c.b16 %v2922, %v2918
        %v3059 = vpack.c.b16 %v2923, %v2919
        %v3060 = vpack.c.b16 %v2924, %v2920
        %v3061 = vpack.c.b16 %v2929, %v2925
        %v3062 = vpack.c.b16 %v2930, %v2926
        %v3063 = vpack.c.b16 %v2931, %v2927
        %v3064 = vpack.c.b16 %v2932, %v2928
        %v3065 = vpack.c.b16 %v2937, %v2933
        %v3066 = vpack.c.b16 %v2938, %v2934
        %v3067 = vpack.c.b16 %v2939, %v2935
        %v3068 = vpack.c.b16 %v2940, %v2936
        %v3198 = vlaneseq
        %v3199 = vshrl.u32 %v3198, 7
        %v3200 = vsub.s32 0, %v3199
        %v3201 = vrot.slane %v2556, %v3200
        %v3202 = vlaneseq
        %v3203 = vshrl.u32 %v3202, 7
        %v3204 = vsub.s32 1, %v3203
        %v3205 = vrot.slane %v2556, %v3204
        %v3206 = vlaneseq
        %v3207 = vshrl.u32 %v3206, 7
        %v3208 = vsub.s32 2, %v3207
        %v3209 = vrot.slane %v2556, %v3208
        %v3210 = vlaneseq
        %v3211 = vshrl.u32 %v3210, 7
        %v3212 = vsub.s32 3, %v3211
        %v3213 = vrot.slane %v2556, %v3212
        %3218 = vmatprep.subr.bf16.mxu0 %v2942
        %3219 = vmatpush1.bf16.msra.mxu0 %v2941
        %3220 = vmatprep.subr.bf16.mxu0 %v2946
        %3221 = vmatpush1.bf16.msra.mxu0 %v2945
        %3222 = vmatprep.subr.bf16.mxu0 %v2950
        %3223 = vmatpush1.bf16.msra.mxu0 %v2949
        %3224 = vmatprep.subr.bf16.mxu0 %v2954
        %3225 = vmatpush1.bf16.msra.mxu0 %v2953
        %3226 = vmatprep.subr.bf16.mxu0 %v2958
        %3227 = vmatpush1.bf16.msra.mxu0 %v2957
        %3228 = vmatprep.subr.bf16.mxu0 %v2962
        %3229 = vmatpush1.bf16.msra.mxu0 %v2961
        %3230 = vmatprep.subr.bf16.mxu0 %v2966
        %3231 = vmatpush1.bf16.msra.mxu0 %v2965
        %3232 = vmatprep.subr.bf16.mxu0 %v2970
        %3233 = vmatpush1.bf16.msra.mxu0 %v2969
        %3234 = vmatprep.subr.bf16.mxu0 %v2974
        %3235 = vmatpush1.bf16.msra.mxu0 %v2973
        %3236 = vmatprep.subr.bf16.mxu0 %v2978
        %3237 = vmatpush1.bf16.msra.mxu0 %v2977
        %3238 = vmatprep.subr.bf16.mxu0 %v2982
        %3239 = vmatpush1.bf16.msra.mxu0 %v2981
        %3240 = vmatprep.subr.bf16.mxu0 %v2986
        %3241 = vmatpush1.bf16.msra.mxu0 %v2985
        %3242 = vmatprep.subr.bf16.mxu0 %v2990
        %3243 = vmatpush1.bf16.msra.mxu0 %v2989
        %3244 = vmatprep.subr.bf16.mxu0 %v2994
        %3245 = vmatpush1.bf16.msra.mxu0 %v2993
        %3246 = vmatprep.subr.bf16.mxu0 %v2998
        %3247 = vmatpush1.bf16.msra.mxu0 %v2997
        %3248 = vmatprep.subr.bf16.mxu0 %v3002
        %3249 = vmatpush1.bf16.msra.mxu0 %v3001
        %3250 = vmatprep.mubr.bf16.mxu0 %v2425
        %3251 = vmatmul.mubr.bf16.gmra.mrb[0].mxu0 %v2424
        %v3252 = vpop.f32.mrb[0].mxu0
        %v3253 = vadd.f32 %v3201, %v3252
        %v3254 = vpop.f32.mrb[0].mxu0
        %v3255 = vadd.f32 %v3205, %v3254
        %v3256 = vpop.f32.mrb[0].mxu0
        %v3257 = vpop.f32.mrb[0].mxu0
        %3258 = vdwg.mxu0
        %3259 = vmatprep.subr.bf16.mxu0 %v3006
        %3260 = vmatpush1.bf16.msra.mxu0 %v3005
        %3261 = vmatprep.subr.bf16.mxu0 %v3010
        %3262 = vmatpush1.bf16.msra.mxu0 %v3009
        %3263 = vmatprep.subr.bf16.mxu0 %v3014
        %3264 = vmatpush1.bf16.msra.mxu0 %v3013
        %3265 = vmatprep.subr.bf16.mxu0 %v3018
        %3266 = vmatpush1.bf16.msra.mxu0 %v3017
        %3267 = vmatprep.subr.bf16.mxu0 %v3022
        %3268 = vmatpush1.bf16.msra.mxu0 %v3021
        %3269 = vmatprep.subr.bf16.mxu0 %v3026
        %3270 = vmatpush1.bf16.msra.mxu0 %v3025
        %3271 = vmatprep.subr.bf16.mxu0 %v3030
        %3272 = vmatpush1.bf16.msra.mxu0 %v3029
        %3273 = vmatprep.subr.bf16.mxu0 %v3034
        %3274 = vmatpush1.bf16.msra.mxu0 %v3033
        %3275 = vmatprep.subr.bf16.mxu0 %v3038
        %3276 = vmatpush1.bf16.msra.mxu0 %v3037
        %3277 = vmatprep.subr.bf16.mxu0 %v3042
        %3278 = vmatpush1.bf16.msra.mxu0 %v3041
        %3279 = vmatprep.subr.bf16.mxu0 %v3046
        %3280 = vmatpush1.bf16.msra.mxu0 %v3045
        %3281 = vmatprep.subr.bf16.mxu0 %v3050
        %3282 = vmatpush1.bf16.msra.mxu0 %v3049
        %3283 = vmatprep.subr.bf16.mxu0 %v3054
        %3284 = vmatpush1.bf16.msra.mxu0 %v3053
        %3285 = vmatprep.subr.bf16.mxu0 %v3058
        %3286 = vmatpush1.bf16.msra.mxu0 %v3057
        %3287 = vmatprep.subr.bf16.mxu0 %v3062
        %3288 = vmatpush1.bf16.msra.mxu0 %v3061
        %3289 = vmatprep.subr.bf16.mxu0 %v3066
        %3290 = vmatpush1.bf16.msra.mxu0 %v3065
        %3291 = vmatprep.mubr.bf16.mxu0 %v2427
        %3292 = vmatmul.mubr.bf16.gmra.mrb[0].mxu0 %v2426
        %v3293 = vpop.f32.mrb[0].mxu0
        %v3294 = vadd.f32 %v3253, %v3293
        %v3295 = vpop.f32.mrb[0].mxu0
        %v3296 = vadd.f32 %v3255, %v3295
        %v3297 = vpop.f32.mrb[0].mxu0
        %v3298 = vpop.f32.mrb[0].mxu0
        %3299 = vdwg.mxu0
        %3300 = vmatprep.subr.bf16.mxu0 %v2944
        %3301 = vmatpush1.bf16.msra.mxu0 %v2943
        %3302 = vmatprep.subr.bf16.mxu0 %v2948
        %3303 = vmatpush1.bf16.msra.mxu0 %v2947
        %3304 = vmatprep.subr.bf16.mxu0 %v2952
        %3305 = vmatpush1.bf16.msra.mxu0 %v2951
        %3306 = vmatprep.subr.bf16.mxu0 %v2956
        %3307 = vmatpush1.bf16.msra.mxu0 %v2955
        %3308 = vmatprep.subr.bf16.mxu0 %v2960
        %3309 = vmatpush1.bf16.msra.mxu0 %v2959
        %3310 = vmatprep.subr.bf16.mxu0 %v2964
        %3311 = vmatpush1.bf16.msra.mxu0 %v2963
        %3312 = vmatprep.subr.bf16.mxu0 %v2968
        %3313 = vmatpush1.bf16.msra.mxu0 %v2967
        %3314 = vmatprep.subr.bf16.mxu0 %v2972
        %3315 = vmatpush1.bf16.msra.mxu0 %v2971
        %3316 = vmatprep.subr.bf16.mxu0 %v2976
        %3317 = vmatpush1.bf16.msra.mxu0 %v2975
        %3318 = vmatprep.subr.bf16.mxu0 %v2980
        %3319 = vmatpush1.bf16.msra.mxu0 %v2979
        %3320 = vmatprep.subr.bf16.mxu0 %v2984
        %3321 = vmatpush1.bf16.msra.mxu0 %v2983
        %3322 = vmatprep.subr.bf16.mxu0 %v2988
        %3323 = vmatpush1.bf16.msra.mxu0 %v2987
        %3324 = vmatprep.subr.bf16.mxu0 %v2992
        %3325 = vmatpush1.bf16.msra.mxu0 %v2991
        %3326 = vmatprep.subr.bf16.mxu0 %v2996
        %3327 = vmatpush1.bf16.msra.mxu0 %v2995
        %3328 = vmatprep.subr.bf16.mxu0 %v3000
        %3329 = vmatpush1.bf16.msra.mxu0 %v2999
        %3330 = vmatprep.subr.bf16.mxu0 %v3004
        %3331 = vmatpush1.bf16.msra.mxu0 %v3003
        %3332 = vmatprep.mubr.bf16.mxu0 %v2425
        %3333 = vmatmul.mubr.bf16.gmra.mrb[0].mxu0 %v2424
        %v3334 = vpop.f32.mrb[0].mxu0
        %v3335 = vadd.f32 %v3209, %v3334
        %v3336 = vpop.f32.mrb[0].mxu0
        %v3337 = vadd.f32 %v3213, %v3336
        %v3338 = vpop.f32.mrb[0].mxu0
        %v3339 = vpop.f32.mrb[0].mxu0
        %3340 = vdwg.mxu0
        %3341 = vmatprep.subr.bf16.mxu0 %v3008
        %3342 = vmatpush1.bf16.msra.mxu0 %v3007
        %3343 = vmatprep.subr.bf16.mxu0 %v3012
        %3344 = vmatpush1.bf16.msra.mxu0 %v3011
        %3345 = vmatprep.subr.bf16.mxu0 %v3016
        %3346 = vmatpush1.bf16.msra.mxu0 %v3015
        %3347 = vmatprep.subr.bf16.mxu0 %v3020
        %3348 = vmatpush1.bf16.msra.mxu0 %v3019
        %3349 = vmatprep.subr.bf16.mxu0 %v3024
        %3350 = vmatpush1.bf16.msra.mxu0 %v3023
        %3351 = vmatprep.subr.bf16.mxu0 %v3028
        %3352 = vmatpush1.bf16.msra.mxu0 %v3027
        %3353 = vmatprep.subr.bf16.mxu0 %v3032
        %3354 = vmatpush1.bf16.msra.mxu0 %v3031
        %3355 = vmatprep.subr.bf16.mxu0 %v3036
        %3356 = vmatpush1.bf16.msra.mxu0 %v3035
        %3357 = vmatprep.subr.bf16.mxu0 %v3040
        %3358 = vmatpush1.bf16.msra.mxu0 %v3039
        %3359 = vmatprep.subr.bf16.mxu0 %v3044
        %3360 = vmatpush1.bf16.msra.mxu0 %v3043
        %3361 = vmatprep.subr.bf16.mxu0 %v3048
        %3362 = vmatpush1.bf16.msra.mxu0 %v3047
        %3363 = vmatprep.subr.bf16.mxu0 %v3052
        %3364 = vmatpush1.bf16.msra.mxu0 %v3051
        %3365 = vmatprep.subr.bf16.mxu0 %v3056
        %3366 = vmatpush1.bf16.msra.mxu0 %v3055
        %3367 = vmatprep.subr.bf16.mxu0 %v3060
        %3368 = vmatpush1.bf16.msra.mxu0 %v3059
        %3369 = vmatprep.subr.bf16.mxu0 %v3064
        %3370 = vmatpush1.bf16.msra.mxu0 %v3063
        %3371 = vmatprep.subr.bf16.mxu0 %v3068
        %3372 = vmatpush1.bf16.msra.mxu0 %v3067
        %3373 = vmatprep.mubr.bf16.mxu0 %v2427
        %3374 = vmatmul.mubr.bf16.gmra.mrb[0].mxu0 %v2426
        %v3375 = vpop.f32.mrb[0].mxu0
        %v3376 = vadd.f32 %v3335, %v3375
        %v3377 = vpop.f32.mrb[0].mxu0
        %v3378 = vadd.f32 %v3337, %v3377
        %v3379 = vpop.f32.mrb[0].mxu0
        %v3380 = vpop.f32.mrb[0].mxu0
        %3381 = vdwg.mxu0
        %v3382 = vld [vmem:[%s39] sm:$0xf]
        %v3383 = vld [vmem:[%s41] sm:$0xf]
        %v3384 = vsel %vm1234, %v3294, 0.0
        %v3385 = vsel %vm1234, %v3296, 0.0
        %v3386 = vadd.f32 %v3384, %v3385
        %v3387 = vsel %vm1234, %v3376, 0.0
        %v3388 = vadd.f32 %v3386, %v3387
        %v3389 = vsel %vm1234, %v3378, 0.0
        %v3390 = vadd.f32 %v3388, %v3389
        %3391 = vadd.xlane.f32.xlu0 %v3390
        %v3392 = vpop.xlane.xlu0 %3391
        %v3393 = vrcp.pop 512.0
        %v3394 = vmul.f32 %v3392, %v3393
        %v3395 = vsub.f32 %v3294, %v3394
        %v3396 = vsub.f32 %v3296, %v3394
        %v3397 = vsub.f32 %v3376, %v3394
        %v3398 = vsub.f32 %v3378, %v3394
        %v3399 = vmul.f32 %v3395, %v3395
        %v3400 = vmul.f32 %v3396, %v3396
        %v3401 = vmul.f32 %v3397, %v3397
        %v3402 = vmul.f32 %v3398, %v3398
        %v3403 = vsel %vm1234, %v3399, 0.0
        %v3404 = vsel %vm1234, %v3400, 0.0
        %v3405 = vadd.f32 %v3403, %v3404
        %v3406 = vsel %vm1234, %v3401, 0.0
        %v3407 = vadd.f32 %v3405, %v3406
        %v3408 = vsel %vm1234, %v3402, 0.0
        %v3409 = vadd.f32 %v3407, %v3408
        %3410 = vadd.xlane.f32.xlu0 %v3409
        %v3411 = vpop.xlane.xlu0 %3410
        %v3412 = vmul.f32 %v3411, %v3393
        %v3413 = vadd.f32 %v3412, 1e-05
        %v3414 = vrsqrt.pop %v3413
        %v3415 = vmul.f32 %v3395, %v3414
        %v3416 = vmul.f32 %v3396, %v3414
        %v3417 = vmul.f32 %v3397, %v3414
        %v3418 = vmul.f32 %v3398, %v3414
        %v3420 = vlaneseq
        %v3421 = vshrl.u32 %v3420, 7
        %v3422 = vsub.s32 0, %v3421
        %v3423 = vrot.slane %v3382, %v3422
        %v3424 = vlaneseq
        %v3425 = vshrl.u32 %v3424, 7
        %v3426 = vsub.s32 1, %v3425
        %v3427 = vrot.slane %v3382, %v3426
        %v3428 = vlaneseq
        %v3429 = vshrl.u32 %v3428, 7
        %v3430 = vsub.s32 2, %v3429
        %v3431 = vrot.slane %v3382, %v3430
        %v3432 = vlaneseq
        %v3433 = vshrl.u32 %v3432, 7
        %v3434 = vsub.s32 3, %v3433
        %v3435 = vrot.slane %v3382, %v3434
        %v3440 = vmul.f32 %v3415, %v3423
        %v3441 = vmul.f32 %v3416, %v3427
        %v3442 = vmul.f32 %v3417, %v3431
        %v3443 = vmul.f32 %v3418, %v3435
        %v3445 = vlaneseq
        %v3446 = vshrl.u32 %v3445, 7
        %v3447 = vsub.s32 0, %v3446
        %v3448 = vrot.slane %v3383, %v3447
        %v3449 = vlaneseq
        %v3450 = vshrl.u32 %v3449, 7
        %v3451 = vsub.s32 1, %v3450
        %v3452 = vrot.slane %v3383, %v3451
        %v3453 = vlaneseq
        %v3454 = vshrl.u32 %v3453, 7
        %v3455 = vsub.s32 2, %v3454
        %v3456 = vrot.slane %v3383, %v3455
        %v3457 = vlaneseq
        %v3458 = vshrl.u32 %v3457, 7
        %v3459 = vsub.s32 3, %v3458
        %v3460 = vrot.slane %v3383, %v3459
        %v3465 = vadd.f32 %v3440, %v3448
        %v3466 = vadd.f32 %v3441, %v3452
        %v3467 = vadd.f32 %v3442, %v3456
        %v3468 = vadd.f32 %v3443, %v3460
        %v3469 = vmax.f32 %v3465, 0.0
        %v3470 = vmax.f32 %v3466, 0.0
        %v3471 = vmax.f32 %v3467, 0.0
        %v3472 = vmax.f32 %v3468, 0.0
        %v3473 = vpack.c.bf16 %v3469, %v3469
        %v3474 = vpack.c.bf16 %v3470, %v3470
        %v3475 = vpack.c.bf16 %v3471, %v3471
        %v3476 = vpack.c.bf16 %v3472, %v3472
        %v3477 = vld [vmem:[#allocation24] sm:$0xff]
        %v3478 = vld [vmem:[#allocation24 + $0x8] sm:$0xff]
        %v3479 = vld [vmem:[#allocation24 + $0x10] sm:$0xff]
        %v3480 = vld [vmem:[#allocation24 + $0x18] sm:$0xff]
        %v3481 = vld [vmem:[#allocation24 + $0x20] sm:$0xff]
        %v3482 = vld [vmem:[#allocation24 + $0x28] sm:$0xff]
        %v3483 = vld [vmem:[#allocation24 + $0x30] sm:$0xff]
        %v3484 = vld [vmem:[#allocation24 + $0x38] sm:$0xff]
        %v3485 = vld [vmem:[#allocation24 + $0x40] sm:$0xff]
        %v3486 = vld [vmem:[#allocation24 + $0x48] sm:$0xff]
        %v3487 = vld [vmem:[#allocation24 + $0x50] sm:$0xff]
        %v3488 = vld [vmem:[#allocation24 + $0x58] sm:$0xff]
        %v3489 = vld [vmem:[#allocation24 + $0x60] sm:$0xff]
        %v3490 = vld [vmem:[#allocation24 + $0x68] sm:$0xff]
        %v3491 = vld [vmem:[#allocation24 + $0x70] sm:$0xff]
        %v3492 = vld [vmem:[#allocation24 + $0x78] sm:$0xff]
        %v3493 = vld [vmem:[#allocation24 + $0x80] sm:$0xff]
        %v3494 = vld [vmem:[#allocation24 + $0x88] sm:$0xff]
        %v3495 = vld [vmem:[#allocation24 + $0x90] sm:$0xff]
        %v3496 = vld [vmem:[#allocation24 + $0x98] sm:$0xff]
        %v3497 = vld [vmem:[#allocation24 + $0xa0] sm:$0xff]
        %v3498 = vld [vmem:[#allocation24 + $0xa8] sm:$0xff]
        %v3499 = vld [vmem:[#allocation24 + $0xb0] sm:$0xff]
        %v3500 = vld [vmem:[#allocation24 + $0xb8] sm:$0xff]
        %v3501 = vld [vmem:[#allocation24 + $0xc0] sm:$0xff]
        %v3502 = vld [vmem:[#allocation24 + $0xc8] sm:$0xff]
        %v3503 = vld [vmem:[#allocation24 + $0xd0] sm:$0xff]
        %v3504 = vld [vmem:[#allocation24 + $0xd8] sm:$0xff]
        %v3505 = vld [vmem:[#allocation24 + $0xe0] sm:$0xff]
        %v3506 = vld [vmem:[#allocation24 + $0xe8] sm:$0xff]
        %v3507 = vld [vmem:[#allocation24 + $0xf0] sm:$0xff]
        %v3508 = vld [vmem:[#allocation24 + $0xf8] sm:$0xff]
        %v3509 = vld [vmem:[#allocation24 + $0x100] sm:$0xff]
        %v3510 = vld [vmem:[#allocation24 + $0x108] sm:$0xff]
        %v3511 = vld [vmem:[#allocation24 + $0x110] sm:$0xff]
        %v3512 = vld [vmem:[#allocation24 + $0x118] sm:$0xff]
        %v3513 = vld [vmem:[#allocation24 + $0x120] sm:$0xff]
        %v3514 = vld [vmem:[#allocation24 + $0x128] sm:$0xff]
        %v3515 = vld [vmem:[#allocation24 + $0x130] sm:$0xff]
        %v3516 = vld [vmem:[#allocation24 + $0x138] sm:$0xff]
        %v3517 = vld [vmem:[#allocation24 + $0x140] sm:$0xff]
        %v3518 = vld [vmem:[#allocation24 + $0x148] sm:$0xff]
        %v3519 = vld [vmem:[#allocation24 + $0x150] sm:$0xff]
        %v3520 = vld [vmem:[#allocation24 + $0x158] sm:$0xff]
        %v3521 = vld [vmem:[#allocation24 + $0x160] sm:$0xff]
        %v3522 = vld [vmem:[#allocation24 + $0x168] sm:$0xff]
        %v3523 = vld [vmem:[#allocation24 + $0x170] sm:$0xff]
        %v3524 = vld [vmem:[#allocation24 + $0x178] sm:$0xff]
        %v3525 = vld [vmem:[#allocation24 + $0x180] sm:$0xff]
        %v3526 = vld [vmem:[#allocation24 + $0x188] sm:$0xff]
        %v3527 = vld [vmem:[#allocation24 + $0x190] sm:$0xff]
        %v3528 = vld [vmem:[#allocation24 + $0x198] sm:$0xff]
        %v3529 = vld [vmem:[#allocation24 + $0x1a0] sm:$0xff]
        %v3530 = vld [vmem:[#allocation24 + $0x1a8] sm:$0xff]
        %v3531 = vld [vmem:[#allocation24 + $0x1b0] sm:$0xff]
        %v3532 = vld [vmem:[#allocation24 + $0x1b8] sm:$0xff]
        %v3533 = vld [vmem:[#allocation24 + $0x1c0] sm:$0xff]
        %v3534 = vld [vmem:[#allocation24 + $0x1c8] sm:$0xff]
        %v3535 = vld [vmem:[#allocation24 + $0x1d0] sm:$0xff]
        %v3536 = vld [vmem:[#allocation24 + $0x1d8] sm:$0xff]
        %v3537 = vld [vmem:[#allocation24 + $0x1e0] sm:$0xff]
        %v3538 = vld [vmem:[#allocation24 + $0x1e8] sm:$0xff]
        %v3539 = vld [vmem:[#allocation24 + $0x1f0] sm:$0xff]
        %v3540 = vld [vmem:[#allocation24 + $0x1f8] sm:$0xff]
        %v3541 = vld [vmem:[%s45] sm:$0x3]
        %v3606 = vunpack.c.l.b16 %v3477
        %v3607 = vunpack.c.h.b16 %v3477
        %v3608 = vunpack.c.l.b16 %v3478
        %v3609 = vunpack.c.h.b16 %v3478
        %v3610 = vunpack.c.l.b16 %v3479
        %v3611 = vunpack.c.h.b16 %v3479
        %v3612 = vunpack.c.l.b16 %v3480
        %v3613 = vunpack.c.h.b16 %v3480
        %v3614 = vunpack.c.l.b16 %v3481
        %v3615 = vunpack.c.h.b16 %v3481
        %v3616 = vunpack.c.l.b16 %v3482
        %v3617 = vunpack.c.h.b16 %v3482
        %v3618 = vunpack.c.l.b16 %v3483
        %v3619 = vunpack.c.h.b16 %v3483
        %v3620 = vunpack.c.l.b16 %v3484
        %v3621 = vunpack.c.h.b16 %v3484
        %v3622 = vunpack.c.l.b16 %v3485
        %v3623 = vunpack.c.h.b16 %v3485
        %v3624 = vunpack.c.l.b16 %v3486
        %v3625 = vunpack.c.h.b16 %v3486
        %v3626 = vunpack.c.l.b16 %v3487
        %v3627 = vunpack.c.h.b16 %v3487
        %v3628 = vunpack.c.l.b16 %v3488
        %v3629 = vunpack.c.h.b16 %v3488
        %v3630 = vunpack.c.l.b16 %v3489
        %v3631 = vunpack.c.h.b16 %v3489
        %v3632 = vunpack.c.l.b16 %v3490
        %v3633 = vunpack.c.h.b16 %v3490
        %v3634 = vunpack.c.l.b16 %v3491
        %v3635 = vunpack.c.h.b16 %v3491
        %v3636 = vunpack.c.l.b16 %v3492
        %v3637 = vunpack.c.h.b16 %v3492
        %v3638 = vunpack.c.l.b16 %v3493
        %v3639 = vunpack.c.h.b16 %v3493
        %v3640 = vunpack.c.l.b16 %v3494
        %v3641 = vunpack.c.h.b16 %v3494
        %v3642 = vunpack.c.l.b16 %v3495
        %v3643 = vunpack.c.h.b16 %v3495
        %v3644 = vunpack.c.l.b16 %v3496
        %v3645 = vunpack.c.h.b16 %v3496
        %v3646 = vunpack.c.l.b16 %v3497
        %v3647 = vunpack.c.h.b16 %v3497
        %v3648 = vunpack.c.l.b16 %v3498
        %v3649 = vunpack.c.h.b16 %v3498
        %v3650 = vunpack.c.l.b16 %v3499
        %v3651 = vunpack.c.h.b16 %v3499
        %v3652 = vunpack.c.l.b16 %v3500
        %v3653 = vunpack.c.h.b16 %v3500
        %v3654 = vunpack.c.l.b16 %v3501
        %v3655 = vunpack.c.h.b16 %v3501
        %v3656 = vunpack.c.l.b16 %v3502
        %v3657 = vunpack.c.h.b16 %v3502
        %v3658 = vunpack.c.l.b16 %v3503
        %v3659 = vunpack.c.h.b16 %v3503
        %v3660 = vunpack.c.l.b16 %v3504
        %v3661 = vunpack.c.h.b16 %v3504
        %v3662 = vunpack.c.l.b16 %v3505
        %v3663 = vunpack.c.h.b16 %v3505
        %v3664 = vunpack.c.l.b16 %v3506
        %v3665 = vunpack.c.h.b16 %v3506
        %v3666 = vunpack.c.l.b16 %v3507
        %v3667 = vunpack.c.h.b16 %v3507
        %v3668 = vunpack.c.l.b16 %v3508
        %v3669 = vunpack.c.h.b16 %v3508
        %v3670 = vunpack.c.l.b16 %v3509
        %v3671 = vunpack.c.h.b16 %v3509
        %v3672 = vunpack.c.l.b16 %v3510
        %v3673 = vunpack.c.h.b16 %v3510
        %v3674 = vunpack.c.l.b16 %v3511
        %v3675 = vunpack.c.h.b16 %v3511
        %v3676 = vunpack.c.l.b16 %v3512
        %v3677 = vunpack.c.h.b16 %v3512
        %v3678 = vunpack.c.l.b16 %v3513
        %v3679 = vunpack.c.h.b16 %v3513
        %v3680 = vunpack.c.l.b16 %v3514
        %v3681 = vunpack.c.h.b16 %v3514
        %v3682 = vunpack.c.l.b16 %v3515
        %v3683 = vunpack.c.h.b16 %v3515
        %v3684 = vunpack.c.l.b16 %v3516
        %v3685 = vunpack.c.h.b16 %v3516
        %v3686 = vunpack.c.l.b16 %v3517
        %v3687 = vunpack.c.h.b16 %v3517
        %v3688 = vunpack.c.l.b16 %v3518
        %v3689 = vunpack.c.h.b16 %v3518
        %v3690 = vunpack.c.l.b16 %v3519
        %v3691 = vunpack.c.h.b16 %v3519
        %v3692 = vunpack.c.l.b16 %v3520
        %v3693 = vunpack.c.h.b16 %v3520
        %v3694 = vunpack.c.l.b16 %v3521
        %v3695 = vunpack.c.h.b16 %v3521
        %v3696 = vunpack.c.l.b16 %v3522
        %v3697 = vunpack.c.h.b16 %v3522
        %v3698 = vunpack.c.l.b16 %v3523
        %v3699 = vunpack.c.h.b16 %v3523
        %v3700 = vunpack.c.l.b16 %v3524
        %v3701 = vunpack.c.h.b16 %v3524
        %v3702 = vunpack.c.l.b16 %v3525
        %v3703 = vunpack.c.h.b16 %v3525
        %v3704 = vunpack.c.l.b16 %v3526
        %v3705 = vunpack.c.h.b16 %v3526
        %v3706 = vunpack.c.l.b16 %v3527
        %v3707 = vunpack.c.h.b16 %v3527
        %v3708 = vunpack.c.l.b16 %v3528
        %v3709 = vunpack.c.h.b16 %v3528
        %v3710 = vunpack.c.l.b16 %v3529
        %v3711 = vunpack.c.h.b16 %v3529
        %v3712 = vunpack.c.l.b16 %v3530
        %v3713 = vunpack.c.h.b16 %v3530
        %v3714 = vunpack.c.l.b16 %v3531
        %v3715 = vunpack.c.h.b16 %v3531
        %v3716 = vunpack.c.l.b16 %v3532
        %v3717 = vunpack.c.h.b16 %v3532
        %v3718 = vunpack.c.l.b16 %v3533
        %v3719 = vunpack.c.h.b16 %v3533
        %v3720 = vunpack.c.l.b16 %v3534
        %v3721 = vunpack.c.h.b16 %v3534
        %v3722 = vunpack.c.l.b16 %v3535
        %v3723 = vunpack.c.h.b16 %v3535
        %v3724 = vunpack.c.l.b16 %v3536
        %v3725 = vunpack.c.h.b16 %v3536
        %v3726 = vunpack.c.l.b16 %v3537
        %v3727 = vunpack.c.h.b16 %v3537
        %v3728 = vunpack.c.l.b16 %v3538
        %v3729 = vunpack.c.h.b16 %v3538
        %v3730 = vunpack.c.l.b16 %v3539
        %v3731 = vunpack.c.h.b16 %v3539
        %v3732 = vunpack.c.l.b16 %v3540
        %v3733 = vunpack.c.h.b16 %v3540
        %v3734 = vpack.c.b16 %v3608, %v3606
        %v3735 = vpack.c.b16 %v3609, %v3607
        %v3736 = vpack.c.b16 %v3612, %v3610
        %v3737 = vpack.c.b16 %v3613, %v3611
        %v3738 = vpack.c.b16 %v3616, %v3614
        %v3739 = vpack.c.b16 %v3617, %v3615
        %v3740 = vpack.c.b16 %v3620, %v3618
        %v3741 = vpack.c.b16 %v3621, %v3619
        %v3742 = vpack.c.b16 %v3624, %v3622
        %v3743 = vpack.c.b16 %v3625, %v3623
        %v3744 = vpack.c.b16 %v3628, %v3626
        %v3745 = vpack.c.b16 %v3629, %v3627
        %v3746 = vpack.c.b16 %v3632, %v3630
        %v3747 = vpack.c.b16 %v3633, %v3631
        %v3748 = vpack.c.b16 %v3636, %v3634
        %v3749 = vpack.c.b16 %v3637, %v3635
        %v3750 = vpack.c.b16 %v3640, %v3638
        %v3751 = vpack.c.b16 %v3641, %v3639
        %v3752 = vpack.c.b16 %v3644, %v3642
        %v3753 = vpack.c.b16 %v3645, %v3643
        %v3754 = vpack.c.b16 %v3648, %v3646
        %v3755 = vpack.c.b16 %v3649, %v3647
        %v3756 = vpack.c.b16 %v3652, %v3650
        %v3757 = vpack.c.b16 %v3653, %v3651
        %v3758 = vpack.c.b16 %v3656, %v3654
        %v3759 = vpack.c.b16 %v3657, %v3655
        %v3760 = vpack.c.b16 %v3660, %v3658
        %v3761 = vpack.c.b16 %v3661, %v3659
        %v3762 = vpack.c.b16 %v3664, %v3662
        %v3763 = vpack.c.b16 %v3665, %v3663
        %v3764 = vpack.c.b16 %v3668, %v3666
        %v3765 = vpack.c.b16 %v3669, %v3667
        %v3766 = vpack.c.b16 %v3672, %v3670
        %v3767 = vpack.c.b16 %v3673, %v3671
        %v3768 = vpack.c.b16 %v3676, %v3674
        %v3769 = vpack.c.b16 %v3677, %v3675
        %v3770 = vpack.c.b16 %v3680, %v3678
        %v3771 = vpack.c.b16 %v3681, %v3679
        %v3772 = vpack.c.b16 %v3684, %v3682
        %v3773 = vpack.c.b16 %v3685, %v3683
        %v3774 = vpack.c.b16 %v3688, %v3686
        %v3775 = vpack.c.b16 %v3689, %v3687
        %v3776 = vpack.c.b16 %v3692, %v3690
        %v3777 = vpack.c.b16 %v3693, %v3691
        %v3778 = vpack.c.b16 %v3696, %v3694
        %v3779 = vpack.c.b16 %v3697, %v3695
        %v3780 = vpack.c.b16 %v3700, %v3698
        %v3781 = vpack.c.b16 %v3701, %v3699
        %v3782 = vpack.c.b16 %v3704, %v3702
        %v3783 = vpack.c.b16 %v3705, %v3703
        %v3784 = vpack.c.b16 %v3708, %v3706
        %v3785 = vpack.c.b16 %v3709, %v3707
        %v3786 = vpack.c.b16 %v3712, %v3710
        %v3787 = vpack.c.b16 %v3713, %v3711
        %v3788 = vpack.c.b16 %v3716, %v3714
        %v3789 = vpack.c.b16 %v3717, %v3715
        %v3790 = vpack.c.b16 %v3720, %v3718
        %v3791 = vpack.c.b16 %v3721, %v3719
        %v3792 = vpack.c.b16 %v3724, %v3722
        %v3793 = vpack.c.b16 %v3725, %v3723
        %v3794 = vpack.c.b16 %v3728, %v3726
        %v3795 = vpack.c.b16 %v3729, %v3727
        %v3796 = vpack.c.b16 %v3732, %v3730
        %v3797 = vpack.c.b16 %v3733, %v3731
        %v3863 = vlaneseq
        %v3864 = vshrl.u32 %v3863, 7
        %v3865 = vsub.s32 0, %v3864
        %v3866 = vrot.slane %v3541, %v3865
        %v3867 = vlaneseq
        %v3868 = vshrl.u32 %v3867, 7
        %v3869 = vsub.s32 1, %v3868
        %v3870 = vrot.slane %v3541, %v3869
        %3873 = vmatprep.subr.bf16.mxu0 %v3735
        %3874 = vmatpush1.bf16.msra.mxu0 %v3734
        %3875 = vmatprep.subr.bf16.mxu0 %v3737
        %3876 = vmatpush1.bf16.msra.mxu0 %v3736
        %3877 = vmatprep.subr.bf16.mxu0 %v3739
        %3878 = vmatpush1.bf16.msra.mxu0 %v3738
        %3879 = vmatprep.subr.bf16.mxu0 %v3741
        %3880 = vmatpush1.bf16.msra.mxu0 %v3740
        %3881 = vmatprep.subr.bf16.mxu0 %v3743
        %3882 = vmatpush1.bf16.msra.mxu0 %v3742
        %3883 = vmatprep.subr.bf16.mxu0 %v3745
        %3884 = vmatpush1.bf16.msra.mxu0 %v3744
        %3885 = vmatprep.subr.bf16.mxu0 %v3747
        %3886 = vmatpush1.bf16.msra.mxu0 %v3746
        %3887 = vmatprep.subr.bf16.mxu0 %v3749
        %3888 = vmatpush1.bf16.msra.mxu0 %v3748
        %3889 = vmatprep.subr.bf16.mxu0 %v3751
        %3890 = vmatpush1.bf16.msra.mxu0 %v3750
        %3891 = vmatprep.subr.bf16.mxu0 %v3753
        %3892 = vmatpush1.bf16.msra.mxu0 %v3752
        %3893 = vmatprep.subr.bf16.mxu0 %v3755
        %3894 = vmatpush1.bf16.msra.mxu0 %v3754
        %3895 = vmatprep.subr.bf16.mxu0 %v3757
        %3896 = vmatpush1.bf16.msra.mxu0 %v3756
        %3897 = vmatprep.subr.bf16.mxu0 %v3759
        %3898 = vmatpush1.bf16.msra.mxu0 %v3758
        %3899 = vmatprep.subr.bf16.mxu0 %v3761
        %3900 = vmatpush1.bf16.msra.mxu0 %v3760
        %3901 = vmatprep.subr.bf16.mxu0 %v3763
        %3902 = vmatpush1.bf16.msra.mxu0 %v3762
        %3903 = vmatprep.subr.bf16.mxu0 %v3765
        %3904 = vmatpush1.bf16.msra.mxu0 %v3764
        %3905 = vmatprep.mubr.bf16.mxu0 %v3474
        %3906 = vmatmul.mubr.bf16.gmra.mrb[0].mxu0 %v3473
        %v3907 = vpop.f32.mrb[0].mxu0
        %v3908 = vadd.f32 %v3866, %v3907
        %v3909 = vpop.f32.mrb[0].mxu0
        %v3910 = vadd.f32 %v3870, %v3909
        %v3911 = vpop.f32.mrb[0].mxu0
        %v3912 = vpop.f32.mrb[0].mxu0
        %3913 = vdwg.mxu0
        %3914 = vmatprep.subr.bf16.mxu0 %v3767
        %3915 = vmatpush1.bf16.msra.mxu0 %v3766
        %3916 = vmatprep.subr.bf16.mxu0 %v3769
        %3917 = vmatpush1.bf16.msra.mxu0 %v3768
        %3918 = vmatprep.subr.bf16.mxu0 %v3771
        %3919 = vmatpush1.bf16.msra.mxu0 %v3770
        %3920 = vmatprep.subr.bf16.mxu0 %v3773
        %3921 = vmatpush1.bf16.msra.mxu0 %v3772
        %3922 = vmatprep.subr.bf16.mxu0 %v3775
        %3923 = vmatpush1.bf16.msra.mxu0 %v3774
        %3924 = vmatprep.subr.bf16.mxu0 %v3777
        %3925 = vmatpush1.bf16.msra.mxu0 %v3776
        %3926 = vmatprep.subr.bf16.mxu0 %v3779
        %3927 = vmatpush1.bf16.msra.mxu0 %v3778
        %3928 = vmatprep.subr.bf16.mxu0 %v3781
        %3929 = vmatpush1.bf16.msra.mxu0 %v3780
        %3930 = vmatprep.subr.bf16.mxu0 %v3783
        %3931 = vmatpush1.bf16.msra.mxu0 %v3782
        %3932 = vmatprep.subr.bf16.mxu0 %v3785
        %3933 = vmatpush1.bf16.msra.mxu0 %v3784
        %3934 = vmatprep.subr.bf16.mxu0 %v3787
        %3935 = vmatpush1.bf16.msra.mxu0 %v3786
        %3936 = vmatprep.subr.bf16.mxu0 %v3789
        %3937 = vmatpush1.bf16.msra.mxu0 %v3788
        %3938 = vmatprep.subr.bf16.mxu0 %v3791
        %3939 = vmatpush1.bf16.msra.mxu0 %v3790
        %3940 = vmatprep.subr.bf16.mxu0 %v3793
        %3941 = vmatpush1.bf16.msra.mxu0 %v3792
        %3942 = vmatprep.subr.bf16.mxu0 %v3795
        %3943 = vmatpush1.bf16.msra.mxu0 %v3794
        %3944 = vmatprep.subr.bf16.mxu0 %v3797
        %3945 = vmatpush1.bf16.msra.mxu0 %v3796
        %3946 = vmatprep.mubr.bf16.mxu0 %v3476
        %3947 = vmatmul.mubr.bf16.gmra.mrb[0].mxu0 %v3475
        %v3948 = vpop.f32.mrb[0].mxu0
        %v3949 = vadd.f32 %v3908, %v3948
        %v3950 = vpop.f32.mrb[0].mxu0
        %v3951 = vadd.f32 %v3910, %v3950
        %v3952 = vpop.f32.mrb[0].mxu0
        %v3953 = vpop.f32.mrb[0].mxu0
        %3954 = vdwg.mxu0
        %v3955 = vld [vmem:[%s47] sm:$0x3]
        %v3956 = vld [vmem:[%s49] sm:$0x3]
        %v3957 = vsel %vm1234, %v3949, 0.0
        %v3958 = vsel %vm1234, %v3951, 0.0
        %v3959 = vadd.f32 %v3957, %v3958
        %3960 = vadd.xlane.f32.xlu0 %v3959
        %v3961 = vpop.xlane.xlu0 %3960
        %v3962 = vrcp.pop 256.0
        %v3963 = vmul.f32 %v3961, %v3962
        %v3964 = vsub.f32 %v3949, %v3963
        %v3965 = vsub.f32 %v3951, %v3963
        %v3966 = vmul.f32 %v3964, %v3964
        %v3967 = vmul.f32 %v3965, %v3965
        %v3968 = vsel %vm1234, %v3966, 0.0
        %v3969 = vsel %vm1234, %v3967, 0.0
        %v3970 = vadd.f32 %v3968, %v3969
        %3971 = vadd.xlane.f32.xlu0 %v3970
        %v3972 = vpop.xlane.xlu0 %3971
        %v3973 = vmul.f32 %v3972, %v3962
        %v3974 = vadd.f32 %v3973, 1e-05
        %v3975 = vrsqrt.pop %v3974
        %v3976 = vmul.f32 %v3964, %v3975
        %v3977 = vmul.f32 %v3965, %v3975
        %v3979 = vlaneseq
        %v3980 = vshrl.u32 %v3979, 7
        %v3981 = vsub.s32 0, %v3980
        %v3982 = vrot.slane %v3955, %v3981
        %v3983 = vlaneseq
        %v3984 = vshrl.u32 %v3983, 7
        %v3985 = vsub.s32 1, %v3984
        %v3986 = vrot.slane %v3955, %v3985
        %v3989 = vmul.f32 %v3976, %v3982
        %v3990 = vmul.f32 %v3977, %v3986
        %v3992 = vlaneseq
        %v3993 = vshrl.u32 %v3992, 7
        %v3994 = vsub.s32 0, %v3993
        %v3995 = vrot.slane %v3956, %v3994
        %v3996 = vlaneseq
        %v3997 = vshrl.u32 %v3996, 7
        %v3998 = vsub.s32 1, %v3997
        %v3999 = vrot.slane %v3956, %v3998
        %v4002 = vadd.f32 %v3989, %v3995
        %v4003 = vadd.f32 %v3990, %v3999
        %v4004 = vmax.f32 %v4002, 0.0
        %v4005 = vmax.f32 %v4003, 0.0
        %v4006 = vpack.c.bf16 %v4004, %v4004
        %v4007 = vpack.c.bf16 %v4005, %v4005
        %v4008 = vld [vmem:[%s51] sm:$0xf]
        %v4009 = vld [vmem:[%s51 + $0x4] sm:$0xf]
        %v4010 = vld [vmem:[%s51 + $0x8] sm:$0xf]
        %v4011 = vld [vmem:[%s51 + $0xc] sm:$0xf]
        %v4012 = vld [vmem:[%s51 + $0x10] sm:$0xf]
        %v4013 = vld [vmem:[%s51 + $0x14] sm:$0xf]
        %v4014 = vld [vmem:[%s51 + $0x18] sm:$0xf]
        %v4015 = vld [vmem:[%s51 + $0x1c] sm:$0xf]
        %v4016 = vld [vmem:[%s51 + $0x20] sm:$0xf]
        %v4017 = vld [vmem:[%s51 + $0x24] sm:$0xf]
        %v4018 = vld [vmem:[%s51 + $0x28] sm:$0xf]
        %v4019 = vld [vmem:[%s51 + $0x2c] sm:$0xf]
        %v4020 = vld [vmem:[%s51 + $0x30] sm:$0xf]
        %v4021 = vld [vmem:[%s51 + $0x34] sm:$0xf]
        %v4022 = vld [vmem:[%s51 + $0x38] sm:$0xf]
        %v4023 = vld [vmem:[%s51 + $0x3c] sm:$0xf]
        %v4024 = vld [vmem:[%s51 + $0x40] sm:$0xf]
        %v4025 = vld [vmem:[%s51 + $0x44] sm:$0xf]
        %v4026 = vld [vmem:[%s51 + $0x48] sm:$0xf]
        %v4027 = vld [vmem:[%s51 + $0x4c] sm:$0xf]
        %v4028 = vld [vmem:[%s51 + $0x50] sm:$0xf]
        %v4029 = vld [vmem:[%s51 + $0x54] sm:$0xf]
        %v4030 = vld [vmem:[%s51 + $0x58] sm:$0xf]
        %v4031 = vld [vmem:[%s51 + $0x5c] sm:$0xf]
        %v4032 = vld [vmem:[%s51 + $0x60] sm:$0xf]
        %v4033 = vld [vmem:[%s51 + $0x64] sm:$0xf]
        %v4034 = vld [vmem:[%s51 + $0x68] sm:$0xf]
        %v4035 = vld [vmem:[%s51 + $0x6c] sm:$0xf]
        %v4036 = vld [vmem:[%s51 + $0x70] sm:$0xf]
        %v4037 = vld [vmem:[%s51 + $0x74] sm:$0xf]
        %v4038 = vld [vmem:[%s51 + $0x78] sm:$0xf]
        %v4039 = vld [vmem:[%s51 + $0x7c] sm:$0xf]
        %v4040 = vld [vmem:[%s53] sm:$0x1]
        %v4073 = vunpack.c.l.b16 %v4008
        %v4074 = vunpack.c.l.b16 %v4009
        %v4075 = vunpack.c.l.b16 %v4010
        %v4076 = vunpack.c.l.b16 %v4011
        %v4077 = vunpack.c.l.b16 %v4012
        %v4078 = vunpack.c.l.b16 %v4013
        %v4079 = vunpack.c.l.b16 %v4014
        %v4080 = vunpack.c.l.b16 %v4015
        %v4081 = vunpack.c.l.b16 %v4016
        %v4082 = vunpack.c.l.b16 %v4017
        %v4083 = vunpack.c.l.b16 %v4018
        %v4084 = vunpack.c.l.b16 %v4019
        %v4085 = vunpack.c.l.b16 %v4020
        %v4086 = vunpack.c.l.b16 %v4021
        %v4087 = vunpack.c.l.b16 %v4022
        %v4088 = vunpack.c.l.b16 %v4023
        %v4089 = vunpack.c.l.b16 %v4024
        %v4090 = vunpack.c.l.b16 %v4025
        %v4091 = vunpack.c.l.b16 %v4026
        %v4092 = vunpack.c.l.b16 %v4027
        %v4093 = vunpack.c.l.b16 %v4028
        %v4094 = vunpack.c.l.b16 %v4029
        %v4095 = vunpack.c.l.b16 %v4030
        %v4096 = vunpack.c.l.b16 %v4031
        %v4097 = vunpack.c.l.b16 %v4032
        %v4098 = vunpack.c.l.b16 %v4033
        %v4099 = vunpack.c.l.b16 %v4034
        %v4100 = vunpack.c.l.b16 %v4035
        %v4101 = vunpack.c.l.b16 %v4036
        %v4102 = vunpack.c.l.b16 %v4037
        %v4103 = vunpack.c.l.b16 %v4038
        %v4104 = vunpack.c.l.b16 %v4039
        %v4105 = vpack.c.b16 %v4074, %v4073
        %v4106 = vpack.c.b16 %v4076, %v4075
        %v4107 = vpack.c.b16 %v4078, %v4077
        %v4108 = vpack.c.b16 %v4080, %v4079
        %v4109 = vpack.c.b16 %v4082, %v4081
        %v4110 = vpack.c.b16 %v4084, %v4083
        %v4111 = vpack.c.b16 %v4086, %v4085
        %v4112 = vpack.c.b16 %v4088, %v4087
        %v4113 = vpack.c.b16 %v4090, %v4089
        %v4114 = vpack.c.b16 %v4092, %v4091
        %v4115 = vpack.c.b16 %v4094, %v4093
        %v4116 = vpack.c.b16 %v4096, %v4095
        %v4117 = vpack.c.b16 %v4098, %v4097
        %v4118 = vpack.c.b16 %v4100, %v4099
        %v4119 = vpack.c.b16 %v4102, %v4101
        %v4120 = vpack.c.b16 %v4104, %v4103
        %4137 = vmatprep.subr.bf16.mxu0 0
        %4138 = vmatpush1.bf16.msra.mxu0 %v4105
        %4139 = vmatprep.subr.bf16.mxu0 0
        %4140 = vmatpush1.bf16.msra.mxu0 %v4106
        %4141 = vmatprep.subr.bf16.mxu0 0
        %4142 = vmatpush1.bf16.msra.mxu0 %v4107
        %4143 = vmatprep.subr.bf16.mxu0 0
        %4144 = vmatpush1.bf16.msra.mxu0 %v4108
        %4145 = vmatprep.subr.bf16.mxu0 0
        %4146 = vmatpush1.bf16.msra.mxu0 %v4109
        %4147 = vmatprep.subr.bf16.mxu0 0
        %4148 = vmatpush1.bf16.msra.mxu0 %v4110
        %4149 = vmatprep.subr.bf16.mxu0 0
        %4150 = vmatpush1.bf16.msra.mxu0 %v4111
        %4151 = vmatprep.subr.bf16.mxu0 0
        %4152 = vmatpush1.bf16.msra.mxu0 %v4112
        %4153 = vmatprep.subr.bf16.mxu0 0
        %4154 = vmatpush1.bf16.msra.mxu0 %v4113
        %4155 = vmatprep.subr.bf16.mxu0 0
        %4156 = vmatpush1.bf16.msra.mxu0 %v4114
        %4157 = vmatprep.subr.bf16.mxu0 0
        %4158 = vmatpush1.bf16.msra.mxu0 %v4115
        %4159 = vmatprep.subr.bf16.mxu0 0
        %4160 = vmatpush1.bf16.msra.mxu0 %v4116
        %4161 = vmatprep.subr.bf16.mxu0 0
        %4162 = vmatpush1.bf16.msra.mxu0 %v4117
        %4163 = vmatprep.subr.bf16.mxu0 0
        %4164 = vmatpush1.bf16.msra.mxu0 %v4118
        %4165 = vmatprep.subr.bf16.mxu0 0
        %4166 = vmatpush1.bf16.msra.mxu0 %v4119
        %4167 = vmatprep.subr.bf16.mxu0 0
        %4168 = vmatpush1.bf16.msra.mxu0 %v4120
        %4169 = vmatprep.mubr.bf16.mxu0 %v4007
        %4170 = vmatmul.mubr.bf16.gmra.mrb[0].mxu0 %v4006
        %v4171 = vpop.f32.mrb[0].mxu0
        %v4172 = vadd.f32 %v4040, %v4171
        %v4173 = vpop.f32.mrb[0].mxu0
        %v4174 = vpop.f32.mrb[0].mxu0
        %v4175 = vpop.f32.mrb[0].mxu0
        %4176 = vdwg.mxu0
        %v4177 = vld [vmem:[%s55] sm:$0x1]
        %v4178 = vld [vmem:[%s57] sm:$0x1]
        %v4179 = vsel %vm1234, %v4172, 0.0
        %4180 = vadd.xlane.f32.xlu0 %v4179
        %v4181 = vpop.xlane.xlu0 %4180
        %v4182 = vrcp.pop 128.0
        %v4183 = vmul.f32 %v4181, %v4182
        %v4184 = vsub.f32 %v4172, %v4183
        %v4185 = vmul.f32 %v4184, %v4184
        %v4186 = vsel %vm1234, %v4185, 0.0
        %4187 = vadd.xlane.f32.xlu0 %v4186
        %v4188 = vpop.xlane.xlu0 %4187
        %v4189 = vmul.f32 %v4188, %v4182
        %v4190 = vadd.f32 %v4189, 1e-05
        %v4191 = vrsqrt.pop %v4190
        %v4192 = vmul.f32 %v4184, %v4191
        %v4193 = vmul.f32 %v4192, %v4177
        %v4194 = vadd.f32 %v4193, %v4178
        %v4195 = vmax.f32 %v4194, 0.0
        %v4196 = vpack.c.bf16 %v4195, %v4195
        %v4197 = vld [vmem:[%s59] sm:$0xf]
        %v4198 = vld [vmem:[%s59 + $0x4] sm:$0xf]
        %v4199 = vld [vmem:[%s59 + $0x8] sm:$0xf]
        %v4200 = vld [vmem:[%s59 + $0xc] sm:$0xf]
        %v4201 = vld [vmem:[%s59 + $0x10] sm:$0xf]
        %v4202 = vld [vmem:[%s59 + $0x14] sm:$0xf]
        %v4203 = vld [vmem:[%s59 + $0x18] sm:$0xf]
        %v4204 = vld [vmem:[%s59 + $0x1c] sm:$0xf]
        %v4205 = vld [vmem:[%s59 + $0x20] sm:$0xf]
        %v4206 = vld [vmem:[%s59 + $0x24] sm:$0xf]
        %v4207 = vld [vmem:[%s59 + $0x28] sm:$0xf]
        %v4208 = vld [vmem:[%s59 + $0x2c] sm:$0xf]
        %v4209 = vld [vmem:[%s59 + $0x30] sm:$0xf]
        %v4210 = vld [vmem:[%s59 + $0x34] sm:$0xf]
        %v4211 = vld [vmem:[%s59 + $0x38] sm:$0xf]
        %v4212 = vld [vmem:[%s59 + $0x3c] sm:$0xf]
        %v4213 = vld [vmem:[%s61] sm:$0x1]
        %v4230 = vunpack.c.l.b16 %v4197
        %v4231 = vunpack.c.l.b16 %v4198
        %v4232 = vunpack.c.l.b16 %v4199
        %v4233 = vunpack.c.l.b16 %v4200
        %v4234 = vunpack.c.l.b16 %v4201
        %v4235 = vunpack.c.l.b16 %v4202
        %v4236 = vunpack.c.l.b16 %v4203
        %v4237 = vunpack.c.l.b16 %v4204
        %v4238 = vunpack.c.l.b16 %v4205
        %v4239 = vunpack.c.l.b16 %v4206
        %v4240 = vunpack.c.l.b16 %v4207
        %v4241 = vunpack.c.l.b16 %v4208
        %v4242 = vunpack.c.l.b16 %v4209
        %v4243 = vunpack.c.l.b16 %v4210
        %v4244 = vunpack.c.l.b16 %v4211
        %v4245 = vunpack.c.l.b16 %v4212
        %v4246 = vpack.c.b16 %v4231, %v4230
        %v4247 = vpack.c.b16 %v4233, %v4232
        %v4248 = vpack.c.b16 %v4235, %v4234
        %v4249 = vpack.c.b16 %v4237, %v4236
        %v4250 = vpack.c.b16 %v4239, %v4238
        %v4251 = vpack.c.b16 %v4241, %v4240
        %v4252 = vpack.c.b16 %v4243, %v4242
        %v4253 = vpack.c.b16 %v4245, %v4244
        %4262 = vmatprep.subr.bf16.mxu0 0
        %4263 = vmatpush1.bf16.msra.mxu0 %v4246
        %4264 = vmatprep.subr.bf16.mxu0 0
        %4265 = vmatpush1.bf16.msra.mxu0 %v4247
        %4266 = vmatprep.subr.bf16.mxu0 0
        %4267 = vmatpush1.bf16.msra.mxu0 %v4248
        %4268 = vmatprep.subr.bf16.mxu0 0
        %4269 = vmatpush1.bf16.msra.mxu0 %v4249
        %4270 = vmatprep.subr.bf16.mxu0 0
        %4271 = vmatpush1.bf16.msra.mxu0 %v4250
        %4272 = vmatprep.subr.bf16.mxu0 0
        %4273 = vmatpush1.bf16.msra.mxu0 %v4251
        %4274 = vmatprep.subr.bf16.mxu0 0
        %4275 = vmatpush1.bf16.msra.mxu0 %v4252
        %4276 = vmatprep.subr.bf16.mxu0 0
        %4277 = vmatpush1.bf16.msra.mxu0 %v4253
        %4278 = vmatprep.subr.bf16.mxu0 0
        %4279 = vmatpush1.bf16.msra.mxu0 0
        %4280 = vmatprep.subr.bf16.mxu0 0
        %4281 = vmatpush1.bf16.msra.mxu0 0
        %4282 = vmatprep.subr.bf16.mxu0 0
        %4283 = vmatpush1.bf16.msra.mxu0 0
        %4284 = vmatprep.subr.bf16.mxu0 0
        %4285 = vmatpush1.bf16.msra.mxu0 0
        %4286 = vmatprep.subr.bf16.mxu0 0
        %4287 = vmatpush1.bf16.msra.mxu0 0
        %4288 = vmatprep.subr.bf16.mxu0 0
        %4289 = vmatpush1.bf16.msra.mxu0 0
        %4290 = vmatprep.subr.bf16.mxu0 0
        %4291 = vmatpush1.bf16.msra.mxu0 0
        %4292 = vmatprep.subr.bf16.mxu0 0
        %4293 = vmatpush1.bf16.msra.mxu0 0
        %4294 = vmatprep.mubr.bf16.mxu0 0
        %4295 = vmatmul.mubr.bf16.gmra.mrb[0].mxu0 %v4196
        %v4296 = vpop.f32.mrb[0].mxu0
        %v4297 = vadd.f32 %v4213, %v4296
        %v4298 = vpop.f32.mrb[0].mxu0
        %v4299 = vpop.f32.mrb[0].mxu0
        %v4300 = vpop.f32.mrb[0].mxu0
        %4301 = vdwg.mxu0
        %v4302 = vld [vmem:[%s63] sm:$0x1]
        %v4303 = vld [vmem:[%s65] sm:$0x1]
        %vm4304 = vcmask 516096
        %v4305 = vsel %vm4304, %v4297, 0.0
        %4306 = vadd.xlane.f32.xlu0 %v4305
        %v4307 = vpop.xlane.xlu0 %4306
        %v4308 = vmul.f32 %v4307, %v1466
        %v4309 = vsub.f32 %v4297, %v4308
        %v4310 = vmul.f32 %v4309, %v4309
        %v4311 = vsel %vm4304, %v4310, 0.0
        %4312 = vadd.xlane.f32.xlu0 %v4311
        %v4313 = vpop.xlane.xlu0 %4312
        %v4314 = vmul.f32 %v4313, %v1466
        %v4315 = vadd.f32 %v4314, 1e-05
        %v4316 = vrsqrt.pop %v4315
        %v4317 = vmul.f32 %v4309, %v4316
        %v4318 = vmul.f32 %v4317, %v4302
        %v4319 = vadd.f32 %v4318, %v4303
        %v4320 = vmax.f32 %v4319, 0.0
        %v4321 = vpack.c.bf16 %v4320, %v4320
        %v4322 = vld [vmem:[%s67] sm:$0xf]
        %v4323 = vld [vmem:[%s67 + $0x4] sm:$0xf]
        %v4324 = vld [vmem:[%s67 + $0x8] sm:$0xf]
        %v4325 = vld [vmem:[%s67 + $0xc] sm:$0xf]
        %v4326 = vld [vmem:[%s67 + $0x10] sm:$0xf]
        %v4327 = vld [vmem:[%s67 + $0x14] sm:$0xf]
        %v4328 = vld [vmem:[%s67 + $0x18] sm:$0xf]
        %v4329 = vld [vmem:[%s67 + $0x1c] sm:$0xf]
        %v4330 = vld [vmem:[#allocation7] sm:$0x1]
        %v4339 = vunpack.c.l.b16 %v4322
        %v4340 = vunpack.c.l.b16 %v4323
        %v4341 = vunpack.c.l.b16 %v4324
        %v4342 = vunpack.c.l.b16 %v4325
        %v4343 = vunpack.c.l.b16 %v4326
        %v4344 = vunpack.c.l.b16 %v4327
        %v4345 = vunpack.c.l.b16 %v4328
        %v4346 = vunpack.c.l.b16 %v4329
        %v4347 = vpack.c.b16 %v4340, %v4339
        %v4348 = vpack.c.b16 %v4342, %v4341
        %v4349 = vpack.c.b16 %v4344, %v4343
        %v4350 = vpack.c.b16 %v4346, %v4345
        %v4356 = vsel %vm2058, %v4321, 0
        %4358 = vmatprep.subr.bf16.mxu0 0
        %4359 = vmatpush1.bf16.msra.mxu0 %v4347
        %4360 = vmatprep.subr.bf16.mxu0 0
        %4361 = vmatpush1.bf16.msra.mxu0 %v4348
        %4362 = vmatprep.subr.bf16.mxu0 0
        %4363 = vmatpush1.bf16.msra.mxu0 %v4349
        %4364 = vmatprep.subr.bf16.mxu0 0
        %4365 = vmatpush1.bf16.msra.mxu0 %v4350
        %4366 = vmatprep.subr.bf16.mxu0 0
        %4367 = vmatpush1.bf16.msra.mxu0 0
        %4368 = vmatprep.subr.bf16.mxu0 0
        %4369 = vmatpush1.bf16.msra.mxu0 0
        %4370 = vmatprep.subr.bf16.mxu0 0
        %4371 = vmatpush1.bf16.msra.mxu0 0
        %4372 = vmatprep.subr.bf16.mxu0 0
        %4373 = vmatpush1.bf16.msra.mxu0 0
        %4374 = vmatprep.subr.bf16.mxu0 0
        %4375 = vmatpush1.bf16.msra.mxu0 0
        %4376 = vmatprep.subr.bf16.mxu0 0
        %4377 = vmatpush1.bf16.msra.mxu0 0
        %4378 = vmatprep.subr.bf16.mxu0 0
        %4379 = vmatpush1.bf16.msra.mxu0 0
        %4380 = vmatprep.subr.bf16.mxu0 0
        %4381 = vmatpush1.bf16.msra.mxu0 0
        %4382 = vmatprep.subr.bf16.mxu0 0
        %4383 = vmatpush1.bf16.msra.mxu0 0
        %4384 = vmatprep.subr.bf16.mxu0 0
        %4385 = vmatpush1.bf16.msra.mxu0 0
        %4386 = vmatprep.subr.bf16.mxu0 0
        %4387 = vmatpush1.bf16.msra.mxu0 0
        %4388 = vmatprep.subr.bf16.mxu0 0
        %4389 = vmatpush1.bf16.msra.mxu0 0
        %4390 = vmatprep.mubr.bf16.mxu0 0
        %4391 = vmatmul.mubr.bf16.gmra.mrb[0].mxu0 %v4356
        %v4392 = vpop.f32.mrb[0].mxu0
        %v4393 = vadd.f32 %v4330, %v4392
        %v4394 = vpop.f32.mrb[0].mxu0
        %v4395 = vpop.f32.mrb[0].mxu0
        %v4396 = vpop.f32.mrb[0].mxu0
        %4397 = vdwg.mxu0
        %vm4398 = vcmask 0
        %4399 = vst.msk [vmem:[%s1216] sm:$0x1] %vm4398, %v4393
        %p4400 = scmp.lt.s32.totalorder %s90, 1
        %s4401 = scalar_select %p4400, %s90, 1
        %s4402 = scalar_lea.vmem %s71, %s4401
        // Predicated region
        $region205: #{paper_scoring_cnn_forward.1} parent=159 // pred_check
          %p4403 = pneg %p848
        $region206: #{paper_scoring_cnn_forward.1} parent=159 // pred_check_branch
          %4405 = sbr.rel (%p4403) target = $region208
        $region207: #{paper_scoring_cnn_forward.1} parent=159 // pred_region
          _
        $region208: #{paper_scoring_cnn_forward.1} parent=159 // pred_fallthru
          _
      $region160: #{paper_scoring_cnn_forward.1} parent=5 // pred_fallthru
        _
      %p4406 = scmp.le.s32.totalorder 2, %s85
      // Predicated region
      $region209: #{paper_scoring_cnn_forward.1} parent=5 // pred_check
        %p4407 = pneg %p4406
      $region210: #{paper_scoring_cnn_forward.1} parent=5 // pred_check_branch
        %4409 = sbr.rel (%p4407) target = $region212
      $region211: #{paper_scoring_cnn_forward.1} parent=5 // pred_region
        %s4410 = ssub.s32 %s85, 2
        // Predicated region
        $region213: #{paper_scoring_cnn_forward.1} parent=211 // pred_check
          %p4411 = pneg %p854
        $region214: #{paper_scoring_cnn_forward.1} parent=211 // pred_check_branch
          %4413 = sbr.rel (%p4411) target = $region216
        $region215: #{paper_scoring_cnn_forward.1} parent=211 // pred_region
          %p4414 = scmp.lt.s32.totalorder %s91, 1
          %s4415 = scalar_select %p4414, %s91, 1
          %s4416 = scalar_lea.vmem %s71, %s4415
        $region216: #{paper_scoring_cnn_forward.1} parent=211 // pred_fallthru
          _
      $region212: #{paper_scoring_cnn_forward.1} parent=5 // pred_fallthru
        _
    $region6: #{paper_scoring_cnn_forward.1} parent=1 // loop_footer
      %s89 = sadd.s32 1, %s85
    $region7: #{paper_scoring_cnn_forward.1} parent=1 // loop_footer_branch
      %84 = sbr.rel target = $region3
    $region8: #{paper_scoring_cnn_forward.1} parent=1 // loop_exit
      _
    %4417 = vsyncpa [#allocation9], 1
    %s4418 = scalar_lea.sflag [#allocation9], 1
    %4419 = vsyncpa %s4418, 1
    %4420 = vsyncpa [#allocation11], 1
    %4421 = vsyncpa [#allocation14], 1
    %4422 = vsyncpa [#allocation17], 1
    %4423 = vsyncpa [#allocation20], 1
    %4424 = vsyncpa [#allocation23], 1

</llo_original>
